<compile_context>
chip_gen: v6e
topology: v6e:2x2x1
jax: 0.10.0
libtpu: 0.0.40
codegen_flags: <defaults>
</compile_context>

<pallas_src>
import math
from functools import partial

import jax
import jax.numpy as jnp
from jax.experimental import pallas as pl
from jax.experimental.pallas import tpu as pltpu

SQRT2 = math.sqrt(2.0)
NEG_SLOPE = 0.2


def _round_up(v, m):
    return (v + m - 1) // m * m


def _leaky(x):
    # FusedLeakyReLU: leaky_relu(x + bias, 0.2) * sqrt(2); bias added by caller.
    return jnp.where(x >= 0.0, x, NEG_SLOPE * x) * SQRT2


# ------------------------------ Pallas kernel ------------------------------ #

def _make_control_module_kernel(H, W, C):
    """Fully fused Control_Module forward for one sample per grid step."""
    Hp, Wp = H + 2, W + 2            # 3x3-conv zero-padded spatial grid
    NP = Hp * Wp                     # flat padded-grid extent (valid columns)
    PADF = Wp + 1                    # max |flat tap offset| of a 3x3 conv
    NPAD = _round_up(NP, 128)        # lane-dense compute / output width
    XP = _round_up(2 * PADF + NPAD, 128)   # width of halo-padded input buffers
    # tap t = ky*3+kx -> window start inside an XP-wide, PADF-offset buffer
    starts = [PADF + (ky - 1) * Wp + (kx - 1)
              for ky in range(3) for kx in range(3)]

    def kernel(x_ref, mask_ref, imask_ref,
               w1_ref, b1_ref, w2_ref, b2_ref,
               gw1_ref, gb1_ref, gw2_ref, gb2_ref,
               o_ref,
               xbf_scr, tap_scr, out1_scr, feats_scr):
        # x_ref    : (1, C, XP)      f32  flat ring-padded x (data at [PADF,PADF+NP))
        # mask_ref : (1, 1, NPAD)    f32  user mask, padded-grid layout
        # imask_ref: (1, NPAD)       f32  1 at interior padded-grid pixels
        # w1_ref   : (1, 3C, 9C)     bf16 per-sample modulated conv1 (3 branches)
        # w2_ref   : (1, 3, C, 9C)   bf16 per-sample modulated conv2 (per branch)
        # b1/b2    : (3C, 1)         f32  FusedLeakyReLU biases
        # gw1/gw2  : (Hn, 3C)/(3, Hn) bf16 control-head 1x1 convs, gb* f32
        # o_ref    : (1, C, NPAD)    f32  blended output, padded-grid layout
        imask = imask_ref[...]                                     # (1, NPAD)

        # Single bf16 cast of x (reused by all 9 tap windows).
        xbf_scr[...] = x_ref[0].astype(jnp.bfloat16)

        # Halo margins of the out1 buffer must be defined zeros; the middle
        # slab is overwritten just below (full fill is tiny and deterministic).
        out1_scr[...] = jnp.zeros(out1_scr.shape, out1_scr.dtype)

        # ---- StyledConv1, all 3 branches stacked along Cout: ONE matmul ----
        for t, s in enumerate(starts):
            tap_scr[t * C:(t + 1) * C, :] = xbf_scr[:, s:s + NPAD]
        a1 = jnp.dot(w1_ref[0], tap_scr[...],
                     preferred_element_type=jnp.float32)           # (3C, NPAD)
        a1 = _leaky(a1 + b1_ref[...]) * imask                      # zero ring
        out1_scr[:, PADF:PADF + NPAD] = a1.astype(jnp.bfloat16)

        x_res = x_ref[0, :, PADF:PADF + NPAD]                      # f32 (C, NPAD)

        # ---- StyledConv2 per branch + residual; features stay in VMEM ----
        feats = []
        for r in range(3):
            for t, s in enumerate(starts):
                tap_scr[t * C:(t + 1) * C, :] = \
                    out1_scr[r * C:(r + 1) * C, s:s + NPAD]
            a2 = jnp.dot(w2_ref[0, r], tap_scr[...],
                         preferred_element_type=jnp.float32)       # (C, NPAD)
            f = _leaky(a2 + b2_ref[r * C:(r + 1) * C]) + x_res
            feats.append(f)                                        # f32 for blend
            feats_scr[r * C:(r + 1) * C, :] = f.astype(jnp.bfloat16)

        # ---- control head: two 1x1 convs + elementwise 3-way softmax ------
        hidden = jnp.dot(gw1_ref[...], feats_scr[...],
                         preferred_element_type=jnp.float32) + gb1_ref[...]
        hidden = jnp.maximum(hidden, 0.0)
        logits = jnp.dot(gw2_ref[...], hidden.astype(jnp.bfloat16),
                         preferred_element_type=jnp.float32) + gb2_ref[...]
        l0, l1, l2 = logits[0:1], logits[1:2], logits[2:3]         # (1, NPAD)
        m = jnp.maximum(jnp.maximum(l0, l1), l2)
        e0 = jnp.exp(l0 - m)
        e1 = jnp.exp(l1 - m)
        e2 = jnp.exp(l2 - m)
        inv = pl.reciprocal(e0 + e1 + e2, approx=True)

        out = ((e0 * inv) * feats[0]
               + (e1 * inv) * feats[1]
               + (e2 * inv) * feats[2])
        mask = mask_ref[0]                                         # (1, NPAD)
        o_ref[0] = (x_res * (1.0 - mask) + mask * out).astype(o_ref.dtype)

    return kernel, NP, NPAD, XP, PADF


# --------------------------------- JAX glue -------------------------------- #

def _equal_linear(s, w, b):
    # EqualLinear (StyleGAN2): weight scaled by 1/sqrt(fan_in), bias init 1.
    scale = 1.0 / math.sqrt(w.shape[1])
    return s @ (w.T * scale) + b                    # (B, C)


def _modulated_weight(conv_w, style):
    # conv_w: (Cout, Cin, 3, 3); style: (B, Cin) -> (B, Cout, 9*Cin)
    # columns ordered tap-major (ky,kx) then Cin, matching the tap scratch.
    Cout, Cin, kh, kw = conv_w.shape
    scale = 1.0 / math.sqrt(Cin * kh * kw)
    w = scale * conv_w[None] * style[:, None, :, None, None]  # (B,Cout,Cin,3,3)
    demod = jax.lax.rsqrt(jnp.sum(w * w, axis=(2, 3, 4)) + 1e-8)
    w = w * demod[:, :, None, None, None]
    w = jnp.transpose(w, (0, 1, 3, 4, 2))           # (B, Cout, kh, kw, Cin)
    return w.reshape(style.shape[0], Cout, kh * kw * Cin)


def control_module_forward(params, x_nchw, sl, sa, sb, mask_nchw):
    B, C, H, W = x_nchw.shape
    Hp, Wp = H + 2, W + 2
    Hn = params["g"]["w1"].shape[0]
    kernel, NP, NPAD, XP, PADF = _make_control_module_kernel(H, W, C)

    x = x_nchw.astype(jnp.float32)
    # Flat ring-padded x, placed at columns [PADF, PADF+NP) of an XP-wide row.
    xsp = jnp.pad(x, ((0, 0), (0, 0), (1, 1), (1, 1))).reshape(B, C, NP)
    x_in = jnp.pad(xsp, ((0, 0), (0, 0), (PADF, XP - PADF - NP)))   # (B,C,XP)

    msp = jnp.pad(mask_nchw.astype(jnp.float32),
                  ((0, 0), (0, 0), (1, 1), (1, 1))).reshape(B, 1, NP)
    mask_in = jnp.pad(msp, ((0, 0), (0, 0), (0, NPAD - NP)))        # (B,1,NPAD)

    inter = jnp.zeros((Hp, Wp), jnp.float32).at[1:1 + H, 1:1 + W].set(1.0)
    imask = jnp.pad(inter.reshape(NP), (0, NPAD - NP)).reshape(1, NPAD)

    # Per-branch, per-sample modulated/demodulated 3x3 conv weights (bf16).
    w1s, w2s, b1s, b2s = [], [], [], []
    for br, s in (("l", sl), ("a", sa), ("b", sb)):
        p = params[br]
        w1s.append(_modulated_weight(
            p["conv1_w"], _equal_linear(s, p["mod1_w"], p["mod1_b"])))
        w2s.append(_modulated_weight(
            p["conv2_w"], _equal_linear(s, p["mod2_w"], p["mod2_b"])))
        b1s.append(p["conv1_b"])
        b2s.append(p["conv2_b"])
    w1_all = jnp.concatenate(w1s, axis=1).astype(jnp.bfloat16)      # (B,3C,9C)
    w2_all = jnp.stack(w2s, axis=1).astype(jnp.bfloat16)            # (B,3,C,9C)
    b1_all = jnp.concatenate(b1s).reshape(3 * C, 1)                 # f32
    b2_all = jnp.concatenate(b2s).reshape(3 * C, 1)

    g = params["g"]
    gw1 = g["w1"].astype(jnp.bfloat16)                              # (Hn, 3C)
    gb1 = g["b1"].reshape(Hn, 1)
    gw2 = g["w2"].astype(jnp.bfloat16)                              # (3, Hn)
    gb2 = g["b2"].reshape(3, 1)

    def const_spec(shape):
        zeros = (0,) * len(shape)
        return pl.BlockSpec(shape, lambda b, z=zeros: z)

    out_pad = pl.pallas_call(
        kernel,
        out_shape=jax.ShapeDtypeStruct((B, C, NPAD), jnp.float32),
        grid=(B,),
        in_specs=[
            pl.BlockSpec((1, C, XP), lambda b: (b, 0, 0)),
            pl.BlockSpec((1, 1, NPAD), lambda b: (b, 0, 0)),
            const_spec((1, NPAD)),
            pl.BlockSpec((1, 3 * C, 9 * C), lambda b: (b, 0, 0)),
            const_spec((3 * C, 1)),
            pl.BlockSpec((1, 3, C, 9 * C), lambda b: (b, 0, 0, 0)),
            const_spec((3 * C, 1)),
            const_spec((Hn, 3 * C)),
            const_spec((Hn, 1)),
            const_spec((3, Hn)),
            const_spec((3, 1)),
        ],
        out_specs=pl.BlockSpec((1, C, NPAD), lambda b: (b, 0, 0)),
        scratch_shapes=[
            pltpu.VMEM((C, XP), jnp.bfloat16),            # bf16 copy of x
            pltpu.VMEM((9 * C, NPAD), jnp.bfloat16),      # tap-stacked input
            pltpu.VMEM((3 * C, XP), jnp.bfloat16),        # out1 (halo-padded)
            pltpu.VMEM((3 * C, NPAD), jnp.bfloat16),      # stacked features
        ],
        compiler_params=pltpu.CompilerParams(
            dimension_semantics=("parallel",)),
    )(x_in, mask_in, imask, w1_all, b1_all, w2_all, b2_all,
      gw1, gb1, gw2, gb2)

    # Drop lane padding + the 1-pixel conv ring -> (B, C, H, W).
    out = out_pad[:, :, :NP].reshape(B, C, Hp, Wp)[:, :, 1:1 + H, 1:1 + W]
    return out


# --------------------------- pure-JAX reference ---------------------------- #

def control_module_reference(params, x, sl, sa, sb, mask):
    dn = ("NCHW", "OIHW", "NCHW")

    def styled_conv(x, conv_w, conv_b, mod_w, mod_b, s):
        B, _, H, W = x.shape
        style = _equal_linear(s, mod_w, mod_b)
        Cout, Cin, kh, kw = conv_w.shape
        scale = 1.0 / math.sqrt(Cin * kh * kw)
        w = scale * conv_w[None] * style[:, None, :, None, None]
        demod = jax.lax.rsqrt(jnp.sum(w * w, axis=(2, 3, 4)) + 1e-8)
        w = w * demod[:, :, None, None, None]              # (B,Cout,Cin,3,3)
        y = jax.lax.conv_general_dilated(
            x.reshape(1, B * Cin, H, W), w.reshape(B * Cout, Cin, kh, kw),
            window_strides=(1, 1), padding="SAME",
            dimension_numbers=dn, feature_group_count=B)
        y = y.reshape(B, Cout, H, W)
        return _leaky(y + conv_b[None, :, None, None])

    def res_block(x, p, s):
        o1 = styled_conv(x, p["conv1_w"], p["conv1_b"], p["mod1_w"], p["mod1_b"], s)
        o2 = styled_conv(o1, p["conv2_w"], p["conv2_b"], p["mod2_w"], p["mod2_b"], s)
        return x + o2

    fl = res_block(x, params["l"], sl)
    fa = res_block(x, params["a"], sa)
    fb = res_block(x, params["b"], sb)
    f = jnp.concatenate([fl, fa, fb], axis=1)
    g = params["g"]
    h = jnp.einsum("oc,bchw->bohw", g["w1"], f) + g["b1"][None, :, None, None]
    h = jnp.maximum(h, 0.0)
    logits = jnp.einsum("oc,bchw->bohw", g["w2"], h) + g["b2"][None, :, None, None]
    wgt = jax.nn.softmax(logits, axis=1)
    out = wgt[:, 0:1] * fl + wgt[:, 1:2] * fa + wgt[:, 2:3] * fb
    return x * (1.0 - mask) + mask * out


# ----------------------------------- init ----------------------------------- #

def init_params(key, w_dim, feature_dim, hidden=32):
    C = feature_dim

    def style_block(k):
        k1, k2, k3, k4 = jax.random.split(k, 4)
        return dict(
            mod1_w=jax.random.normal(k1, (C, w_dim), jnp.float32),
            mod1_b=jnp.ones((C,), jnp.float32),
            conv1_w=jax.random.normal(k2, (C, C, 3, 3), jnp.float32),
            conv1_b=jnp.zeros((C,), jnp.float32),
            mod2_w=jax.random.normal(k3, (C, w_dim), jnp.float32),
            mod2_b=jnp.ones((C,), jnp.float32),
            conv2_w=jax.random.normal(k4, (C, C, 3, 3), jnp.float32),
            conv2_b=jnp.zeros((C,), jnp.float32),
        )

    kl, ka, kb, k1, k2 = jax.random.split(key, 5)
    g = dict(
        w1=jax.random.normal(k1, (hidden, 3 * C), jnp.float32) / math.sqrt(3 * C),
        b1=jnp.zeros((hidden,), jnp.float32),
        w2=jax.random.normal(k2, (3, hidden), jnp.float32) / math.sqrt(hidden),
        b2=jnp.zeros((3,), jnp.float32),
    )
    return dict(l=style_block(kl), a=style_block(ka), b=style_block(kb), g=g)


if __name__ == "__main__":
    B, C, w_dim = 2, 16, 16

    key = jax.random.PRNGKey(0)
    kp, kd = jax.random.split(key)
    params = init_params(kp, w_dim, C)
    fwd = jax.jit(partial(control_module_forward, params))

    # Square case + a non-square (H != W) regression case for the flat-window
    # conv boundary handling.
    for (H, W) in ((16, 16), (16, 8)):
        kx, kl, ka, kb, km, kd = jax.random.split(kd, 6)
        x = jax.random.normal(kx, (B, C, H, W), jnp.float32)
        sl = jax.random.normal(kl, (B, w_dim), jnp.float32)
        sa = jax.random.normal(ka, (B, w_dim), jnp.float32)
        sb = jax.random.normal(kb, (B, w_dim), jnp.float32)
        mask = (jax.random.uniform(km, (B, 1, H, W)) > 0.5).astype(jnp.float32)

        out = jax.block_until_ready(fwd(x, sl, sa, sb, mask))
        assert out.shape == (B, C, H, W)
        assert bool(jnp.all(jnp.isfinite(out)))

        ref = control_module_reference(params, x, sl, sa, sb, mask)
        # bf16 MXU inputs / feature storage -> ~1e-2-level deviation expected.
        max_err = float(jnp.max(jnp.abs(out - ref)))
        assert max_err < 0.25, f"max abs err {max_err} too large"

    print("KERNEL_OK")
</pallas_src>

<mosaic_0001>
module attributes {stable_mosaic.version = 11 : i64} {
  func.func @kernel(%arg0: i32, %arg1: memref<1x16x512xf32, #tpu.memory_space<vmem>>, %arg2: memref<1x1x384xf32, #tpu.memory_space<vmem>>, %arg3: memref<1x384xf32, #tpu.memory_space<vmem>>, %arg4: memref<1x48x144xbf16, #tpu.memory_space<vmem>>, %arg5: memref<48x1xf32, #tpu.memory_space<vmem>>, %arg6: memref<1x3x16x144xbf16, #tpu.memory_space<vmem>>, %arg7: memref<48x1xf32, #tpu.memory_space<vmem>>, %arg8: memref<32x48xbf16, #tpu.memory_space<vmem>>, %arg9: memref<32x1xf32, #tpu.memory_space<vmem>>, %arg10: memref<3x32xbf16, #tpu.memory_space<vmem>>, %arg11: memref<3x1xf32, #tpu.memory_space<vmem>>, %arg12: memref<1x16x384xf32, #tpu.memory_space<vmem>>, %arg13: memref<16x512xbf16, #tpu.memory_space<vmem>>, %arg14: memref<144x384xbf16, #tpu.memory_space<vmem>>, %arg15: memref<48x512xbf16, #tpu.memory_space<vmem>>, %arg16: memref<48x384xbf16, #tpu.memory_space<vmem>>) attributes {dimension_semantics = [#tpu.dimension_semantics<parallel>], iteration_bounds = array<i64: 2>, scalar_prefetch = 0 : i64, scratch_operands = 4 : i64, tpu.core_type = #tpu.core_type<tc>, window_params = [{transform_indices = @transform_0, window_bounds = array<i64: 1, 16, 512>}, {transform_indices = @transform_1, window_bounds = array<i64: 1, 1, 384>}, {pipeline_mode = #tpu.pipeline_mode<synchronous>, transform_indices = @transform_2, window_bounds = array<i64: 1, 384>}, {transform_indices = @transform_3, window_bounds = array<i64: 1, 48, 144>}, {pipeline_mode = #tpu.pipeline_mode<synchronous>, transform_indices = @transform_4, window_bounds = array<i64: 48, 1>}, {transform_indices = @transform_5, window_bounds = array<i64: 1, 3, 16, 144>}, {pipeline_mode = #tpu.pipeline_mode<synchronous>, transform_indices = @transform_6, window_bounds = array<i64: 48, 1>}, {pipeline_mode = #tpu.pipeline_mode<synchronous>, transform_indices = @transform_7, window_bounds = array<i64: 32, 48>}, {pipeline_mode = #tpu.pipeline_mode<synchronous>, transform_indices = @transform_8, window_bounds = array<i64: 32, 1>}, {pipeline_mode = #tpu.pipeline_mode<synchronous>, transform_indices = @transform_9, window_bounds = array<i64: 3, 32>}, {pipeline_mode = #tpu.pipeline_mode<synchronous>, transform_indices = @transform_10, window_bounds = array<i64: 3, 1>}, {transform_indices = @transform_11, window_bounds = array<i64: 1, 16, 384>}]} {
    %c0 = arith.constant 0 : index
    %c0_0 = arith.constant 0 : index
    %0 = vector.load %arg3[%c0, %c0_0] : memref<1x384xf32, #tpu.memory_space<vmem>>, vector<1x384xf32>
    %c0_1 = arith.constant 0 : index
    %c0_2 = arith.constant 0 : index
    %c0_3 = arith.constant 0 : index
    %1 = vector.load %arg1[%c0_1, %c0_2, %c0_3] : memref<1x16x512xf32, #tpu.memory_space<vmem>>, vector<1x16x512xf32>
    %2 = vector.shape_cast %1 : vector<1x16x512xf32> to vector<16x512xf32>
    %3 = arith.truncf %2 : vector<16x512xf32> to vector<16x512xbf16>
    %c0_4 = arith.constant 0 : index
    %c0_5 = arith.constant 0 : index
    %4 = vector.load %arg13[%c0_4, %c0_5] : memref<16x512xbf16, #tpu.memory_space<vmem>>, vector<16x512xbf16>
    tpu.vector_store %arg13[%c0_4, %c0_5], %3 {strides = array<i32>} : memref<16x512xbf16, #tpu.memory_space<vmem>>, vector<16x512xbf16>,
    %cst = arith.constant 0.000000e+00 : bf16
    %5 = vector.broadcast %cst : bf16 to vector<48x512xbf16>
    %c0_6 = arith.constant 0 : index
    %c0_7 = arith.constant 0 : index
    %6 = vector.load %arg15[%c0_6, %c0_7] : memref<48x512xbf16, #tpu.memory_space<vmem>>, vector<48x512xbf16>
    tpu.vector_store %arg15[%c0_6, %c0_7], %5 {strides = array<i32>} : memref<48x512xbf16, #tpu.memory_space<vmem>>, vector<48x512xbf16>,
    %c0_8 = arith.constant 0 : index
    %c0_9 = arith.constant 0 : index
    %7 = vector.load %arg13[%c0_8, %c0_9] : memref<16x512xbf16, #tpu.memory_space<vmem>>, vector<16x384xbf16>
    %c0_10 = arith.constant 0 : index
    %c0_11 = arith.constant 0 : index
    %8 = vector.load %arg14[%c0_10, %c0_11] : memref<144x384xbf16, #tpu.memory_space<vmem>>, vector<16x384xbf16>
    tpu.vector_store %arg14[%c0_10, %c0_11], %7 {strides = array<i32>} : memref<144x384xbf16, #tpu.memory_space<vmem>>, vector<16x384xbf16>,
    %c0_12 = arith.constant 0 : index
    %c1 = arith.constant 1 : index
    %9 = vector.load %arg13[%c0_12, %c1] : memref<16x512xbf16, #tpu.memory_space<vmem>>, vector<16x384xbf16>
    %c16 = arith.constant 16 : index
    %c0_13 = arith.constant 0 : index
    %10 = vector.load %arg14[%c16, %c0_13] : memref<144x384xbf16, #tpu.memory_space<vmem>>, vector<16x384xbf16>
    tpu.vector_store %arg14[%c16, %c0_13], %9 {strides = array<i32>} : memref<144x384xbf16, #tpu.memory_space<vmem>>, vector<16x384xbf16>,
    %c0_14 = arith.constant 0 : index
    %c2 = arith.constant 2 : index
    %11 = vector.load %arg13[%c0_14, %c2] : memref<16x512xbf16, #tpu.memory_space<vmem>>, vector<16x384xbf16>
    %c32 = arith.constant 32 : index
    %c0_15 = arith.constant 0 : index
    %12 = vector.load %arg14[%c32, %c0_15] : memref<144x384xbf16, #tpu.memory_space<vmem>>, vector<16x384xbf16>
    tpu.vector_store %arg14[%c32, %c0_15], %11 {strides = array<i32>} : memref<144x384xbf16, #tpu.memory_space<vmem>>, vector<16x384xbf16>,
    %c0_16 = arith.constant 0 : index
    %c18 = arith.constant 18 : index
    %13 = vector.load %arg13[%c0_16, %c18] : memref<16x512xbf16, #tpu.memory_space<vmem>>, vector<16x384xbf16>
    %c48 = arith.constant 48 : index
    %c0_17 = arith.constant 0 : index
    %14 = vector.load %arg14[%c48, %c0_17] : memref<144x384xbf16, #tpu.memory_space<vmem>>, vector<16x384xbf16>
    tpu.vector_store %arg14[%c48, %c0_17], %13 {strides = array<i32>} : memref<144x384xbf16, #tpu.memory_space<vmem>>, vector<16x384xbf16>,
    %c0_18 = arith.constant 0 : index
    %c19 = arith.constant 19 : index
    %15 = vector.load %arg13[%c0_18, %c19] : memref<16x512xbf16, #tpu.memory_space<vmem>>, vector<16x384xbf16>
    %c64 = arith.constant 64 : index
    %c0_19 = arith.constant 0 : index
    %16 = vector.load %arg14[%c64, %c0_19] : memref<144x384xbf16, #tpu.memory_space<vmem>>, vector<16x384xbf16>
    tpu.vector_store %arg14[%c64, %c0_19], %15 {strides = array<i32>} : memref<144x384xbf16, #tpu.memory_space<vmem>>, vector<16x384xbf16>,
    %c0_20 = arith.constant 0 : index
    %c20 = arith.constant 20 : index
    %17 = vector.load %arg13[%c0_20, %c20] : memref<16x512xbf16, #tpu.memory_space<vmem>>, vector<16x384xbf16>
    %c80 = arith.constant 80 : index
    %c0_21 = arith.constant 0 : index
    %18 = vector.load %arg14[%c80, %c0_21] : memref<144x384xbf16, #tpu.memory_space<vmem>>, vector<16x384xbf16>
    tpu.vector_store %arg14[%c80, %c0_21], %17 {strides = array<i32>} : memref<144x384xbf16, #tpu.memory_space<vmem>>, vector<16x384xbf16>,
    %c0_22 = arith.constant 0 : index
    %c36 = arith.constant 36 : index
    %19 = vector.load %arg13[%c0_22, %c36] : memref<16x512xbf16, #tpu.memory_space<vmem>>, vector<16x384xbf16>
    %c96 = arith.constant 96 : index
    %c0_23 = arith.constant 0 : index
    %20 = vector.load %arg14[%c96, %c0_23] : memref<144x384xbf16, #tpu.memory_space<vmem>>, vector<16x384xbf16>
    tpu.vector_store %arg14[%c96, %c0_23], %19 {strides = array<i32>} : memref<144x384xbf16, #tpu.memory_space<vmem>>, vector<16x384xbf16>,
    %c0_24 = arith.constant 0 : index
    %c37 = arith.constant 37 : index
    %21 = vector.load %arg13[%c0_24, %c37] : memref<16x512xbf16, #tpu.memory_space<vmem>>, vector<16x384xbf16>
    %c112 = arith.constant 112 : index
    %c0_25 = arith.constant 0 : index
    %22 = vector.load %arg14[%c112, %c0_25] : memref<144x384xbf16, #tpu.memory_space<vmem>>, vector<16x384xbf16>
    tpu.vector_store %arg14[%c112, %c0_25], %21 {strides = array<i32>} : memref<144x384xbf16, #tpu.memory_space<vmem>>, vector<16x384xbf16>,
    %c0_26 = arith.constant 0 : index
    %c38 = arith.constant 38 : index
    %23 = vector.load %arg13[%c0_26, %c38] : memref<16x512xbf16, #tpu.memory_space<vmem>>, vector<16x384xbf16>
    %c128 = arith.constant 128 : index
    %c0_27 = arith.constant 0 : index
    %24 = vector.load %arg14[%c128, %c0_27] : memref<144x384xbf16, #tpu.memory_space<vmem>>, vector<16x384xbf16>
    tpu.vector_store %arg14[%c128, %c0_27], %23 {strides = array<i32>} : memref<144x384xbf16, #tpu.memory_space<vmem>>, vector<16x384xbf16>,
    %c0_28 = arith.constant 0 : index
    %c0_29 = arith.constant 0 : index
    %c0_30 = arith.constant 0 : index
    %25 = vector.load %arg4[%c0_28, %c0_29, %c0_30] : memref<1x48x144xbf16, #tpu.memory_space<vmem>>, vector<1x48x144xbf16>
    %26 = vector.shape_cast %25 : vector<1x48x144xbf16> to vector<48x144xbf16>
    %c0_31 = arith.constant 0 : index
    %c0_32 = arith.constant 0 : index
    %27 = vector.load %arg14[%c0_31, %c0_32] : memref<144x384xbf16, #tpu.memory_space<vmem>>, vector<144x384xbf16>
    %cst_33 = arith.constant dense<0.000000e+00> : vector<48x384xf32>
    %28 = tpu.matmul %26, %27, %cst_33 {dimension_numbers = #tpu.dot_dimension_numbers<[1], [0], [0], [1], [0, 0, 1, 1], [], []>} : vector<48x144xbf16>, vector<144x384xbf16>, vector<48x384xf32> -> vector<48x384xf32>
    %c0_34 = arith.constant 0 : index
    %c0_35 = arith.constant 0 : index
    %29 = vector.load %arg5[%c0_34, %c0_35] : memref<48x1xf32, #tpu.memory_space<vmem>>, vector<48x1xf32>
    %30 = vector.broadcast %29 : vector<48x1xf32> to vector<48x384xf32>
    %31 = arith.addf %28, %30 : vector<48x384xf32>
    %cst_36 = arith.constant 0.000000e+00 : f32
    %32 = vector.broadcast %cst_36 : f32 to vector<48x384xf32>
    %33 = arith.cmpf oge, %31, %32 : vector<48x384xf32>
    %cst_37 = arith.constant 2.000000e-01 : f32
    %34 = vector.broadcast %cst_37 : f32 to vector<48x384xf32>
    %35 = arith.mulf %34, %31 : vector<48x384xf32>
    %36 = arith.select %33, %31, %35 : vector<48x384xi1>, vector<48x384xf32>
    %cst_38 = arith.constant 1.41421354 : f32
    %37 = vector.broadcast %cst_38 : f32 to vector<48x384xf32>
    %38 = arith.mulf %36, %37 : vector<48x384xf32>
    %39 = vector.broadcast %0 : vector<1x384xf32> to vector<48x384xf32>
    %40 = arith.mulf %38, %39 : vector<48x384xf32>
    %41 = arith.truncf %40 : vector<48x384xf32> to vector<48x384xbf16>
    %c0_39 = arith.constant 0 : index
    %c19_40 = arith.constant 19 : index
    %42 = vector.load %arg15[%c0_39, %c19_40] : memref<48x512xbf16, #tpu.memory_space<vmem>>, vector<48x384xbf16>
    tpu.vector_store %arg15[%c0_39, %c19_40], %41 {strides = array<i32>} : memref<48x512xbf16, #tpu.memory_space<vmem>>, vector<48x384xbf16>,
    %c0_41 = arith.constant 0 : index
    %c0_42 = arith.constant 0 : index
    %c19_43 = arith.constant 19 : index
    %43 = vector.load %arg1[%c0_41, %c0_42, %c19_43] : memref<1x16x512xf32, #tpu.memory_space<vmem>>, vector<1x16x384xf32>
    %44 = vector.shape_cast %43 : vector<1x16x384xf32> to vector<16x384xf32>
    %c0_44 = arith.constant 0 : index
    %c0_45 = arith.constant 0 : index
    %45 = vector.load %arg15[%c0_44, %c0_45] : memref<48x512xbf16, #tpu.memory_space<vmem>>, vector<16x384xbf16>
    %c0_46 = arith.constant 0 : index
    %c0_47 = arith.constant 0 : index
    %46 = vector.load %arg14[%c0_46, %c0_47] : memref<144x384xbf16, #tpu.memory_space<vmem>>, vector<16x384xbf16>
    tpu.vector_store %arg14[%c0_46, %c0_47], %45 {strides = array<i32>} : memref<144x384xbf16, #tpu.memory_space<vmem>>, vector<16x384xbf16>,
    %c0_48 = arith.constant 0 : index
    %c1_49 = arith.constant 1 : index
    %47 = vector.load %arg15[%c0_48, %c1_49] : memref<48x512xbf16, #tpu.memory_space<vmem>>, vector<16x384xbf16>
    %c16_50 = arith.constant 16 : index
    %c0_51 = arith.constant 0 : index
    %48 = vector.load %arg14[%c16_50, %c0_51] : memref<144x384xbf16, #tpu.memory_space<vmem>>, vector<16x384xbf16>
    tpu.vector_store %arg14[%c16_50, %c0_51], %47 {strides = array<i32>} : memref<144x384xbf16, #tpu.memory_space<vmem>>, vector<16x384xbf16>,
    %c0_52 = arith.constant 0 : index
    %c2_53 = arith.constant 2 : index
    %49 = vector.load %arg15[%c0_52, %c2_53] : memref<48x512xbf16, #tpu.memory_space<vmem>>, vector<16x384xbf16>
    %c32_54 = arith.constant 32 : index
    %c0_55 = arith.constant 0 : index
    %50 = vector.load %arg14[%c32_54, %c0_55] : memref<144x384xbf16, #tpu.memory_space<vmem>>, vector<16x384xbf16>
    tpu.vector_store %arg14[%c32_54, %c0_55], %49 {strides = array<i32>} : memref<144x384xbf16, #tpu.memory_space<vmem>>, vector<16x384xbf16>,
    %c0_56 = arith.constant 0 : index
    %c18_57 = arith.constant 18 : index
    %51 = vector.load %arg15[%c0_56, %c18_57] : memref<48x512xbf16, #tpu.memory_space<vmem>>, vector<16x384xbf16>
    %c48_58 = arith.constant 48 : index
    %c0_59 = arith.constant 0 : index
    %52 = vector.load %arg14[%c48_58, %c0_59] : memref<144x384xbf16, #tpu.memory_space<vmem>>, vector<16x384xbf16>
    tpu.vector_store %arg14[%c48_58, %c0_59], %51 {strides = array<i32>} : memref<144x384xbf16, #tpu.memory_space<vmem>>, vector<16x384xbf16>,
    %c0_60 = arith.constant 0 : index
    %c19_61 = arith.constant 19 : index
    %53 = vector.load %arg15[%c0_60, %c19_61] : memref<48x512xbf16, #tpu.memory_space<vmem>>, vector<16x384xbf16>
    %c64_62 = arith.constant 64 : index
    %c0_63 = arith.constant 0 : index
    %54 = vector.load %arg14[%c64_62, %c0_63] : memref<144x384xbf16, #tpu.memory_space<vmem>>, vector<16x384xbf16>
    tpu.vector_store %arg14[%c64_62, %c0_63], %53 {strides = array<i32>} : memref<144x384xbf16, #tpu.memory_space<vmem>>, vector<16x384xbf16>,
    %c0_64 = arith.constant 0 : index
    %c20_65 = arith.constant 20 : index
    %55 = vector.load %arg15[%c0_64, %c20_65] : memref<48x512xbf16, #tpu.memory_space<vmem>>, vector<16x384xbf16>
    %c80_66 = arith.constant 80 : index
    %c0_67 = arith.constant 0 : index
    %56 = vector.load %arg14[%c80_66, %c0_67] : memref<144x384xbf16, #tpu.memory_space<vmem>>, vector<16x384xbf16>
    tpu.vector_store %arg14[%c80_66, %c0_67], %55 {strides = array<i32>} : memref<144x384xbf16, #tpu.memory_space<vmem>>, vector<16x384xbf16>,
    %c0_68 = arith.constant 0 : index
    %c36_69 = arith.constant 36 : index
    %57 = vector.load %arg15[%c0_68, %c36_69] : memref<48x512xbf16, #tpu.memory_space<vmem>>, vector<16x384xbf16>
    %c96_70 = arith.constant 96 : index
    %c0_71 = arith.constant 0 : index
    %58 = vector.load %arg14[%c96_70, %c0_71] : memref<144x384xbf16, #tpu.memory_space<vmem>>, vector<16x384xbf16>
    tpu.vector_store %arg14[%c96_70, %c0_71], %57 {strides = array<i32>} : memref<144x384xbf16, #tpu.memory_space<vmem>>, vector<16x384xbf16>,
    %c0_72 = arith.constant 0 : index
    %c37_73 = arith.constant 37 : index
    %59 = vector.load %arg15[%c0_72, %c37_73] : memref<48x512xbf16, #tpu.memory_space<vmem>>, vector<16x384xbf16>
    %c112_74 = arith.constant 112 : index
    %c0_75 = arith.constant 0 : index
    %60 = vector.load %arg14[%c112_74, %c0_75] : memref<144x384xbf16, #tpu.memory_space<vmem>>, vector<16x384xbf16>
    tpu.vector_store %arg14[%c112_74, %c0_75], %59 {strides = array<i32>} : memref<144x384xbf16, #tpu.memory_space<vmem>>, vector<16x384xbf16>,
    %c0_76 = arith.constant 0 : index
    %c38_77 = arith.constant 38 : index
    %61 = vector.load %arg15[%c0_76, %c38_77] : memref<48x512xbf16, #tpu.memory_space<vmem>>, vector<16x384xbf16>
    %c128_78 = arith.constant 128 : index
    %c0_79 = arith.constant 0 : index
    %62 = vector.load %arg14[%c128_78, %c0_79] : memref<144x384xbf16, #tpu.memory_space<vmem>>, vector<16x384xbf16>
    tpu.vector_store %arg14[%c128_78, %c0_79], %61 {strides = array<i32>} : memref<144x384xbf16, #tpu.memory_space<vmem>>, vector<16x384xbf16>,
    %c0_80 = arith.constant 0 : index
    %c0_81 = arith.constant 0 : index
    %c0_82 = arith.constant 0 : index
    %c0_83 = arith.constant 0 : index
    %63 = vector.load %arg6[%c0_80, %c0_81, %c0_82, %c0_83] : memref<1x3x16x144xbf16, #tpu.memory_space<vmem>>, vector<1x1x16x144xbf16>
    %64 = vector.shape_cast %63 : vector<1x1x16x144xbf16> to vector<16x144xbf16>
    %c0_84 = arith.constant 0 : index
    %c0_85 = arith.constant 0 : index
    %65 = vector.load %arg14[%c0_84, %c0_85] : memref<144x384xbf16, #tpu.memory_space<vmem>>, vector<144x384xbf16>
    %cst_86 = arith.constant dense<0.000000e+00> : vector<16x384xf32>
    %66 = tpu.matmul %64, %65, %cst_86 {dimension_numbers = #tpu.dot_dimension_numbers<[1], [0], [0], [1], [0, 0, 1, 1], [], []>} : vector<16x144xbf16>, vector<144x384xbf16>, vector<16x384xf32> -> vector<16x384xf32>
    %c0_87 = arith.constant 0 : index
    %c0_88 = arith.constant 0 : index
    %67 = vector.load %arg7[%c0_87, %c0_88] : memref<48x1xf32, #tpu.memory_space<vmem>>, vector<16x1xf32>
    %68 = vector.broadcast %67 : vector<16x1xf32> to vector<16x384xf32>
    %69 = arith.addf %66, %68 : vector<16x384xf32>
    %cst_89 = arith.constant 0.000000e+00 : f32
    %70 = vector.broadcast %cst_89 : f32 to vector<16x384xf32>
    %71 = arith.cmpf oge, %69, %70 : vector<16x384xf32>
    %cst_90 = arith.constant 2.000000e-01 : f32
    %72 = vector.broadcast %cst_90 : f32 to vector<16x384xf32>
    %73 = arith.mulf %72, %69 : vector<16x384xf32>
    %74 = arith.select %71, %69, %73 : vector<16x384xi1>, vector<16x384xf32>
    %cst_91 = arith.constant 1.41421354 : f32
    %75 = vector.broadcast %cst_91 : f32 to vector<16x384xf32>
    %76 = arith.mulf %74, %75 : vector<16x384xf32>
    %77 = arith.addf %76, %44 : vector<16x384xf32>
    %78 = arith.truncf %77 : vector<16x384xf32> to vector<16x384xbf16>
    %c0_92 = arith.constant 0 : index
    %c0_93 = arith.constant 0 : index
    %79 = vector.load %arg16[%c0_92, %c0_93] : memref<48x384xbf16, #tpu.memory_space<vmem>>, vector<16x384xbf16>
    tpu.vector_store %arg16[%c0_92, %c0_93], %78 {strides = array<i32>} : memref<48x384xbf16, #tpu.memory_space<vmem>>, vector<16x384xbf16>,
    %c16_94 = arith.constant 16 : index
    %c0_95 = arith.constant 0 : index
    %80 = vector.load %arg15[%c16_94, %c0_95] : memref<48x512xbf16, #tpu.memory_space<vmem>>, vector<16x384xbf16>
    %c0_96 = arith.constant 0 : index
    %c0_97 = arith.constant 0 : index
    %81 = vector.load %arg14[%c0_96, %c0_97] : memref<144x384xbf16, #tpu.memory_space<vmem>>, vector<16x384xbf16>
    tpu.vector_store %arg14[%c0_96, %c0_97], %80 {strides = array<i32>} : memref<144x384xbf16, #tpu.memory_space<vmem>>, vector<16x384xbf16>,
    %c16_98 = arith.constant 16 : index
    %c1_99 = arith.constant 1 : index
    %82 = vector.load %arg15[%c16_98, %c1_99] : memref<48x512xbf16, #tpu.memory_space<vmem>>, vector<16x384xbf16>
    %c16_100 = arith.constant 16 : index
    %c0_101 = arith.constant 0 : index
    %83 = vector.load %arg14[%c16_100, %c0_101] : memref<144x384xbf16, #tpu.memory_space<vmem>>, vector<16x384xbf16>
    tpu.vector_store %arg14[%c16_100, %c0_101], %82 {strides = array<i32>} : memref<144x384xbf16, #tpu.memory_space<vmem>>, vector<16x384xbf16>,
    %c16_102 = arith.constant 16 : index
    %c2_103 = arith.constant 2 : index
    %84 = vector.load %arg15[%c16_102, %c2_103] : memref<48x512xbf16, #tpu.memory_space<vmem>>, vector<16x384xbf16>
    %c32_104 = arith.constant 32 : index
    %c0_105 = arith.constant 0 : index
    %85 = vector.load %arg14[%c32_104, %c0_105] : memref<144x384xbf16, #tpu.memory_space<vmem>>, vector<16x384xbf16>
    tpu.vector_store %arg14[%c32_104, %c0_105], %84 {strides = array<i32>} : memref<144x384xbf16, #tpu.memory_space<vmem>>, vector<16x384xbf16>,
    %c16_106 = arith.constant 16 : index
    %c18_107 = arith.constant 18 : index
    %86 = vector.load %arg15[%c16_106, %c18_107] : memref<48x512xbf16, #tpu.memory_space<vmem>>, vector<16x384xbf16>
    %c48_108 = arith.constant 48 : index
    %c0_109 = arith.constant 0 : index
    %87 = vector.load %arg14[%c48_108, %c0_109] : memref<144x384xbf16, #tpu.memory_space<vmem>>, vector<16x384xbf16>
    tpu.vector_store %arg14[%c48_108, %c0_109], %86 {strides = array<i32>} : memref<144x384xbf16, #tpu.memory_space<vmem>>, vector<16x384xbf16>,
    %c16_110 = arith.constant 16 : index
    %c19_111 = arith.constant 19 : index
    %88 = vector.load %arg15[%c16_110, %c19_111] : memref<48x512xbf16, #tpu.memory_space<vmem>>, vector<16x384xbf16>
    %c64_112 = arith.constant 64 : index
    %c0_113 = arith.constant 0 : index
    %89 = vector.load %arg14[%c64_112, %c0_113] : memref<144x384xbf16, #tpu.memory_space<vmem>>, vector<16x384xbf16>
    tpu.vector_store %arg14[%c64_112, %c0_113], %88 {strides = array<i32>} : memref<144x384xbf16, #tpu.memory_space<vmem>>, vector<16x384xbf16>,
    %c16_114 = arith.constant 16 : index
    %c20_115 = arith.constant 20 : index
    %90 = vector.load %arg15[%c16_114, %c20_115] : memref<48x512xbf16, #tpu.memory_space<vmem>>, vector<16x384xbf16>
    %c80_116 = arith.constant 80 : index
    %c0_117 = arith.constant 0 : index
    %91 = vector.load %arg14[%c80_116, %c0_117] : memref<144x384xbf16, #tpu.memory_space<vmem>>, vector<16x384xbf16>
    tpu.vector_store %arg14[%c80_116, %c0_117], %90 {strides = array<i32>} : memref<144x384xbf16, #tpu.memory_space<vmem>>, vector<16x384xbf16>,
    %c16_118 = arith.constant 16 : index
    %c36_119 = arith.constant 36 : index
    %92 = vector.load %arg15[%c16_118, %c36_119] : memref<48x512xbf16, #tpu.memory_space<vmem>>, vector<16x384xbf16>
    %c96_120 = arith.constant 96 : index
    %c0_121 = arith.constant 0 : index
    %93 = vector.load %arg14[%c96_120, %c0_121] : memref<144x384xbf16, #tpu.memory_space<vmem>>, vector<16x384xbf16>
    tpu.vector_store %arg14[%c96_120, %c0_121], %92 {strides = array<i32>} : memref<144x384xbf16, #tpu.memory_space<vmem>>, vector<16x384xbf16>,
    %c16_122 = arith.constant 16 : index
    %c37_123 = arith.constant 37 : index
    %94 = vector.load %arg15[%c16_122, %c37_123] : memref<48x512xbf16, #tpu.memory_space<vmem>>, vector<16x384xbf16>
    %c112_124 = arith.constant 112 : index
    %c0_125 = arith.constant 0 : index
    %95 = vector.load %arg14[%c112_124, %c0_125] : memref<144x384xbf16, #tpu.memory_space<vmem>>, vector<16x384xbf16>
    tpu.vector_store %arg14[%c112_124, %c0_125], %94 {strides = array<i32>} : memref<144x384xbf16, #tpu.memory_space<vmem>>, vector<16x384xbf16>,
    %c16_126 = arith.constant 16 : index
    %c38_127 = arith.constant 38 : index
    %96 = vector.load %arg15[%c16_126, %c38_127] : memref<48x512xbf16, #tpu.memory_space<vmem>>, vector<16x384xbf16>
    %c128_128 = arith.constant 128 : index
    %c0_129 = arith.constant 0 : index
    %97 = vector.load %arg14[%c128_128, %c0_129] : memref<144x384xbf16, #tpu.memory_space<vmem>>, vector<16x384xbf16>
    tpu.vector_store %arg14[%c128_128, %c0_129], %96 {strides = array<i32>} : memref<144x384xbf16, #tpu.memory_space<vmem>>, vector<16x384xbf16>,
    %c0_130 = arith.constant 0 : index
    %c1_131 = arith.constant 1 : index
    %c0_132 = arith.constant 0 : index
    %c0_133 = arith.constant 0 : index
    %98 = vector.load %arg6[%c0_130, %c1_131, %c0_132, %c0_133] : memref<1x3x16x144xbf16, #tpu.memory_space<vmem>>, vector<1x1x16x144xbf16>
    %99 = vector.shape_cast %98 : vector<1x1x16x144xbf16> to vector<16x144xbf16>
    %c0_134 = arith.constant 0 : index
    %c0_135 = arith.constant 0 : index
    %100 = vector.load %arg14[%c0_134, %c0_135] : memref<144x384xbf16, #tpu.memory_space<vmem>>, vector<144x384xbf16>
    %cst_136 = arith.constant dense<0.000000e+00> : vector<16x384xf32>
    %101 = tpu.matmul %99, %100, %cst_136 {dimension_numbers = #tpu.dot_dimension_numbers<[1], [0], [0], [1], [0, 0, 1, 1], [], []>} : vector<16x144xbf16>, vector<144x384xbf16>, vector<16x384xf32> -> vector<16x384xf32>
    %c16_137 = arith.constant 16 : index
    %c0_138 = arith.constant 0 : index
    %102 = vector.load %arg7[%c16_137, %c0_138] : memref<48x1xf32, #tpu.memory_space<vmem>>, vector<16x1xf32>
    %103 = vector.broadcast %102 : vector<16x1xf32> to vector<16x384xf32>
    %104 = arith.addf %101, %103 : vector<16x384xf32>
    %cst_139 = arith.constant 0.000000e+00 : f32
    %105 = vector.broadcast %cst_139 : f32 to vector<16x384xf32>
    %106 = arith.cmpf oge, %104, %105 : vector<16x384xf32>
    %cst_140 = arith.constant 2.000000e-01 : f32
    %107 = vector.broadcast %cst_140 : f32 to vector<16x384xf32>
    %108 = arith.mulf %107, %104 : vector<16x384xf32>
    %109 = arith.select %106, %104, %108 : vector<16x384xi1>, vector<16x384xf32>
    %cst_141 = arith.constant 1.41421354 : f32
    %110 = vector.broadcast %cst_141 : f32 to vector<16x384xf32>
    %111 = arith.mulf %109, %110 : vector<16x384xf32>
    %112 = arith.addf %111, %44 : vector<16x384xf32>
    %113 = arith.truncf %112 : vector<16x384xf32> to vector<16x384xbf16>
    %c16_142 = arith.constant 16 : index
    %c0_143 = arith.constant 0 : index
    %114 = vector.load %arg16[%c16_142, %c0_143] : memref<48x384xbf16, #tpu.memory_space<vmem>>, vector<16x384xbf16>
    tpu.vector_store %arg16[%c16_142, %c0_143], %113 {strides = array<i32>} : memref<48x384xbf16, #tpu.memory_space<vmem>>, vector<16x384xbf16>,
    %c32_144 = arith.constant 32 : index
    %c0_145 = arith.constant 0 : index
    %115 = vector.load %arg15[%c32_144, %c0_145] : memref<48x512xbf16, #tpu.memory_space<vmem>>, vector<16x384xbf16>
    %c0_146 = arith.constant 0 : index
    %c0_147 = arith.constant 0 : index
    %116 = vector.load %arg14[%c0_146, %c0_147] : memref<144x384xbf16, #tpu.memory_space<vmem>>, vector<16x384xbf16>
    tpu.vector_store %arg14[%c0_146, %c0_147], %115 {strides = array<i32>} : memref<144x384xbf16, #tpu.memory_space<vmem>>, vector<16x384xbf16>,
    %c32_148 = arith.constant 32 : index
    %c1_149 = arith.constant 1 : index
    %117 = vector.load %arg15[%c32_148, %c1_149] : memref<48x512xbf16, #tpu.memory_space<vmem>>, vector<16x384xbf16>
    %c16_150 = arith.constant 16 : index
    %c0_151 = arith.constant 0 : index
    %118 = vector.load %arg14[%c16_150, %c0_151] : memref<144x384xbf16, #tpu.memory_space<vmem>>, vector<16x384xbf16>
    tpu.vector_store %arg14[%c16_150, %c0_151], %117 {strides = array<i32>} : memref<144x384xbf16, #tpu.memory_space<vmem>>, vector<16x384xbf16>,
    %c32_152 = arith.constant 32 : index
    %c2_153 = arith.constant 2 : index
    %119 = vector.load %arg15[%c32_152, %c2_153] : memref<48x512xbf16, #tpu.memory_space<vmem>>, vector<16x384xbf16>
    %c32_154 = arith.constant 32 : index
    %c0_155 = arith.constant 0 : index
    %120 = vector.load %arg14[%c32_154, %c0_155] : memref<144x384xbf16, #tpu.memory_space<vmem>>, vector<16x384xbf16>
    tpu.vector_store %arg14[%c32_154, %c0_155], %119 {strides = array<i32>} : memref<144x384xbf16, #tpu.memory_space<vmem>>, vector<16x384xbf16>,
    %c32_156 = arith.constant 32 : index
    %c18_157 = arith.constant 18 : index
    %121 = vector.load %arg15[%c32_156, %c18_157] : memref<48x512xbf16, #tpu.memory_space<vmem>>, vector<16x384xbf16>
    %c48_158 = arith.constant 48 : index
    %c0_159 = arith.constant 0 : index
    %122 = vector.load %arg14[%c48_158, %c0_159] : memref<144x384xbf16, #tpu.memory_space<vmem>>, vector<16x384xbf16>
    tpu.vector_store %arg14[%c48_158, %c0_159], %121 {strides = array<i32>} : memref<144x384xbf16, #tpu.memory_space<vmem>>, vector<16x384xbf16>,
    %c32_160 = arith.constant 32 : index
    %c19_161 = arith.constant 19 : index
    %123 = vector.load %arg15[%c32_160, %c19_161] : memref<48x512xbf16, #tpu.memory_space<vmem>>, vector<16x384xbf16>
    %c64_162 = arith.constant 64 : index
    %c0_163 = arith.constant 0 : index
    %124 = vector.load %arg14[%c64_162, %c0_163] : memref<144x384xbf16, #tpu.memory_space<vmem>>, vector<16x384xbf16>
    tpu.vector_store %arg14[%c64_162, %c0_163], %123 {strides = array<i32>} : memref<144x384xbf16, #tpu.memory_space<vmem>>, vector<16x384xbf16>,
    %c32_164 = arith.constant 32 : index
    %c20_165 = arith.constant 20 : index
    %125 = vector.load %arg15[%c32_164, %c20_165] : memref<48x512xbf16, #tpu.memory_space<vmem>>, vector<16x384xbf16>
    %c80_166 = arith.constant 80 : index
    %c0_167 = arith.constant 0 : index
    %126 = vector.load %arg14[%c80_166, %c0_167] : memref<144x384xbf16, #tpu.memory_space<vmem>>, vector<16x384xbf16>
    tpu.vector_store %arg14[%c80_166, %c0_167], %125 {strides = array<i32>} : memref<144x384xbf16, #tpu.memory_space<vmem>>, vector<16x384xbf16>,
    %c32_168 = arith.constant 32 : index
    %c36_169 = arith.constant 36 : index
    %127 = vector.load %arg15[%c32_168, %c36_169] : memref<48x512xbf16, #tpu.memory_space<vmem>>, vector<16x384xbf16>
    %c96_170 = arith.constant 96 : index
    %c0_171 = arith.constant 0 : index
    %128 = vector.load %arg14[%c96_170, %c0_171] : memref<144x384xbf16, #tpu.memory_space<vmem>>, vector<16x384xbf16>
    tpu.vector_store %arg14[%c96_170, %c0_171], %127 {strides = array<i32>} : memref<144x384xbf16, #tpu.memory_space<vmem>>, vector<16x384xbf16>,
    %c32_172 = arith.constant 32 : index
    %c37_173 = arith.constant 37 : index
    %129 = vector.load %arg15[%c32_172, %c37_173] : memref<48x512xbf16, #tpu.memory_space<vmem>>, vector<16x384xbf16>
    %c112_174 = arith.constant 112 : index
    %c0_175 = arith.constant 0 : index
    %130 = vector.load %arg14[%c112_174, %c0_175] : memref<144x384xbf16, #tpu.memory_space<vmem>>, vector<16x384xbf16>
    tpu.vector_store %arg14[%c112_174, %c0_175], %129 {strides = array<i32>} : memref<144x384xbf16, #tpu.memory_space<vmem>>, vector<16x384xbf16>,
    %c32_176 = arith.constant 32 : index
    %c38_177 = arith.constant 38 : index
    %131 = vector.load %arg15[%c32_176, %c38_177] : memref<48x512xbf16, #tpu.memory_space<vmem>>, vector<16x384xbf16>
    %c128_178 = arith.constant 128 : index
    %c0_179 = arith.constant 0 : index
    %132 = vector.load %arg14[%c128_178, %c0_179] : memref<144x384xbf16, #tpu.memory_space<vmem>>, vector<16x384xbf16>
    tpu.vector_store %arg14[%c128_178, %c0_179], %131 {strides = array<i32>} : memref<144x384xbf16, #tpu.memory_space<vmem>>, vector<16x384xbf16>,
    %c0_180 = arith.constant 0 : index
    %c2_181 = arith.constant 2 : index
    %c0_182 = arith.constant 0 : index
    %c0_183 = arith.constant 0 : index
    %133 = vector.load %arg6[%c0_180, %c2_181, %c0_182, %c0_183] : memref<1x3x16x144xbf16, #tpu.memory_space<vmem>>, vector<1x1x16x144xbf16>
    %134 = vector.shape_cast %133 : vector<1x1x16x144xbf16> to vector<16x144xbf16>
    %c0_184 = arith.constant 0 : index
    %c0_185 = arith.constant 0 : index
    %135 = vector.load %arg14[%c0_184, %c0_185] : memref<144x384xbf16, #tpu.memory_space<vmem>>, vector<144x384xbf16>
    %cst_186 = arith.constant dense<0.000000e+00> : vector<16x384xf32>
    %136 = tpu.matmul %134, %135, %cst_186 {dimension_numbers = #tpu.dot_dimension_numbers<[1], [0], [0], [1], [0, 0, 1, 1], [], []>} : vector<16x144xbf16>, vector<144x384xbf16>, vector<16x384xf32> -> vector<16x384xf32>
    %c32_187 = arith.constant 32 : index
    %c0_188 = arith.constant 0 : index
    %137 = vector.load %arg7[%c32_187, %c0_188] : memref<48x1xf32, #tpu.memory_space<vmem>>, vector<16x1xf32>
    %138 = vector.broadcast %137 : vector<16x1xf32> to vector<16x384xf32>
    %139 = arith.addf %136, %138 : vector<16x384xf32>
    %cst_189 = arith.constant 0.000000e+00 : f32
    %140 = vector.broadcast %cst_189 : f32 to vector<16x384xf32>
    %141 = arith.cmpf oge, %139, %140 : vector<16x384xf32>
    %cst_190 = arith.constant 2.000000e-01 : f32
    %142 = vector.broadcast %cst_190 : f32 to vector<16x384xf32>
    %143 = arith.mulf %142, %139 : vector<16x384xf32>
    %144 = arith.select %141, %139, %143 : vector<16x384xi1>, vector<16x384xf32>
    %cst_191 = arith.constant 1.41421354 : f32
    %145 = vector.broadcast %cst_191 : f32 to vector<16x384xf32>
    %146 = arith.mulf %144, %145 : vector<16x384xf32>
    %147 = arith.addf %146, %44 : vector<16x384xf32>
    %148 = arith.truncf %147 : vector<16x384xf32> to vector<16x384xbf16>
    %c32_192 = arith.constant 32 : index
    %c0_193 = arith.constant 0 : index
    %149 = vector.load %arg16[%c32_192, %c0_193] : memref<48x384xbf16, #tpu.memory_space<vmem>>, vector<16x384xbf16>
    tpu.vector_store %arg16[%c32_192, %c0_193], %148 {strides = array<i32>} : memref<48x384xbf16, #tpu.memory_space<vmem>>, vector<16x384xbf16>,
    %c0_194 = arith.constant 0 : index
    %c0_195 = arith.constant 0 : index
    %150 = vector.load %arg8[%c0_194, %c0_195] : memref<32x48xbf16, #tpu.memory_space<vmem>>, vector<32x48xbf16>
    %c0_196 = arith.constant 0 : index
    %c0_197 = arith.constant 0 : index
    %151 = vector.load %arg16[%c0_196, %c0_197] : memref<48x384xbf16, #tpu.memory_space<vmem>>, vector<48x384xbf16>
    %cst_198 = arith.constant dense<0.000000e+00> : vector<32x384xf32>
    %152 = tpu.matmul %150, %151, %cst_198 {dimension_numbers = #tpu.dot_dimension_numbers<[1], [0], [0], [1], [0, 0, 1, 1], [], []>} : vector<32x48xbf16>, vector<48x384xbf16>, vector<32x384xf32> -> vector<32x384xf32>
    %c0_199 = arith.constant 0 : index
    %c0_200 = arith.constant 0 : index
    %153 = vector.load %arg9[%c0_199, %c0_200] : memref<32x1xf32, #tpu.memory_space<vmem>>, vector<32x1xf32>
    %154 = vector.broadcast %153 : vector<32x1xf32> to vector<32x384xf32>
    %155 = arith.addf %152, %154 : vector<32x384xf32>
    %cst_201 = arith.constant 0.000000e+00 : f32
    %156 = vector.broadcast %cst_201 : f32 to vector<32x384xf32>
    %157 = arith.maximumf %155, %156 : vector<32x384xf32>
    %c0_202 = arith.constant 0 : index
    %c0_203 = arith.constant 0 : index
    %158 = vector.load %arg10[%c0_202, %c0_203] : memref<3x32xbf16, #tpu.memory_space<vmem>>, vector<3x32xbf16>
    %159 = arith.truncf %157 : vector<32x384xf32> to vector<32x384xbf16>
    %cst_204 = arith.constant dense<0.000000e+00> : vector<3x384xf32>
    %160 = tpu.matmul %158, %159, %cst_204 {dimension_numbers = #tpu.dot_dimension_numbers<[1], [0], [0], [1], [0, 0, 1, 1], [], []>} : vector<3x32xbf16>, vector<32x384xbf16>, vector<3x384xf32> -> vector<3x384xf32>
    %c0_205 = arith.constant 0 : index
    %c0_206 = arith.constant 0 : index
    %161 = vector.load %arg11[%c0_205, %c0_206] : memref<3x1xf32, #tpu.memory_space<vmem>>, vector<3x1xf32>
    %162 = vector.broadcast %161 : vector<3x1xf32> to vector<3x384xf32>
    %163 = arith.addf %160, %162 : vector<3x384xf32>
    %164 = vector.extract_strided_slice %163 {offsets = [0, 0], sizes = [1, 384], strides = [1, 1]} : vector<3x384xf32> to vector<1x384xf32>
    %165 = vector.extract_strided_slice %163 {offsets = [1, 0], sizes = [1, 384], strides = [1, 1]} : vector<3x384xf32> to vector<1x384xf32>
    %166 = vector.extract_strided_slice %163 {offsets = [2, 0], sizes = [1, 384], strides = [1, 1]} : vector<3x384xf32> to vector<1x384xf32>
    %167 = arith.maximumf %164, %165 : vector<1x384xf32>
    %168 = arith.maximumf %167, %166 : vector<1x384xf32>
    %169 = arith.subf %164, %168 : vector<1x384xf32>
    %170 = math.exp %169 : vector<1x384xf32>
    %171 = arith.subf %165, %168 : vector<1x384xf32>
    %172 = math.exp %171 : vector<1x384xf32>
    %173 = arith.subf %166, %168 : vector<1x384xf32>
    %174 = math.exp %173 : vector<1x384xf32>
    %175 = arith.addf %170, %172 : vector<1x384xf32>
    %176 = arith.addf %175, %174 : vector<1x384xf32>
    %177 = tpu.reciprocal %176 {approx = true} : vector<1x384xf32> -> vector<1x384xf32>
    %178 = arith.mulf %170, %177 : vector<1x384xf32>
    %179 = vector.broadcast %178 : vector<1x384xf32> to vector<16x384xf32>
    %180 = arith.mulf %179, %77 : vector<16x384xf32>
    %181 = arith.mulf %172, %177 : vector<1x384xf32>
    %182 = vector.broadcast %181 : vector<1x384xf32> to vector<16x384xf32>
    %183 = arith.mulf %182, %112 : vector<16x384xf32>
    %184 = arith.addf %180, %183 : vector<16x384xf32>
    %185 = arith.mulf %174, %177 : vector<1x384xf32>
    %186 = vector.broadcast %185 : vector<1x384xf32> to vector<16x384xf32>
    %187 = arith.mulf %186, %147 : vector<16x384xf32>
    %188 = arith.addf %184, %187 : vector<16x384xf32>
    %c0_207 = arith.constant 0 : index
    %c0_208 = arith.constant 0 : index
    %c0_209 = arith.constant 0 : index
    %189 = vector.load %arg2[%c0_207, %c0_208, %c0_209] : memref<1x1x384xf32, #tpu.memory_space<vmem>>, vector<1x1x384xf32>
    %190 = vector.shape_cast %189 : vector<1x1x384xf32> to vector<1x384xf32>
    %cst_210 = arith.constant 1.000000e+00 : f32
    %191 = vector.broadcast %cst_210 : f32 to vector<1x384xf32>
    %192 = arith.subf %191, %190 : vector<1x384xf32>
    %193 = vector.broadcast %192 : vector<1x384xf32> to vector<16x384xf32>
    %194 = arith.mulf %44, %193 : vector<16x384xf32>
    %195 = vector.broadcast %190 : vector<1x384xf32> to vector<16x384xf32>
    %196 = arith.mulf %195, %188 : vector<16x384xf32>
    %197 = arith.addf %194, %196 : vector<16x384xf32>
    %c0_211 = arith.constant 0 : index
    %c0_212 = arith.constant 0 : index
    %c0_213 = arith.constant 0 : index
    %198 = vector.load %arg12[%c0_211, %c0_212, %c0_213] : memref<1x16x384xf32, #tpu.memory_space<vmem>>, vector<1x16x384xf32>
    %199 = vector.shape_cast %198 : vector<1x16x384xf32> to vector<16x384xf32>
    %200 = vector.shape_cast %197 : vector<16x384xf32> to vector<1x16x384xf32>
    tpu.vector_store %arg12[%c0_211, %c0_212, %c0_213], %200 {strides = array<i32>} : memref<1x16x384xf32, #tpu.memory_space<vmem>>, vector<1x16x384xf32>,
    return
  }
  func.func @transform_0(%arg0: i32) -> (i32, i32, i32) {
    %c0_i32 = arith.constant 0 : i32
    %c0_i32_0 = arith.constant 0 : i32
    %c0_i32_1 = arith.constant 0 : i32
    return %arg0, %c0_i32, %c0_i32_0 : i32, i32, i32
  }
  func.func @transform_1(%arg0: i32) -> (i32, i32, i32) {
    %c0_i32 = arith.constant 0 : i32
    %c0_i32_0 = arith.constant 0 : i32
    %c0_i32_1 = arith.constant 0 : i32
    return %arg0, %c0_i32, %c0_i32_0 : i32, i32, i32
  }
  func.func @transform_2(%arg0: i32) -> (i32, i32) {
    %c0_i32 = arith.constant 0 : i32
    %c0_i32_0 = arith.constant 0 : i32
    %c0_i32_1 = arith.constant 0 : i32
    return %c0_i32, %c0_i32_0 : i32, i32
  }
  func.func @transform_3(%arg0: i32) -> (i32, i32, i32) {
    %c0_i32 = arith.constant 0 : i32
    %c0_i32_0 = arith.constant 0 : i32
    %c0_i32_1 = arith.constant 0 : i32
    return %arg0, %c0_i32, %c0_i32_0 : i32, i32, i32
  }
  func.func @transform_4(%arg0: i32) -> (i32, i32) {
    %c0_i32 = arith.constant 0 : i32
    %c0_i32_0 = arith.constant 0 : i32
    %c0_i32_1 = arith.constant 0 : i32
    return %c0_i32, %c0_i32_0 : i32, i32
  }
  func.func @transform_5(%arg0: i32) -> (i32, i32, i32, i32) {
    %c0_i32 = arith.constant 0 : i32
    %c0_i32_0 = arith.constant 0 : i32
    %c0_i32_1 = arith.constant 0 : i32
    %c0_i32_2 = arith.constant 0 : i32
    return %arg0, %c0_i32, %c0_i32_0, %c0_i32_1 : i32, i32, i32, i32
  }
  func.func @transform_6(%arg0: i32) -> (i32, i32) {
    %c0_i32 = arith.constant 0 : i32
    %c0_i32_0 = arith.constant 0 : i32
    %c0_i32_1 = arith.constant 0 : i32
    return %c0_i32, %c0_i32_0 : i32, i32
  }
  func.func @transform_7(%arg0: i32) -> (i32, i32) {
    %c0_i32 = arith.constant 0 : i32
    %c0_i32_0 = arith.constant 0 : i32
    %c0_i32_1 = arith.constant 0 : i32
    return %c0_i32, %c0_i32_0 : i32, i32
  }
  func.func @transform_8(%arg0: i32) -> (i32, i32) {
    %c0_i32 = arith.constant 0 : i32
    %c0_i32_0 = arith.constant 0 : i32
    %c0_i32_1 = arith.constant 0 : i32
    return %c0_i32, %c0_i32_0 : i32, i32
  }
  func.func @transform_9(%arg0: i32) -> (i32, i32) {
    %c0_i32 = arith.constant 0 : i32
    %c0_i32_0 = arith.constant 0 : i32
    %c0_i32_1 = arith.constant 0 : i32
    return %c0_i32, %c0_i32_0 : i32, i32
  }
  func.func @transform_10(%arg0: i32) -> (i32, i32) {
    %c0_i32 = arith.constant 0 : i32
    %c0_i32_0 = arith.constant 0 : i32
    %c0_i32_1 = arith.constant 0 : i32
    return %c0_i32, %c0_i32_0 : i32, i32
  }
  func.func @transform_11(%arg0: i32) -> (i32, i32, i32) {
    %c0_i32 = arith.constant 0 : i32
    %c0_i32_0 = arith.constant 0 : i32
    %c0_i32_1 = arith.constant 0 : i32
    return %arg0, %c0_i32, %c0_i32_0 : i32, i32, i32
  }
}

</mosaic_0001>

<llo_original>
// kernel: control_module_forward.1
$region0: #{control_module_forward.1}
  #allocation0 [shape = 'u32[]', space=smem, size = 0x4, offset = 0x4, fixed_abs, tag = 'smem constant byte address 0x4 - core index']
  #allocation1 [shape = 'u32[144,128]{1,0:T(1,128)}', space=vmem, size = 0x12000, scoped, tag = 'internal scratch']
  #allocation2 [shape = 'bf16[16,512]{1,0:T(8,128)(2,1)}', space=vmem, size = 0x4000, scoped, tag = 'scratch operand']
  #allocation3 [shape = 'bf16[144,384]{1,0:T(8,128)(2,1)}', space=vmem, size = 0x1b000, scoped, tag = 'scratch operand']
  #allocation4 [shape = 'bf16[48,512]{1,0:T(8,128)(2,1)}', space=vmem, size = 0xc000, scoped, tag = 'scratch operand']
  #allocation5 [shape = 'bf16[48,384]{1,0:T(8,128)(2,1)}', space=vmem, size = 0x9000, scoped, tag = 'scratch operand']
  %s0 = inlined_call_operand.vmem [shape: f32[2,16,512], index: 0, kind: input, shape index: {}]
  %s1 = inlined_call_operand.vmem [shape: f32[2,1,384], index: 1, kind: input, shape index: {}]
  %s2 = inlined_call_operand.vmem [shape: f32[1,384], index: 2, kind: input, shape index: {}]
  %s3 = inlined_call_operand.vmem [shape: bf16[2,48,144], index: 3, kind: input, shape index: {}]
  %s4 = inlined_call_operand.vmem [shape: f32[48,1], index: 4, kind: input, shape index: {}, may-alias: {4,6}]
  %s5 = inlined_call_operand.vmem [shape: bf16[2,3,16,144], index: 5, kind: input, shape index: {}]
  %s6 = inlined_call_operand.vmem [shape: f32[48,1], index: 6, kind: input, shape index: {}, may-alias: {4,6}]
  %s7 = inlined_call_operand.vmem [shape: bf16[32,48], index: 7, kind: input, shape index: {}]
  %s8 = inlined_call_operand.vmem [shape: f32[32,1], index: 8, kind: input, shape index: {}]
  %s9 = inlined_call_operand.vmem [shape: bf16[3,32], index: 9, kind: input, shape index: {}]
  %s10 = inlined_call_operand.vmem [shape: f32[3,1], index: 10, kind: input, shape index: {}]
  %s11 = inlined_call_operand.vmem [shape: f32[2,16,384], index: 11, kind: output, shape index: {}]
  %s12 = sld [smem:[#allocation0]]
  $region77: #{control_module_forward.1} parent=0
    _
  %s14 = ssub.s32 1, %s12
  %s15 = scalar_select 0, %s14, %s12
  loop: start=0, step=1, limit=4
  $region2: #{control_module_forward.1} parent=0 // loop_pre_header
    _
  $region3: #{control_module_forward.1} parent=0 // loop_header
    %s17 = sphi 0, %s21
    %p18 = scmp.ge.s32.totalorder %s17, 4
    %s27 = sphi 0, %s29
    %s30 = sphi 0, %s27
    %s31 = sphi 0, %s30
    %s47 = sphi 0, %s31
    %s53 = sphi 0, %s55
    %s56 = sphi 0, %s53
    %s57 = sphi 0, %s56
    %s73 = sphi 0, %s57
    %s77 = sphi 0, %s77
    %s79 = sphi 0, %s77
    %s80 = sphi 0, %s79
    %s94 = sphi 0, %s80
    %s100 = sphi 0, %s102
    %s103 = sphi 0, %s100
    %s104 = sphi 0, %s103
    %s120 = sphi 0, %s104
    %s124 = sphi 0, %s124
    %s126 = sphi 0, %s124
    %s127 = sphi 0, %s126
    %s141 = sphi 0, %s127
    %s147 = sphi 0, %s149
    %s150 = sphi 0, %s147
    %s151 = sphi 0, %s150
    %s167 = sphi 0, %s151
    %s171 = sphi 0, %s171
    %s173 = sphi 0, %s171
    %s174 = sphi 0, %s173
    %s188 = sphi 0, %s174
    %s192 = sphi 0, %s192
    %s194 = sphi 0, %s192
    %s195 = sphi 0, %s194
    %s209 = sphi 0, %s195
    %s213 = sphi 0, %s213
    %s215 = sphi 0, %s213
    %s216 = sphi 0, %s215
    %s230 = sphi 0, %s216
    %s234 = sphi 0, %s234
    %s236 = sphi 0, %s234
    %s237 = sphi 0, %s236
    %s251 = sphi 0, %s237
    %s255 = sphi 0, %s255
    %s257 = sphi 0, %s255
    %s258 = sphi 0, %s257
    %s272 = sphi 0, %s258
    %s278 = sphi 0, %s280
    %s281 = sphi 0, %s278
    %s282 = sphi 0, %s281
    %s298 = sphi 0, %s282
  $region4: #{control_module_forward.1} parent=0 // loop_header_branch
    %20 = sbr.rel (%p18) target = $region8
  $region5: #{control_module_forward.1} parent=0 // loop_body
    %s22 = ssub.s32 %s17, 1
    %s23 = ssub.s32 %s17, 2
    %s24 = sadd.s32 %s17, 1
    %s25 = ssub.s32 %s17, %s24
    %p26 = scmp.eq.s32.totalorder %s25, 0
    %s28 = sadd.s32 %s27, 1
    %s29 = scalar_select %p26, %s27, %s28
    %p32 = pneg %p26
    %p33 = scmp.eq.s32.totalorder %s17, 1
    %p34 = por %p32, %p33
    %p35 = scmp.ne.s32.totalorder %s27, %s30
    %p36 = scmp.eq.s32.totalorder %s17, 0
    %p37 = por %p35, %p36
    %p38 = scmp.ne.s32.totalorder %s27, %s30
    %p39 = scmp.eq.s32.totalorder %s22, 1
    %p40 = por %p38, %p39
    %p41 = scmp.ne.s32.totalorder %s30, %s31
    %p42 = scmp.eq.s32.totalorder %s22, 0
    %p43 = por %p41, %p42
    %p44 = scmp.ne.s32.totalorder %s30, %s31
    %p45 = scmp.eq.s32.totalorder %s23, 1
    %p46 = por %p44, %p45
    %p48 = scmp.ne.s32.totalorder %s31, %s47
    %p49 = scmp.eq.s32.totalorder %s23, 0
    %p50 = por %p48, %p49
    %s51 = ssub.s32 %s17, %s24
    %p52 = scmp.eq.s32.totalorder %s51, 0
    %s54 = sadd.s32 %s53, 1
    %s55 = scalar_select %p52, %s53, %s54
    %p58 = pneg %p52
    %p59 = scmp.eq.s32.totalorder %s17, 1
    %p60 = por %p58, %p59
    %p61 = scmp.ne.s32.totalorder %s53, %s56
    %p62 = scmp.eq.s32.totalorder %s17, 0
    %p63 = por %p61, %p62
    %p64 = scmp.ne.s32.totalorder %s53, %s56
    %p65 = scmp.eq.s32.totalorder %s22, 1
    %p66 = por %p64, %p65
    %p67 = scmp.ne.s32.totalorder %s56, %s57
    %p68 = scmp.eq.s32.totalorder %s22, 0
    %p69 = por %p67, %p68
    %p70 = scmp.ne.s32.totalorder %s56, %s57
    %p71 = scmp.eq.s32.totalorder %s23, 1
    %p72 = por %p70, %p71
    %p74 = scmp.ne.s32.totalorder %s57, %s73
    %p75 = scmp.eq.s32.totalorder %s23, 0
    %p76 = por %p74, %p75
    %s78 = sadd.s32 %s77, 1
    %p81 = scmp.eq.s32.totalorder %s17, 1
    %p82 = scmp.ne.s32.totalorder %s77, %s79
    %p83 = scmp.eq.s32.totalorder %s17, 0
    %p84 = por %p82, %p83
    %p85 = scmp.ne.s32.totalorder %s77, %s79
    %p86 = scmp.eq.s32.totalorder %s22, 1
    %p87 = por %p85, %p86
    %p88 = scmp.ne.s32.totalorder %s79, %s80
    %p89 = scmp.eq.s32.totalorder %s22, 0
    %p90 = por %p88, %p89
    %p91 = scmp.ne.s32.totalorder %s79, %s80
    %p92 = scmp.eq.s32.totalorder %s23, 1
    %p93 = por %p91, %p92
    %p95 = scmp.ne.s32.totalorder %s80, %s94
    %p96 = scmp.eq.s32.totalorder %s23, 0
    %p97 = por %p95, %p96
    %s98 = ssub.s32 %s17, %s24
    %p99 = scmp.eq.s32.totalorder %s98, 0
    %s101 = sadd.s32 %s100, 1
    %s102 = scalar_select %p99, %s100, %s101
    %p105 = pneg %p99
    %p106 = scmp.eq.s32.totalorder %s17, 1
    %p107 = por %p105, %p106
    %p108 = scmp.ne.s32.totalorder %s100, %s103
    %p109 = scmp.eq.s32.totalorder %s17, 0
    %p110 = por %p108, %p109
    %p111 = scmp.ne.s32.totalorder %s100, %s103
    %p112 = scmp.eq.s32.totalorder %s22, 1
    %p113 = por %p111, %p112
    %p114 = scmp.ne.s32.totalorder %s103, %s104
    %p115 = scmp.eq.s32.totalorder %s22, 0
    %p116 = por %p114, %p115
    %p117 = scmp.ne.s32.totalorder %s103, %s104
    %p118 = scmp.eq.s32.totalorder %s23, 1
    %p119 = por %p117, %p118
    %p121 = scmp.ne.s32.totalorder %s104, %s120
    %p122 = scmp.eq.s32.totalorder %s23, 0
    %p123 = por %p121, %p122
    %s125 = sadd.s32 %s124, 1
    %p128 = scmp.eq.s32.totalorder %s17, 1
    %p129 = scmp.ne.s32.totalorder %s124, %s126
    %p130 = scmp.eq.s32.totalorder %s17, 0
    %p131 = por %p129, %p130
    %p132 = scmp.ne.s32.totalorder %s124, %s126
    %p133 = scmp.eq.s32.totalorder %s22, 1
    %p134 = por %p132, %p133
    %p135 = scmp.ne.s32.totalorder %s126, %s127
    %p136 = scmp.eq.s32.totalorder %s22, 0
    %p137 = por %p135, %p136
    %p138 = scmp.ne.s32.totalorder %s126, %s127
    %p139 = scmp.eq.s32.totalorder %s23, 1
    %p140 = por %p138, %p139
    %p142 = scmp.ne.s32.totalorder %s127, %s141
    %p143 = scmp.eq.s32.totalorder %s23, 0
    %p144 = por %p142, %p143
    %s145 = ssub.s32 %s17, %s24
    %p146 = scmp.eq.s32.totalorder %s145, 0
    %s148 = sadd.s32 %s147, 1
    %s149 = scalar_select %p146, %s147, %s148
    %p152 = pneg %p146
    %p153 = scmp.eq.s32.totalorder %s17, 1
    %p154 = por %p152, %p153
    %p155 = scmp.ne.s32.totalorder %s147, %s150
    %p156 = scmp.eq.s32.totalorder %s17, 0
    %p157 = por %p155, %p156
    %p158 = scmp.ne.s32.totalorder %s147, %s150
    %p159 = scmp.eq.s32.totalorder %s22, 1
    %p160 = por %p158, %p159
    %p161 = scmp.ne.s32.totalorder %s150, %s151
    %p162 = scmp.eq.s32.totalorder %s22, 0
    %p163 = por %p161, %p162
    %p164 = scmp.ne.s32.totalorder %s150, %s151
    %p165 = scmp.eq.s32.totalorder %s23, 1
    %p166 = por %p164, %p165
    %p168 = scmp.ne.s32.totalorder %s151, %s167
    %p169 = scmp.eq.s32.totalorder %s23, 0
    %p170 = por %p168, %p169
    %s172 = sadd.s32 %s171, 1
    %p175 = scmp.eq.s32.totalorder %s17, 1
    %p176 = scmp.ne.s32.totalorder %s171, %s173
    %p177 = scmp.eq.s32.totalorder %s17, 0
    %p178 = por %p176, %p177
    %p179 = scmp.ne.s32.totalorder %s171, %s173
    %p180 = scmp.eq.s32.totalorder %s22, 1
    %p181 = por %p179, %p180
    %p182 = scmp.ne.s32.totalorder %s173, %s174
    %p183 = scmp.eq.s32.totalorder %s22, 0
    %p184 = por %p182, %p183
    %p185 = scmp.ne.s32.totalorder %s173, %s174
    %p186 = scmp.eq.s32.totalorder %s23, 1
    %p187 = por %p185, %p186
    %p189 = scmp.ne.s32.totalorder %s174, %s188
    %p190 = scmp.eq.s32.totalorder %s23, 0
    %p191 = por %p189, %p190
    %s193 = sadd.s32 %s192, 1
    %p196 = scmp.eq.s32.totalorder %s17, 1
    %p197 = scmp.ne.s32.totalorder %s192, %s194
    %p198 = scmp.eq.s32.totalorder %s17, 0
    %p199 = por %p197, %p198
    %p200 = scmp.ne.s32.totalorder %s192, %s194
    %p201 = scmp.eq.s32.totalorder %s22, 1
    %p202 = por %p200, %p201
    %p203 = scmp.ne.s32.totalorder %s194, %s195
    %p204 = scmp.eq.s32.totalorder %s22, 0
    %p205 = por %p203, %p204
    %p206 = scmp.ne.s32.totalorder %s194, %s195
    %p207 = scmp.eq.s32.totalorder %s23, 1
    %p208 = por %p206, %p207
    %p210 = scmp.ne.s32.totalorder %s195, %s209
    %p211 = scmp.eq.s32.totalorder %s23, 0
    %p212 = por %p210, %p211
    %s214 = sadd.s32 %s213, 1
    %p217 = scmp.eq.s32.totalorder %s17, 1
    %p218 = scmp.ne.s32.totalorder %s213, %s215
    %p219 = scmp.eq.s32.totalorder %s17, 0
    %p220 = por %p218, %p219
    %p221 = scmp.ne.s32.totalorder %s213, %s215
    %p222 = scmp.eq.s32.totalorder %s22, 1
    %p223 = por %p221, %p222
    %p224 = scmp.ne.s32.totalorder %s215, %s216
    %p225 = scmp.eq.s32.totalorder %s22, 0
    %p226 = por %p224, %p225
    %p227 = scmp.ne.s32.totalorder %s215, %s216
    %p228 = scmp.eq.s32.totalorder %s23, 1
    %p229 = por %p227, %p228
    %p231 = scmp.ne.s32.totalorder %s216, %s230
    %p232 = scmp.eq.s32.totalorder %s23, 0
    %p233 = por %p231, %p232
    %s235 = sadd.s32 %s234, 1
    %p238 = scmp.eq.s32.totalorder %s17, 1
    %p239 = scmp.ne.s32.totalorder %s234, %s236
    %p240 = scmp.eq.s32.totalorder %s17, 0
    %p241 = por %p239, %p240
    %p242 = scmp.ne.s32.totalorder %s234, %s236
    %p243 = scmp.eq.s32.totalorder %s22, 1
    %p244 = por %p242, %p243
    %p245 = scmp.ne.s32.totalorder %s236, %s237
    %p246 = scmp.eq.s32.totalorder %s22, 0
    %p247 = por %p245, %p246
    %p248 = scmp.ne.s32.totalorder %s236, %s237
    %p249 = scmp.eq.s32.totalorder %s23, 1
    %p250 = por %p248, %p249
    %p252 = scmp.ne.s32.totalorder %s237, %s251
    %p253 = scmp.eq.s32.totalorder %s23, 0
    %p254 = por %p252, %p253
    %s256 = sadd.s32 %s255, 1
    %p259 = scmp.eq.s32.totalorder %s17, 1
    %p260 = scmp.ne.s32.totalorder %s255, %s257
    %p261 = scmp.eq.s32.totalorder %s17, 0
    %p262 = por %p260, %p261
    %p263 = scmp.ne.s32.totalorder %s255, %s257
    %p264 = scmp.eq.s32.totalorder %s22, 1
    %p265 = por %p263, %p264
    %p266 = scmp.ne.s32.totalorder %s257, %s258
    %p267 = scmp.eq.s32.totalorder %s22, 0
    %p268 = por %p266, %p267
    %p269 = scmp.ne.s32.totalorder %s257, %s258
    %p270 = scmp.eq.s32.totalorder %s23, 1
    %p271 = por %p269, %p270
    %p273 = scmp.ne.s32.totalorder %s258, %s272
    %p274 = scmp.eq.s32.totalorder %s23, 0
    %p275 = por %p273, %p274
    %s276 = ssub.s32 %s17, %s24
    %p277 = scmp.eq.s32.totalorder %s276, 0
    %s279 = sadd.s32 %s278, 1
    %s280 = scalar_select %p277, %s278, %s279
    %p283 = pneg %p277
    %p284 = scmp.eq.s32.totalorder %s17, 1
    %p285 = por %p283, %p284
    %p286 = scmp.ne.s32.totalorder %s278, %s281
    %p287 = scmp.eq.s32.totalorder %s17, 0
    %p288 = por %p286, %p287
    %p289 = scmp.ne.s32.totalorder %s278, %s281
    %p290 = scmp.eq.s32.totalorder %s22, 1
    %p291 = por %p289, %p290
    %p292 = scmp.ne.s32.totalorder %s281, %s282
    %p293 = scmp.eq.s32.totalorder %s22, 0
    %p294 = por %p292, %p293
    %p295 = scmp.ne.s32.totalorder %s281, %s282
    %p296 = scmp.eq.s32.totalorder %s23, 1
    %p297 = por %p295, %p296
    %p299 = scmp.ne.s32.totalorder %s282, %s298
    %p300 = scmp.eq.s32.totalorder %s23, 0
    %p301 = por %p299, %p300
    %p302 = scmp.le.s32.totalorder 1, %s17
    %p303 = scmp.lt.s32.totalorder %s17, 3
    %p304 = pnand %p302, %p303
    %p305 = pneg %p304
    // Predicated region
    $region9: #{control_module_forward.1} parent=5 // pred_check
      _
    $region10: #{control_module_forward.1} parent=5 // pred_check_branch
      %307 = sbr.rel (%p304) target = $region12
    $region11: #{control_module_forward.1} parent=5 // pred_region
      %s308 = ssub.s32 %s17, 1
      // Predicated region
      $region13: #{control_module_forward.1} parent=11 // pred_check
        %p309 = pneg %p90
      $region14: #{control_module_forward.1} parent=11 // pred_check_branch
        %311 = sbr.rel (%p309) target = $region16
      $region15: #{control_module_forward.1} parent=11 // pred_region
        _
      $region16: #{control_module_forward.1} parent=11 // pred_fallthru
        _
      // Predicated region
      $region17: #{control_module_forward.1} parent=11 // pred_check
        %p312 = pneg %p137
      $region18: #{control_module_forward.1} parent=11 // pred_check_branch
        %314 = sbr.rel (%p312) target = $region20
      $region19: #{control_module_forward.1} parent=11 // pred_region
        _
      $region20: #{control_module_forward.1} parent=11 // pred_fallthru
        _
      // Predicated region
      $region21: #{control_module_forward.1} parent=11 // pred_check
        %p315 = pneg %p184
      $region22: #{control_module_forward.1} parent=11 // pred_check_branch
        %317 = sbr.rel (%p315) target = $region24
      $region23: #{control_module_forward.1} parent=11 // pred_region
        _
      $region24: #{control_module_forward.1} parent=11 // pred_fallthru
        _
      // Predicated region
      $region25: #{control_module_forward.1} parent=11 // pred_check
        %p318 = pneg %p205
      $region26: #{control_module_forward.1} parent=11 // pred_check_branch
        %320 = sbr.rel (%p318) target = $region28
      $region27: #{control_module_forward.1} parent=11 // pred_region
        _
      $region28: #{control_module_forward.1} parent=11 // pred_fallthru
        _
      // Predicated region
      $region29: #{control_module_forward.1} parent=11 // pred_check
        %p321 = pneg %p226
      $region30: #{control_module_forward.1} parent=11 // pred_check_branch
        %323 = sbr.rel (%p321) target = $region32
      $region31: #{control_module_forward.1} parent=11 // pred_region
        _
      $region32: #{control_module_forward.1} parent=11 // pred_fallthru
        _
      // Predicated region
      $region33: #{control_module_forward.1} parent=11 // pred_check
        %p324 = pneg %p247
      $region34: #{control_module_forward.1} parent=11 // pred_check_branch
        %326 = sbr.rel (%p324) target = $region36
      $region35: #{control_module_forward.1} parent=11 // pred_region
        _
      $region36: #{control_module_forward.1} parent=11 // pred_fallthru
        _
      // Predicated region
      $region37: #{control_module_forward.1} parent=11 // pred_check
        %p327 = pneg %p268
      $region38: #{control_module_forward.1} parent=11 // pred_check_branch
        %329 = sbr.rel (%p327) target = $region40
      $region39: #{control_module_forward.1} parent=11 // pred_region
        _
      $region40: #{control_module_forward.1} parent=11 // pred_fallthru
        _
    $region12: #{control_module_forward.1} parent=5 // pred_fallthru
      _
    %p330 = scmp.lt.s32.totalorder %s17, 2
    // Predicated region
    $region41: #{control_module_forward.1} parent=5 // pred_check
      %p331 = pneg %p330
    $region42: #{control_module_forward.1} parent=5 // pred_check_branch
      %333 = sbr.rel (%p331) target = $region44
    $region43: #{control_module_forward.1} parent=5 // pred_region
      // Predicated region
      $region45: #{control_module_forward.1} parent=43 // pred_check
        %p334 = pneg %p37
      $region46: #{control_module_forward.1} parent=43 // pred_check_branch
        %336 = sbr.rel (%p334) target = $region48
      $region47: #{control_module_forward.1} parent=43 // pred_region
        %p337 = scmp.lt.s32.totalorder %s17, 1
        %s338 = scalar_select %p337, %s17, 1
        %s339 = smul.addr %s338, 8
        %s340 = smul.addr %s339, 8
        %s341 = scalar_lea.vmem %s0, %s340
      $region48: #{control_module_forward.1} parent=43 // pred_fallthru
        _
      // Predicated region
      $region49: #{control_module_forward.1} parent=43 // pred_check
        %p342 = pneg %p63
      $region50: #{control_module_forward.1} parent=43 // pred_check_branch
        %344 = sbr.rel (%p342) target = $region52
      $region51: #{control_module_forward.1} parent=43 // pred_region
        %p345 = scmp.lt.s32.totalorder %s17, 1
        %s346 = scalar_select %p345, %s17, 1
        %s347 = smul.addr %s346, 3
        %s348 = scalar_lea.vmem %s1, %s347
      $region52: #{control_module_forward.1} parent=43 // pred_fallthru
        _
      // Predicated region
      $region53: #{control_module_forward.1} parent=43 // pred_check
        %p349 = pneg %p110
      $region54: #{control_module_forward.1} parent=43 // pred_check_branch
        %351 = sbr.rel (%p349) target = $region56
      $region55: #{control_module_forward.1} parent=43 // pred_region
        %p352 = scmp.lt.s32.totalorder %s17, 1
        %s353 = scalar_select %p352, %s17, 1
        %s354 = smul.addr %s353, 12
        %s355 = smul.addr %s354, 4
        %s356 = scalar_lea.vmem %s3, %s355
      $region56: #{control_module_forward.1} parent=43 // pred_fallthru
        _
      // Predicated region
      $region57: #{control_module_forward.1} parent=43 // pred_check
        %p357 = pneg %p157
      $region58: #{control_module_forward.1} parent=43 // pred_check_branch
        %359 = sbr.rel (%p357) target = $region60
      $region59: #{control_module_forward.1} parent=43 // pred_region
        %p360 = scmp.lt.s32.totalorder %s17, 1
        %s361 = scalar_select %p360, %s17, 1
        %s362 = smul.addr %s361, 12
        %s363 = smul.addr %s362, 4
        %s364 = scalar_lea.vmem %s5, %s363
      $region60: #{control_module_forward.1} parent=43 // pred_fallthru
        _
    $region44: #{control_module_forward.1} parent=5 // pred_fallthru
      _
    %p365 = scmp.le.s32.totalorder 1, %s17
    %p366 = scmp.lt.s32.totalorder %s17, 3
    %p367 = pnand %p365, %p366
    %p368 = pneg %p367
    // Predicated region
    $region61: #{control_module_forward.1} parent=5 // pred_check
      _
    $region62: #{control_module_forward.1} parent=5 // pred_check_branch
      %370 = sbr.rel (%p367) target = $region64
    $region63: #{control_module_forward.1} parent=5 // pred_region
      %s371 = ssub.s32 %s17, 1
      %p372 = scmp.lt.s32.totalorder %s22, 1
      %s373 = scalar_select %p372, %s22, 1
      %s374 = smul.addr %s373, 8
      %s375 = smul.addr %s374, 8
      %s376 = scalar_lea.vmem %s0, %s375
      %p377 = pneg %p43
      %p378 = pneg %p40
      %p379 = scmp.lt.s32.totalorder %s22, 1
      %s380 = scalar_select %p379, %s22, 1
      %s381 = smul.addr %s380, 3
      %s382 = scalar_lea.vmem %s1, %s381
      %p383 = pneg %p69
      %p384 = pneg %p66
      %p385 = pneg %p90
      %p386 = pneg %p87
      %p387 = scmp.lt.s32.totalorder %s22, 1
      %s388 = scalar_select %p387, %s22, 1
      %s389 = smul.addr %s388, 12
      %s390 = smul.addr %s389, 4
      %s391 = scalar_lea.vmem %s3, %s390
      %p392 = pneg %p116
      %p393 = pneg %p113
      %p394 = pneg %p137
      %p395 = pneg %p134
      %p396 = scmp.lt.s32.totalorder %s22, 1
      %s397 = scalar_select %p396, %s22, 1
      %s398 = smul.addr %s397, 12
      %s399 = smul.addr %s398, 4
      %s400 = scalar_lea.vmem %s5, %s399
      %p401 = pneg %p163
      %p402 = pneg %p160
      %p403 = pneg %p184
      %p404 = pneg %p181
      %p405 = pneg %p205
      %p406 = pneg %p202
      %p407 = pneg %p226
      %p408 = pneg %p223
      %p409 = pneg %p247
      %p410 = pneg %p244
      %p411 = pneg %p268
      %p412 = pneg %p265
      %p413 = pneg %p294
      %p414 = pneg %p291
      %p415 = scmp.lt.s32.totalorder %s22, 1
      %s416 = scalar_select %p415, %s22, 1
      %s417 = smul.addr %s416, 6
      %s418 = smul.addr %s417, 8
      %s419 = scalar_lea.vmem %s11, %s418
      %p420 = scmp.lt.s32.totalorder %s22, 1
      %s421 = scalar_select %p420, %s22, 1
      %s422 = smul.addr %s421, 8
      %s423 = smul.addr %s422, 8
      %s424 = scalar_lea.vmem %s0, %s423
      %p425 = scmp.lt.s32.totalorder %s22, 1
      %s426 = scalar_select %p425, %s22, 1
      %s427 = smul.addr %s426, 3
      %s428 = scalar_lea.vmem %s1, %s427
      %p429 = scmp.lt.s32.totalorder %s22, 1
      %s430 = scalar_select %p429, %s22, 1
      %s431 = smul.addr %s430, 12
      %s432 = smul.addr %s431, 4
      %s433 = scalar_lea.vmem %s3, %s432
      %p434 = scmp.lt.s32.totalorder %s22, 1
      %s435 = scalar_select %p434, %s22, 1
      %s436 = smul.addr %s435, 12
      %s437 = smul.addr %s436, 4
      %s438 = scalar_lea.vmem %s5, %s437
      %p439 = scmp.lt.s32.totalorder %s22, 1
      %s440 = scalar_select %p439, %s22, 1
      %s441 = smul.addr %s440, 6
      %s442 = smul.addr %s441, 8
      %s443 = scalar_lea.vmem %s11, %s442
      %v445 = vld [vmem:[%s2] sm:$0x7]
      %v446 = vld [vmem:[%s424] sm:$0xff]
      %v447 = vld [vmem:[%s424 + $0x8] sm:$0xff]
      %v448 = vld [vmem:[%s424 + $0x10] sm:$0xff]
      %v449 = vld [vmem:[%s424 + $0x18] sm:$0xff]
      %v450 = vld [vmem:[%s424 + $0x20] sm:$0xff]
      %v451 = vld [vmem:[%s424 + $0x28] sm:$0xff]
      %v452 = vld [vmem:[%s424 + $0x30] sm:$0xff]
      %v453 = vld [vmem:[%s424 + $0x38] sm:$0xff]
      %v454 = vpack.c.bf16 %v450, %v446
      %v455 = vpack.c.bf16 %v451, %v447
      %v456 = vpack.c.bf16 %v452, %v448
      %v457 = vpack.c.bf16 %v453, %v449
      %v462 = vunpack.c.l.b16 %v454
      %v463 = vunpack.c.l.b16 %v455
      %v464 = vunpack.c.l.b16 %v456
      %v465 = vunpack.c.l.b16 %v457
      %v466 = vunpack.c.h.b16 %v454
      %v467 = vunpack.c.h.b16 %v455
      %v468 = vunpack.c.h.b16 %v456
      %v469 = vunpack.c.h.b16 %v457
      %v470 = vpack.c.b16 %v463, %v462
      %v471 = vpack.c.b16 %v465, %v464
      %v472 = vpack.c.b16 %v467, %v466
      %v473 = vpack.c.b16 %v469, %v468
      %478 = vst [vmem:[#allocation2] sm:$0xff] %v470
      %479 = vst [vmem:[#allocation2 + $0x8] sm:$0xff] %v471
      %480 = vst [vmem:[#allocation2 + $0x10] sm:$0xff] %v472
      %481 = vst [vmem:[#allocation2 + $0x18] sm:$0xff] %v473
      %482 = vst [vmem:[#allocation4] sm:$0xff] 0
      %483 = vst [vmem:[#allocation4 + $0x8] sm:$0xff] 0
      %484 = vst [vmem:[#allocation4 + $0x10] sm:$0xff] 0
      %485 = vst [vmem:[#allocation4 + $0x18] sm:$0xff] 0
      %486 = vst [vmem:[#allocation4 + $0x20] sm:$0xff] 0
      %487 = vst [vmem:[#allocation4 + $0x28] sm:$0xff] 0
      %488 = vst [vmem:[#allocation4 + $0x30] sm:$0xff] 0
      %489 = vst [vmem:[#allocation4 + $0x38] sm:$0xff] 0
      %490 = vst [vmem:[#allocation4 + $0x40] sm:$0xff] 0
      %491 = vst [vmem:[#allocation4 + $0x48] sm:$0xff] 0
      %492 = vst [vmem:[#allocation4 + $0x50] sm:$0xff] 0
      %493 = vst [vmem:[#allocation4 + $0x58] sm:$0xff] 0
      %v494 = vld [vmem:[#allocation2] sm:$0xff]
      %v495 = vld [vmem:[#allocation2 + $0x8] sm:$0xf]
      %v496 = vld [vmem:[#allocation2 + $0x10] sm:$0xff]
      %v497 = vld [vmem:[#allocation2 + $0x18] sm:$0xf]
      %498 = vst [vmem:[#allocation3] sm:$0xff] %v494
      %499 = vst [vmem:[#allocation3 + $0x8] sm:$0xf] %v495
      %500 = vst [vmem:[#allocation3 + $0xc] sm:$0xff] %v496
      %501 = vst [vmem:[#allocation3 + $0x14] sm:$0xf] %v497
      %v502 = vld [vmem:[#allocation2] sm:$0xff]
      %v503 = vld [vmem:[#allocation2 + $0x8] sm:$0xff]
      %v504 = vld [vmem:[#allocation2 + $0x10] sm:$0xff]
      %v505 = vld [vmem:[#allocation2 + $0x18] sm:$0xff]
      %510 = vrot.lane.b32.xlu0 %v502, 127
      %v511 = vpop.permute.xlu0 %510
      %512 = vrot.lane.b32.xlu0 %v503, 127
      %v513 = vpop.permute.xlu0 %512
      %514 = vrot.lane.b32.xlu0 %v504, 127
      %v515 = vpop.permute.xlu0 %514
      %516 = vrot.lane.b32.xlu0 %v505, 127
      %v517 = vpop.permute.xlu0 %516
      %v518 = vrot.slane %v511, 4
      %v519 = vrot.slane %v513, 4
      %v520 = vrot.slane %v515, 4
      %v521 = vrot.slane %v517, 4
      %vm522 = vcmask 1043456
      %v523 = vsel %vm522, %v518, %v519
      %vm524 = vcmask 1039360
      %v525 = vsel %vm524, %v511, %v523
      %v526 = vsel %vm524, %v513, %v519
      %v527 = vsel %vm522, %v520, %v521
      %v528 = vsel %vm524, %v515, %v527
      %v529 = vsel %vm524, %v517, %v521
      %534 = vst [vmem:[#allocation3 + $0x18] sm:$0xff] %v525
      %535 = vst [vmem:[#allocation3 + $0x20] sm:$0xf] %v526
      %536 = vst [vmem:[#allocation3 + $0x24] sm:$0xff] %v528
      %537 = vst [vmem:[#allocation3 + $0x2c] sm:$0xf] %v529
      %v538 = vld [vmem:[#allocation2] sm:$0xff]
      %v539 = vld [vmem:[#allocation2 + $0x8] sm:$0xff]
      %v540 = vld [vmem:[#allocation2 + $0x10] sm:$0xff]
      %v541 = vld [vmem:[#allocation2 + $0x18] sm:$0xff]
      %546 = vrot.lane.b32.xlu0 %v538, 126
      %v547 = vpop.permute.xlu0 %546
      %548 = vrot.lane.b32.xlu0 %v539, 126
      %v549 = vpop.permute.xlu0 %548
      %550 = vrot.lane.b32.xlu0 %v540, 126
      %v551 = vpop.permute.xlu0 %550
      %552 = vrot.lane.b32.xlu0 %v541, 126
      %v553 = vpop.permute.xlu0 %552
      %v554 = vrot.slane %v547, 4
      %v555 = vrot.slane %v549, 4
      %v556 = vrot.slane %v551, 4
      %v557 = vrot.slane %v553, 4
      %v558 = vsel %vm522, %v554, %v555
      %vm559 = vcmask 1031168
      %v560 = vsel %vm559, %v547, %v558
      %v561 = vsel %vm559, %v549, %v555
      %v562 = vsel %vm522, %v556, %v557
      %v563 = vsel %vm559, %v551, %v562
      %v564 = vsel %vm559, %v553, %v557
      %569 = vst [vmem:[#allocation3 + $0x30] sm:$0xff] %v560
      %570 = vst [vmem:[#allocation3 + $0x38] sm:$0xf] %v561
      %571 = vst [vmem:[#allocation3 + $0x3c] sm:$0xff] %v563
      %572 = vst [vmem:[#allocation3 + $0x44] sm:$0xf] %v564
      %v573 = vld [vmem:[#allocation2] sm:$0xff]
      %v574 = vld [vmem:[#allocation2 + $0x8] sm:$0xff]
      %v575 = vld [vmem:[#allocation2 + $0x10] sm:$0xff]
      %v576 = vld [vmem:[#allocation2 + $0x18] sm:$0xff]
      %581 = vrot.lane.b32.xlu0 %v573, 110
      %v582 = vpop.permute.xlu0 %581
      %583 = vrot.lane.b32.xlu0 %v574, 110
      %v584 = vpop.permute.xlu0 %583
      %585 = vrot.lane.b32.xlu0 %v575, 110
      %v586 = vpop.permute.xlu0 %585
      %587 = vrot.lane.b32.xlu0 %v576, 110
      %v588 = vpop.permute.xlu0 %587
      %v589 = vrot.slane %v582, 4
      %v590 = vrot.slane %v584, 4
      %v591 = vrot.slane %v586, 4
      %v592 = vrot.slane %v588, 4
      %v593 = vsel %vm522, %v589, %v590
      %vm594 = vcmask 900096
      %v595 = vsel %vm594, %v582, %v593
      %v596 = vsel %vm594, %v584, %v590
      %v597 = vsel %vm522, %v591, %v592
      %v598 = vsel %vm594, %v586, %v597
      %v599 = vsel %vm594, %v588, %v592
      %604 = vst [vmem:[#allocation3 + $0x48] sm:$0xff] %v595
      %605 = vst [vmem:[#allocation3 + $0x50] sm:$0xf] %v596
      %606 = vst [vmem:[#allocation3 + $0x54] sm:$0xff] %v598
      %607 = vst [vmem:[#allocation3 + $0x5c] sm:$0xf] %v599
      %v608 = vld [vmem:[#allocation2] sm:$0xff]
      %v609 = vld [vmem:[#allocation2 + $0x8] sm:$0xff]
      %v610 = vld [vmem:[#allocation2 + $0x10] sm:$0xff]
      %v611 = vld [vmem:[#allocation2 + $0x18] sm:$0xff]
      %616 = vrot.lane.b32.xlu0 %v608, 109
      %v617 = vpop.permute.xlu0 %616
      %618 = vrot.lane.b32.xlu0 %v609, 109
      %v619 = vpop.permute.xlu0 %618
      %620 = vrot.lane.b32.xlu0 %v610, 109
      %v621 = vpop.permute.xlu0 %620
      %622 = vrot.lane.b32.xlu0 %v611, 109
      %v623 = vpop.permute.xlu0 %622
      %v624 = vrot.slane %v617, 4
      %v625 = vrot.slane %v619, 4
      %v626 = vrot.slane %v621, 4
      %v627 = vrot.slane %v623, 4
      %v628 = vsel %vm522, %v624, %v625
      %vm629 = vcmask 891904
      %v630 = vsel %vm629, %v617, %v628
      %v631 = vsel %vm629, %v619, %v625
      %v632 = vsel %vm522, %v626, %v627
      %v633 = vsel %vm629, %v621, %v632
      %v634 = vsel %vm629, %v623, %v627
      %639 = vst [vmem:[#allocation3 + $0x60] sm:$0xff] %v630
      %640 = vst [vmem:[#allocation3 + $0x68] sm:$0xf] %v631
      %641 = vst [vmem:[#allocation3 + $0x6c] sm:$0xff] %v633
      %642 = vst [vmem:[#allocation3 + $0x74] sm:$0xf] %v634
      %v643 = vld [vmem:[#allocation2] sm:$0xff]
      %v644 = vld [vmem:[#allocation2 + $0x8] sm:$0xff]
      %v645 = vld [vmem:[#allocation2 + $0x10] sm:$0xff]
      %v646 = vld [vmem:[#allocation2 + $0x18] sm:$0xff]
      %651 = vrot.lane.b32.xlu0 %v643, 108
      %v652 = vpop.permute.xlu0 %651
      %653 = vrot.lane.b32.xlu0 %v644, 108
      %v654 = vpop.permute.xlu0 %653
      %655 = vrot.lane.b32.xlu0 %v645, 108
      %v656 = vpop.permute.xlu0 %655
      %657 = vrot.lane.b32.xlu0 %v646, 108
      %v658 = vpop.permute.xlu0 %657
      %v659 = vrot.slane %v652, 4
      %v660 = vrot.slane %v654, 4
      %v661 = vrot.slane %v656, 4
      %v662 = vrot.slane %v658, 4
      %v663 = vsel %vm522, %v659, %v660
      %vm664 = vcmask 883712
      %v665 = vsel %vm664, %v652, %v663
      %v666 = vsel %vm664, %v654, %v660
      %v667 = vsel %vm522, %v661, %v662
      %v668 = vsel %vm664, %v656, %v667
      %v669 = vsel %vm664, %v658, %v662
      %674 = vst [vmem:[#allocation3 + $0x78] sm:$0xff] %v665
      %675 = vst [vmem:[#allocation3 + $0x80] sm:$0xf] %v666
      %676 = vst [vmem:[#allocation3 + $0x84] sm:$0xff] %v668
      %677 = vst [vmem:[#allocation3 + $0x8c] sm:$0xf] %v669
      %v678 = vld [vmem:[#allocation2] sm:$0xff]
      %v679 = vld [vmem:[#allocation2 + $0x8] sm:$0xff]
      %v680 = vld [vmem:[#allocation2 + $0x10] sm:$0xff]
      %v681 = vld [vmem:[#allocation2 + $0x18] sm:$0xff]
      %686 = vrot.lane.b32.xlu0 %v678, 92
      %v687 = vpop.permute.xlu0 %686
      %688 = vrot.lane.b32.xlu0 %v679, 92
      %v689 = vpop.permute.xlu0 %688
      %690 = vrot.lane.b32.xlu0 %v680, 92
      %v691 = vpop.permute.xlu0 %690
      %692 = vrot.lane.b32.xlu0 %v681, 92
      %v693 = vpop.permute.xlu0 %692
      %v694 = vrot.slane %v687, 4
      %v695 = vrot.slane %v689, 4
      %v696 = vrot.slane %v691, 4
      %v697 = vrot.slane %v693, 4
      %v698 = vsel %vm522, %v694, %v695
      %vm699 = vcmask 752640
      %v700 = vsel %vm699, %v687, %v698
      %v701 = vsel %vm699, %v689, %v695
      %v702 = vsel %vm522, %v696, %v697
      %v703 = vsel %vm699, %v691, %v702
      %v704 = vsel %vm699, %v693, %v697
      %709 = vst [vmem:[#allocation3 + $0x90] sm:$0xff] %v700
      %710 = vst [vmem:[#allocation3 + $0x98] sm:$0xf] %v701
      %711 = vst [vmem:[#allocation3 + $0x9c] sm:$0xff] %v703
      %712 = vst [vmem:[#allocation3 + $0xa4] sm:$0xf] %v704
      %v713 = vld [vmem:[#allocation2] sm:$0xff]
      %v714 = vld [vmem:[#allocation2 + $0x8] sm:$0xff]
      %v715 = vld [vmem:[#allocation2 + $0x10] sm:$0xff]
      %v716 = vld [vmem:[#allocation2 + $0x18] sm:$0xff]
      %721 = vrot.lane.b32.xlu0 %v713, 91
      %v722 = vpop.permute.xlu0 %721
      %723 = vrot.lane.b32.xlu0 %v714, 91
      %v724 = vpop.permute.xlu0 %723
      %725 = vrot.lane.b32.xlu0 %v715, 91
      %v726 = vpop.permute.xlu0 %725
      %727 = vrot.lane.b32.xlu0 %v716, 91
      %v728 = vpop.permute.xlu0 %727
      %v729 = vrot.slane %v722, 4
      %v730 = vrot.slane %v724, 4
      %v731 = vrot.slane %v726, 4
      %v732 = vrot.slane %v728, 4
      %v733 = vsel %vm522, %v729, %v730
      %vm734 = vcmask 744448
      %v735 = vsel %vm734, %v722, %v733
      %v736 = vsel %vm734, %v724, %v730
      %v737 = vsel %vm522, %v731, %v732
      %v738 = vsel %vm734, %v726, %v737
      %v739 = vsel %vm734, %v728, %v732
      %744 = vst [vmem:[#allocation3 + $0xa8] sm:$0xff] %v735
      %745 = vst [vmem:[#allocation3 + $0xb0] sm:$0xf] %v736
      %746 = vst [vmem:[#allocation3 + $0xb4] sm:$0xff] %v738
      %747 = vst [vmem:[#allocation3 + $0xbc] sm:$0xf] %v739
      %v748 = vld [vmem:[#allocation2] sm:$0xff]
      %v749 = vld [vmem:[#allocation2 + $0x8] sm:$0xff]
      %v750 = vld [vmem:[#allocation2 + $0x10] sm:$0xff]
      %v751 = vld [vmem:[#allocation2 + $0x18] sm:$0xff]
      %756 = vrot.lane.b32.xlu0 %v748, 90
      %v757 = vpop.permute.xlu0 %756
      %758 = vrot.lane.b32.xlu0 %v749, 90
      %v759 = vpop.permute.xlu0 %758
      %760 = vrot.lane.b32.xlu0 %v750, 90
      %v761 = vpop.permute.xlu0 %760
      %762 = vrot.lane.b32.xlu0 %v751, 90
      %v763 = vpop.permute.xlu0 %762
      %v764 = vrot.slane %v757, 4
      %v765 = vrot.slane %v759, 4
      %v766 = vrot.slane %v761, 4
      %v767 = vrot.slane %v763, 4
      %v768 = vsel %vm522, %v764, %v765
      %vm769 = vcmask 736256
      %v770 = vsel %vm769, %v757, %v768
      %v771 = vsel %vm769, %v759, %v765
      %v772 = vsel %vm522, %v766, %v767
      %v773 = vsel %vm769, %v761, %v772
      %v774 = vsel %vm769, %v763, %v767
      %779 = vst [vmem:[#allocation3 + $0xc0] sm:$0xff] %v770
      %780 = vst [vmem:[#allocation3 + $0xc8] sm:$0xf] %v771
      %781 = vst [vmem:[#allocation3 + $0xcc] sm:$0xff] %v773
      %782 = vst [vmem:[#allocation3 + $0xd4] sm:$0xf] %v774
      %v783 = vld [vmem:[%s433] sm:$0xff]
      %v784 = vld [vmem:[%s433 + $0x8] sm:$0xff]
      %v785 = vld [vmem:[%s433 + $0x10] sm:$0xff]
      %v786 = vld [vmem:[%s433 + $0x18] sm:$0xff]
      %v787 = vld [vmem:[%s433 + $0x20] sm:$0xff]
      %v788 = vld [vmem:[%s433 + $0x28] sm:$0xff]
      %v789 = vld [vmem:[#allocation3] sm:$0xff]
      %v790 = vld [vmem:[#allocation3 + $0x8] sm:$0xf]
      %v791 = vld [vmem:[#allocation3 + $0xc] sm:$0xff]
      %v792 = vld [vmem:[#allocation3 + $0x14] sm:$0xf]
      %v793 = vld [vmem:[#allocation3 + $0x18] sm:$0xff]
      %v794 = vld [vmem:[#allocation3 + $0x20] sm:$0xf]
      %v795 = vld [vmem:[#allocation3 + $0x24] sm:$0xff]
      %v796 = vld [vmem:[#allocation3 + $0x2c] sm:$0xf]
      %v797 = vld [vmem:[#allocation3 + $0x30] sm:$0xff]
      %v798 = vld [vmem:[#allocation3 + $0x38] sm:$0xf]
      %v799 = vld [vmem:[#allocation3 + $0x3c] sm:$0xff]
      %v800 = vld [vmem:[#allocation3 + $0x44] sm:$0xf]
      %v801 = vld [vmem:[#allocation3 + $0x48] sm:$0xff]
      %v802 = vld [vmem:[#allocation3 + $0x50] sm:$0xf]
      %v803 = vld [vmem:[#allocation3 + $0x54] sm:$0xff]
      %v804 = vld [vmem:[#allocation3 + $0x5c] sm:$0xf]
      %v805 = vld [vmem:[#allocation3 + $0x60] sm:$0xff]
      %v806 = vld [vmem:[#allocation3 + $0x68] sm:$0xf]
      %v807 = vld [vmem:[#allocation3 + $0x6c] sm:$0xff]
      %v808 = vld [vmem:[#allocation3 + $0x74] sm:$0xf]
      %v809 = vld [vmem:[#allocation3 + $0x78] sm:$0xff]
      %v810 = vld [vmem:[#allocation3 + $0x80] sm:$0xf]
      %v811 = vld [vmem:[#allocation3 + $0x84] sm:$0xff]
      %v812 = vld [vmem:[#allocation3 + $0x8c] sm:$0xf]
      %v813 = vld [vmem:[#allocation3 + $0x90] sm:$0xff]
      %v814 = vld [vmem:[#allocation3 + $0x98] sm:$0xf]
      %v815 = vld [vmem:[#allocation3 + $0x9c] sm:$0xff]
      %v816 = vld [vmem:[#allocation3 + $0xa4] sm:$0xf]
      %v817 = vld [vmem:[#allocation3 + $0xa8] sm:$0xff]
      %v818 = vld [vmem:[#allocation3 + $0xb0] sm:$0xf]
      %v819 = vld [vmem:[#allocation3 + $0xb4] sm:$0xff]
      %v820 = vld [vmem:[#allocation3 + $0xbc] sm:$0xf]
      %v821 = vld [vmem:[#allocation3 + $0xc0] sm:$0xff]
      %v822 = vld [vmem:[#allocation3 + $0xc8] sm:$0xf]
      %v823 = vld [vmem:[#allocation3 + $0xcc] sm:$0xff]
      %v824 = vld [vmem:[#allocation3 + $0xd4] sm:$0xf]
      %v825 = vld [vmem:[%s4] sm:$0xff]
      %v826 = vld [vmem:[%s4 + $0x8] sm:$0xff]
      %v827 = vld [vmem:[%s4 + $0x10] sm:$0xff]
      %v828 = vld [vmem:[%s4 + $0x18] sm:$0xff]
      %v829 = vld [vmem:[%s4 + $0x20] sm:$0xff]
      %v830 = vld [vmem:[%s4 + $0x28] sm:$0xff]
      %832 = vset.pattern.permute.xlu0 0
      %833 = vperm.xlu0 %832, %v825
      %v834 = vpop.permute.xlu0 %833
      %837 = vset.pattern.permute.xlu0 0
      %838 = vperm.xlu0 %837, %v826
      %v839 = vpop.permute.xlu0 %838
      %842 = vset.pattern.permute.xlu0 0
      %843 = vperm.xlu0 %842, %v827
      %v844 = vpop.permute.xlu0 %843
      %847 = vset.pattern.permute.xlu0 0
      %848 = vperm.xlu0 %847, %v828
      %v849 = vpop.permute.xlu0 %848
      %852 = vset.pattern.permute.xlu0 0
      %853 = vperm.xlu0 %852, %v829
      %v854 = vpop.permute.xlu0 %853
      %857 = vset.pattern.permute.xlu0 0
      %858 = vperm.xlu0 %857, %v830
      %v859 = vpop.permute.xlu0 %858
      %v867 = vunpack.c.l.b16 %v783
      %v868 = vunpack.c.h.b16 %v783
      %v869 = vunpack.c.l.b16 %v784
      %v870 = vunpack.c.h.b16 %v784
      %v871 = vunpack.c.l.b16 %v785
      %v872 = vunpack.c.h.b16 %v785
      %v873 = vunpack.c.l.b16 %v786
      %v874 = vunpack.c.h.b16 %v786
      %v875 = vunpack.c.l.b16 %v787
      %v876 = vunpack.c.h.b16 %v787
      %v877 = vunpack.c.l.b16 %v788
      %v878 = vunpack.c.h.b16 %v788
      %v879 = vpack.c.b16 %v869, %v867
      %v880 = vpack.c.b16 %v870, %v868
      %v881 = vpack.c.b16 %v873, %v871
      %v882 = vpack.c.b16 %v874, %v872
      %v883 = vpack.c.b16 %v877, %v875
      %v884 = vpack.c.b16 %v878, %v876
      %v924 = vunpack.c.l.b16 %v789
      %v925 = vunpack.c.h.b16 %v789
      %v926 = vunpack.c.l.b16 %v790
      %v927 = vunpack.c.l.b16 %v791
      %v928 = vunpack.c.h.b16 %v791
      %v929 = vunpack.c.l.b16 %v792
      %v930 = vunpack.c.l.b16 %v793
      %v931 = vunpack.c.h.b16 %v793
      %v932 = vunpack.c.l.b16 %v794
      %v933 = vunpack.c.l.b16 %v795
      %v934 = vunpack.c.h.b16 %v795
      %v935 = vunpack.c.l.b16 %v796
      %v936 = vunpack.c.l.b16 %v797
      %v937 = vunpack.c.h.b16 %v797
      %v938 = vunpack.c.l.b16 %v798
      %v939 = vunpack.c.l.b16 %v799
      %v940 = vunpack.c.h.b16 %v799
      %v941 = vunpack.c.l.b16 %v800
      %v942 = vunpack.c.l.b16 %v801
      %v943 = vunpack.c.h.b16 %v801
      %v944 = vunpack.c.l.b16 %v802
      %v945 = vunpack.c.l.b16 %v803
      %v946 = vunpack.c.h.b16 %v803
      %v947 = vunpack.c.l.b16 %v804
      %v948 = vunpack.c.l.b16 %v805
      %v949 = vunpack.c.h.b16 %v805
      %v950 = vunpack.c.l.b16 %v806
      %v951 = vunpack.c.l.b16 %v807
      %v952 = vunpack.c.h.b16 %v807
      %v953 = vunpack.c.l.b16 %v808
      %v954 = vunpack.c.l.b16 %v809
      %v955 = vunpack.c.h.b16 %v809
      %v956 = vunpack.c.l.b16 %v810
      %v957 = vunpack.c.l.b16 %v811
      %v958 = vunpack.c.h.b16 %v811
      %v959 = vunpack.c.l.b16 %v812
      %v960 = vunpack.c.l.b16 %v813
      %v961 = vunpack.c.h.b16 %v813
      %v962 = vunpack.c.l.b16 %v814
      %v963 = vunpack.c.l.b16 %v815
      %v964 = vunpack.c.h.b16 %v815
      %v965 = vunpack.c.l.b16 %v816
      %v966 = vunpack.c.l.b16 %v817
      %v967 = vunpack.c.h.b16 %v817
      %v968 = vunpack.c.l.b16 %v818
      %v969 = vunpack.c.l.b16 %v819
      %v970 = vunpack.c.h.b16 %v819
      %v971 = vunpack.c.l.b16 %v820
      %v972 = vunpack.c.l.b16 %v821
      %v973 = vunpack.c.h.b16 %v821
      %v974 = vunpack.c.l.b16 %v822
      %v975 = vunpack.c.l.b16 %v823
      %v976 = vunpack.c.h.b16 %v823
      %v977 = vunpack.c.l.b16 %v824
      %v978 = vpack.c.b16 %v927, %v924
      %v979 = vpack.c.b16 %v928, %v925
      %v980 = vpack.c.b16 %v929, %v926
      %v981 = vpack.c.b16 %v933, %v930
      %v982 = vpack.c.b16 %v934, %v931
      %v983 = vpack.c.b16 %v935, %v932
      %v984 = vpack.c.b16 %v939, %v936
      %v985 = vpack.c.b16 %v940, %v937
      %v986 = vpack.c.b16 %v941, %v938
      %v987 = vpack.c.b16 %v945, %v942
      %v988 = vpack.c.b16 %v946, %v943
      %v989 = vpack.c.b16 %v947, %v944
      %v990 = vpack.c.b16 %v951, %v948
      %v991 = vpack.c.b16 %v952, %v949
      %v992 = vpack.c.b16 %v953, %v950
      %v993 = vpack.c.b16 %v957, %v954
      %v994 = vpack.c.b16 %v958, %v955
      %v995 = vpack.c.b16 %v959, %v956
      %v996 = vpack.c.b16 %v963, %v960
      %v997 = vpack.c.b16 %v964, %v961
      %v998 = vpack.c.b16 %v965, %v962
      %v999 = vpack.c.b16 %v969, %v966
      %v1000 = vpack.c.b16 %v970, %v967
      %v1001 = vpack.c.b16 %v971, %v968
      %v1002 = vpack.c.b16 %v975, %v972
      %v1003 = vpack.c.b16 %v976, %v973
      %v1004 = vpack.c.b16 %v977, %v974
      %vm1032 = vcmask 130048
      %v1034 = vsel %vm1032, %v880, 0
      %v1037 = vsel %vm1032, %v882, 0
      %v1040 = vsel %vm1032, %v884, 0
      %1042 = vmatprep.subr.bf16.mxu0 %v1000
      %1043 = vmatpush1.bf16.msra.mxu0 %v999
      %1044 = vmatprep.subr.bf16.mxu0 %v997
      %1045 = vmatpush1.bf16.msra.mxu0 %v996
      %1046 = vmatprep.subr.bf16.mxu0 %v994
      %1047 = vmatpush1.bf16.msra.mxu0 %v993
      %1048 = vmatprep.subr.bf16.mxu0 %v991
      %1049 = vmatpush1.bf16.msra.mxu0 %v990
      %1050 = vmatprep.subr.bf16.mxu0 %v988
      %1051 = vmatpush1.bf16.msra.mxu0 %v987
      %1052 = vmatprep.subr.bf16.mxu0 %v985
      %1053 = vmatpush1.bf16.msra.mxu0 %v984
      %1054 = vmatprep.subr.bf16.mxu0 %v982
      %1055 = vmatpush1.bf16.msra.mxu0 %v981
      %1056 = vmatprep.subr.bf16.mxu0 %v979
      %1057 = vmatpush1.bf16.msra.mxu0 %v978
      %1058 = vmatprep.subr.bf16.mxu0 0
      %1059 = vmatpush2.bf16.msra.mxu0 0
      %1060 = vmatprep.subr.bf16.mxu0 0
      %1061 = vmatpush2.bf16.msra.mxu0 0
      %1062 = vmatprep.subr.bf16.mxu0 0
      %1063 = vmatpush2.bf16.msra.mxu0 0
      %1064 = vmatprep.subr.bf16.mxu0 0
      %1065 = vmatpush2.bf16.msra.mxu0 0
      %1066 = vmatprep.subr.bf16.mxu0 0
      %1067 = vmatpush2.bf16.msra.mxu0 0
      %1068 = vmatprep.subr.bf16.mxu0 0
      %1069 = vmatpush2.bf16.msra.mxu0 0
      %1070 = vmatprep.subr.bf16.mxu0 0
      %1071 = vmatpush2.bf16.msra.mxu0 0
      %1072 = vmatprep.subr.bf16.mxu0 %v1003
      %1073 = vmatpush2.bf16.msra.mxu0 %v1002
      %1074 = vmatprep.mubr.bf16.mxu0 %v1034
      %1075 = vmatmul.mubr.bf16.gmra.mxu0 %v879
      %v1076 = vpop.f32.mrf.mxu0
      %v1077 = vadd.f32 %v834, %v1076
      %v1078 = vpop.f32.mrf.mxu0
      %v1079 = vadd.f32 %v834, %v1078
      %v1080 = vpop.f32.mrf.mxu0
      %v1081 = vadd.f32 %v839, %v1080
      %v1082 = vpop.f32.mrf.mxu0
      %v1083 = vadd.f32 %v839, %v1082
      %1084 = vmatprep.mubr.bf16.mxu0 %v1037
      %1085 = vmatmul.mubr.bf16.gmra.mxu0 %v881
      %v1086 = vpop.f32.mrf.mxu0
      %v1087 = vadd.f32 %v844, %v1086
      %v1088 = vpop.f32.mrf.mxu0
      %v1089 = vadd.f32 %v844, %v1088
      %v1090 = vpop.f32.mrf.mxu0
      %v1091 = vadd.f32 %v849, %v1090
      %v1092 = vpop.f32.mrf.mxu0
      %v1093 = vadd.f32 %v849, %v1092
      %1094 = vmatprep.mubr.bf16.mxu0 %v1040
      %1095 = vmatmul.mubr.bf16.gmra.mxu0 %v883
      %v1096 = vpop.f32.mrf.mxu0
      %v1097 = vadd.f32 %v854, %v1096
      %v1098 = vpop.f32.mrf.mxu0
      %v1099 = vadd.f32 %v854, %v1098
      %v1100 = vpop.f32.mrf.mxu0
      %v1101 = vadd.f32 %v859, %v1100
      %v1102 = vpop.f32.mrf.mxu0
      %v1103 = vadd.f32 %v859, %v1102
      %1104 = vdwg.mxu0
      %1105 = vmatprep.subr.bf16.mxu0 0
      %1106 = vmatpush1.bf16.msra.mxu0 %v1001
      %1107 = vmatprep.subr.bf16.mxu0 0
      %1108 = vmatpush1.bf16.msra.mxu0 %v998
      %1109 = vmatprep.subr.bf16.mxu0 0
      %1110 = vmatpush1.bf16.msra.mxu0 %v995
      %1111 = vmatprep.subr.bf16.mxu0 0
      %1112 = vmatpush1.bf16.msra.mxu0 %v992
      %1113 = vmatprep.subr.bf16.mxu0 0
      %1114 = vmatpush1.bf16.msra.mxu0 %v989
      %1115 = vmatprep.subr.bf16.mxu0 0
      %1116 = vmatpush1.bf16.msra.mxu0 %v986
      %1117 = vmatprep.subr.bf16.mxu0 0
      %1118 = vmatpush1.bf16.msra.mxu0 %v983
      %1119 = vmatprep.subr.bf16.mxu0 0
      %1120 = vmatpush1.bf16.msra.mxu0 %v980
      %1121 = vmatprep.subr.bf16.mxu0 0
      %1122 = vmatpush2.bf16.msra.mxu0 0
      %1123 = vmatprep.subr.bf16.mxu0 0
      %1124 = vmatpush2.bf16.msra.mxu0 0
      %1125 = vmatprep.subr.bf16.mxu0 0
      %1126 = vmatpush2.bf16.msra.mxu0 0
      %1127 = vmatprep.subr.bf16.mxu0 0
      %1128 = vmatpush2.bf16.msra.mxu0 0
      %1129 = vmatprep.subr.bf16.mxu0 0
      %1130 = vmatpush2.bf16.msra.mxu0 0
      %1131 = vmatprep.subr.bf16.mxu0 0
      %1132 = vmatpush2.bf16.msra.mxu0 0
      %1133 = vmatprep.subr.bf16.mxu0 0
      %1134 = vmatpush2.bf16.msra.mxu0 0
      %1135 = vmatprep.subr.bf16.mxu0 0
      %1136 = vmatpush2.bf16.msra.mxu0 %v1004
      %1137 = vmatprep.mubr.bf16.mxu0 %v1034
      %1138 = vmatmul.mubr.bf16.gmra.mxu0 %v879
      %v1139 = vpop.f32.mrf.mxu0
      %v1140 = vadd.f32 %v834, %v1139
      %v1141 = vpop.f32.mrf.mxu0
      %v1142 = vpop.f32.mrf.mxu0
      %v1143 = vadd.f32 %v839, %v1142
      %v1144 = vpop.f32.mrf.mxu0
      %1145 = vmatprep.mubr.bf16.mxu0 %v1037
      %1146 = vmatmul.mubr.bf16.gmra.mxu0 %v881
      %v1147 = vpop.f32.mrf.mxu0
      %v1148 = vadd.f32 %v844, %v1147
      %v1149 = vpop.f32.mrf.mxu0
      %v1150 = vpop.f32.mrf.mxu0
      %v1151 = vadd.f32 %v849, %v1150
      %v1152 = vpop.f32.mrf.mxu0
      %1153 = vmatprep.mubr.bf16.mxu0 %v1040
      %1154 = vmatmul.mubr.bf16.gmra.mxu0 %v883
      %v1155 = vpop.f32.mrf.mxu0
      %v1156 = vadd.f32 %v854, %v1155
      %v1157 = vpop.f32.mrf.mxu0
      %v1158 = vpop.f32.mrf.mxu0
      %v1159 = vadd.f32 %v859, %v1158
      %v1160 = vpop.f32.mrf.mxu0
      %1161 = vdwg.mxu0
      %vm1162 = vcmp.ge.f32.partialorder %v1077, 0.0
      %vm1163 = vcmp.ge.f32.partialorder %v1079, 0.0
      %vm1164 = vcmp.ge.f32.partialorder %v1140, 0.0
      %vm1165 = vcmp.ge.f32.partialorder %v1081, 0.0
      %vm1166 = vcmp.ge.f32.partialorder %v1083, 0.0
      %vm1167 = vcmp.ge.f32.partialorder %v1143, 0.0
      %vm1168 = vcmp.ge.f32.partialorder %v1087, 0.0
      %vm1169 = vcmp.ge.f32.partialorder %v1089, 0.0
      %vm1170 = vcmp.ge.f32.partialorder %v1148, 0.0
      %vm1171 = vcmp.ge.f32.partialorder %v1091, 0.0
      %vm1172 = vcmp.ge.f32.partialorder %v1093, 0.0
      %vm1173 = vcmp.ge.f32.partialorder %v1151, 0.0
      %vm1174 = vcmp.ge.f32.partialorder %v1097, 0.0
      %vm1175 = vcmp.ge.f32.partialorder %v1099, 0.0
      %vm1176 = vcmp.ge.f32.partialorder %v1156, 0.0
      %vm1177 = vcmp.ge.f32.partialorder %v1101, 0.0
      %vm1178 = vcmp.ge.f32.partialorder %v1103, 0.0
      %vm1179 = vcmp.ge.f32.partialorder %v1159, 0.0
      %v1180 = vmul.f32 %v1077, 0.2
      %v1181 = vmul.f32 %v1079, 0.2
      %v1182 = vmul.f32 %v1140, 0.2
      %v1183 = vmul.f32 %v1081, 0.2
      %v1184 = vmul.f32 %v1083, 0.2
      %v1185 = vmul.f32 %v1143, 0.2
      %v1186 = vmul.f32 %v1087, 0.2
      %v1187 = vmul.f32 %v1089, 0.2
      %v1188 = vmul.f32 %v1148, 0.2
      %v1189 = vmul.f32 %v1091, 0.2
      %v1190 = vmul.f32 %v1093, 0.2
      %v1191 = vmul.f32 %v1151, 0.2
      %v1192 = vmul.f32 %v1097, 0.2
      %v1193 = vmul.f32 %v1099, 0.2
      %v1194 = vmul.f32 %v1156, 0.2
      %v1195 = vmul.f32 %v1101, 0.2
      %v1196 = vmul.f32 %v1103, 0.2
      %v1197 = vmul.f32 %v1159, 0.2
      %v1198 = vsel %vm1162, %v1077, %v1180
      %v1199 = vsel %vm1163, %v1079, %v1181
      %v1200 = vsel %vm1164, %v1140, %v1182
      %v1201 = vsel %vm1165, %v1081, %v1183
      %v1202 = vsel %vm1166, %v1083, %v1184
      %v1203 = vsel %vm1167, %v1143, %v1185
      %v1204 = vsel %vm1168, %v1087, %v1186
      %v1205 = vsel %vm1169, %v1089, %v1187
      %v1206 = vsel %vm1170, %v1148, %v1188
      %v1207 = vsel %vm1171, %v1091, %v1189
      %v1208 = vsel %vm1172, %v1093, %v1190
      %v1209 = vsel %vm1173, %v1151, %v1191
      %v1210 = vsel %vm1174, %v1097, %v1192
      %v1211 = vsel %vm1175, %v1099, %v1193
      %v1212 = vsel %vm1176, %v1156, %v1194
      %v1213 = vsel %vm1177, %v1101, %v1195
      %v1214 = vsel %vm1178, %v1103, %v1196
      %v1215 = vsel %vm1179, %v1159, %v1197
      %v1216 = vmul.f32 %v1198, 1.4142135
      %v1217 = vmul.f32 %v1199, 1.4142135
      %v1218 = vmul.f32 %v1200, 1.4142135
      %v1219 = vmul.f32 %v1201, 1.4142135
      %v1220 = vmul.f32 %v1202, 1.4142135
      %v1221 = vmul.f32 %v1203, 1.4142135
      %v1222 = vmul.f32 %v1204, 1.4142135
      %v1223 = vmul.f32 %v1205, 1.4142135
      %v1224 = vmul.f32 %v1206, 1.4142135
      %v1225 = vmul.f32 %v1207, 1.4142135
      %v1226 = vmul.f32 %v1208, 1.4142135
      %v1227 = vmul.f32 %v1209, 1.4142135
      %v1228 = vmul.f32 %v1210, 1.4142135
      %v1229 = vmul.f32 %v1211, 1.4142135
      %v1230 = vmul.f32 %v1212, 1.4142135
      %v1231 = vmul.f32 %v1213, 1.4142135
      %v1232 = vmul.f32 %v1214, 1.4142135
      %v1233 = vmul.f32 %v1215, 1.4142135
      %v1235 = vlaneseq
      %v1236 = vshrl.u32 %v1235, 7
      %v1237 = vsub.s32 0, %v1236
      %v1238 = vrot.slane %v445, %v1237
      %v1239 = vlaneseq
      %v1240 = vshrl.u32 %v1239, 7
      %v1241 = vsub.s32 1, %v1240
      %v1242 = vrot.slane %v445, %v1241
      %v1243 = vlaneseq
      %v1244 = vshrl.u32 %v1243, 7
      %v1245 = vsub.s32 2, %v1244
      %v1246 = vrot.slane %v445, %v1245
      %v1250 = vmul.f32 %v1216, %v1238
      %v1251 = vmul.f32 %v1217, %v1242
      %v1252 = vmul.f32 %v1218, %v1246
      %v1253 = vmul.f32 %v1219, %v1238
      %v1254 = vmul.f32 %v1220, %v1242
      %v1255 = vmul.f32 %v1221, %v1246
      %v1256 = vmul.f32 %v1222, %v1238
      %v1257 = vmul.f32 %v1223, %v1242
      %v1258 = vmul.f32 %v1224, %v1246
      %v1259 = vmul.f32 %v1225, %v1238
      %v1260 = vmul.f32 %v1226, %v1242
      %v1261 = vmul.f32 %v1227, %v1246
      %v1262 = vmul.f32 %v1228, %v1238
      %v1263 = vmul.f32 %v1229, %v1242
      %v1264 = vmul.f32 %v1230, %v1246
      %v1265 = vmul.f32 %v1231, %v1238
      %v1266 = vmul.f32 %v1232, %v1242
      %v1267 = vmul.f32 %v1233, %v1246
      %v1268 = vpack.c.bf16 %v1253, %v1250
      %v1269 = vpack.c.bf16 %v1254, %v1251
      %v1270 = vpack.c.bf16 %v1255, %v1252
      %v1271 = vpack.c.bf16 %v1259, %v1256
      %v1272 = vpack.c.bf16 %v1260, %v1257
      %v1273 = vpack.c.bf16 %v1261, %v1258
      %v1274 = vpack.c.bf16 %v1265, %v1262
      %v1275 = vpack.c.bf16 %v1266, %v1263
      %v1276 = vpack.c.bf16 %v1267, %v1264
      %v1286 = vunpack.c.l.b16 %v1268
      %v1287 = vunpack.c.l.b16 %v1269
      %v1288 = vunpack.c.l.b16 %v1270
      %v1289 = vunpack.c.h.b16 %v1268
      %v1290 = vunpack.c.h.b16 %v1269
      %v1291 = vunpack.c.h.b16 %v1270
      %v1292 = vunpack.c.l.b16 %v1271
      %v1293 = vunpack.c.l.b16 %v1272
      %v1294 = vunpack.c.l.b16 %v1273
      %v1295 = vunpack.c.h.b16 %v1271
      %v1296 = vunpack.c.h.b16 %v1272
      %v1297 = vunpack.c.h.b16 %v1273
      %v1298 = vunpack.c.l.b16 %v1274
      %v1299 = vunpack.c.l.b16 %v1275
      %v1300 = vunpack.c.l.b16 %v1276
      %v1301 = vunpack.c.h.b16 %v1274
      %v1302 = vunpack.c.h.b16 %v1275
      %v1303 = vunpack.c.h.b16 %v1276
      %v1304 = vpack.c.b16 %v1287, %v1286
      %v1305 = vpack.c.b16 %v1288, %v1288
      %v1306 = vpack.c.b16 %v1290, %v1289
      %v1307 = vpack.c.b16 %v1291, %v1291
      %v1308 = vpack.c.b16 %v1293, %v1292
      %v1309 = vpack.c.b16 %v1294, %v1294
      %v1310 = vpack.c.b16 %v1296, %v1295
      %v1311 = vpack.c.b16 %v1297, %v1297
      %v1312 = vpack.c.b16 %v1299, %v1298
      %v1313 = vpack.c.b16 %v1300, %v1300
      %v1314 = vpack.c.b16 %v1302, %v1301
      %v1315 = vpack.c.b16 %v1303, %v1303
      %1316 = vrot.lane.b32.xlu0 %v1304, 19
      %v1317 = vpop.permute.xlu0 %1316
      %1318 = vrot.lane.b32.xlu0 %v1305, 19
      %v1319 = vpop.permute.xlu0 %1318
      %1320 = vrot.lane.b32.xlu0 %v1306, 19
      %v1321 = vpop.permute.xlu0 %1320
      %1322 = vrot.lane.b32.xlu0 %v1307, 19
      %v1323 = vpop.permute.xlu0 %1322
      %1324 = vrot.lane.b32.xlu0 %v1308, 19
      %v1325 = vpop.permute.xlu0 %1324
      %1326 = vrot.lane.b32.xlu0 %v1309, 19
      %v1327 = vpop.permute.xlu0 %1326
      %1328 = vrot.lane.b32.xlu0 %v1310, 19
      %v1329 = vpop.permute.xlu0 %1328
      %1330 = vrot.lane.b32.xlu0 %v1311, 19
      %v1331 = vpop.permute.xlu0 %1330
      %1332 = vrot.lane.b32.xlu0 %v1312, 19
      %v1333 = vpop.permute.xlu0 %1332
      %1334 = vrot.lane.b32.xlu0 %v1313, 19
      %v1335 = vpop.permute.xlu0 %1334
      %1336 = vrot.lane.b32.xlu0 %v1314, 19
      %v1337 = vpop.permute.xlu0 %1336
      %1338 = vrot.lane.b32.xlu0 %v1315, 19
      %v1339 = vpop.permute.xlu0 %1338
      %v1340 = vrot.slane %v1317, 4
      %v1341 = vrot.slane %v1319, 4
      %v1342 = vrot.slane %v1321, 4
      %v1343 = vrot.slane %v1323, 4
      %v1344 = vrot.slane %v1325, 4
      %v1345 = vrot.slane %v1327, 4
      %v1346 = vrot.slane %v1329, 4
      %v1347 = vrot.slane %v1331, 4
      %v1348 = vrot.slane %v1333, 4
      %v1349 = vrot.slane %v1335, 4
      %v1350 = vrot.slane %v1337, 4
      %v1351 = vrot.slane %v1339, 4
      %vm1352 = vcmask 154624
      %v1353 = vsel %vm1352, %v1340, %v1317
      %v1354 = vsel %vm522, %v1340, %v1341
      %v1355 = vsel %vm1352, %v1354, %v1319
      %v1356 = vsel %vm1352, %v1342, %v1321
      %v1357 = vsel %vm522, %v1342, %v1343
      %v1358 = vsel %vm1352, %v1357, %v1323
      %v1359 = vsel %vm1352, %v1344, %v1325
      %v1360 = vsel %vm522, %v1344, %v1345
      %v1361 = vsel %vm1352, %v1360, %v1327
      %v1362 = vsel %vm1352, %v1346, %v1329
      %v1363 = vsel %vm522, %v1346, %v1347
      %v1364 = vsel %vm1352, %v1363, %v1331
      %v1365 = vsel %vm1352, %v1348, %v1333
      %v1366 = vsel %vm522, %v1348, %v1349
      %v1367 = vsel %vm1352, %v1366, %v1335
      %v1368 = vsel %vm1352, %v1350, %v1337
      %v1369 = vsel %vm522, %v1350, %v1351
      %v1370 = vsel %vm1352, %v1369, %v1339
      %vm1383 = vcmask 1043608
      %vm1384 = vcmask 1047556
      %vm1385 = vmor %vm1384, %vm1383
      %1386 = vst.msk [vmem:[#allocation4] sm:$0xff] %vm1385, %v1353
      %vm1387 = vcmask 1043456
      %vm1388 = vcmask 154628
      %vm1389 = vmor %vm1388, %vm1387
      %1390 = vst.msk [vmem:[#allocation4 + $0x8] sm:$0xff] %vm1389, %v1355
      %1391 = vst.msk [vmem:[#allocation4 + $0x10] sm:$0xff] %vm1385, %v1356
      %1392 = vst.msk [vmem:[#allocation4 + $0x18] sm:$0xff] %vm1389, %v1358
      %1393 = vst.msk [vmem:[#allocation4 + $0x20] sm:$0xff] %vm1385, %v1359
      %1394 = vst.msk [vmem:[#allocation4 + $0x28] sm:$0xff] %vm1389, %v1361
      %1395 = vst.msk [vmem:[#allocation4 + $0x30] sm:$0xff] %vm1385, %v1362
      %1396 = vst.msk [vmem:[#allocation4 + $0x38] sm:$0xff] %vm1389, %v1364
      %1397 = vst.msk [vmem:[#allocation4 + $0x40] sm:$0xff] %vm1385, %v1365
      %1398 = vst.msk [vmem:[#allocation4 + $0x48] sm:$0xff] %vm1389, %v1367
      %1399 = vst.msk [vmem:[#allocation4 + $0x50] sm:$0xff] %vm1385, %v1368
      %1400 = vst.msk [vmem:[#allocation4 + $0x58] sm:$0xff] %vm1389, %v1370
      %v1401 = vld [vmem:[%s424] sm:$0xff]
      %v1402 = vld [vmem:[%s424 + $0x8] sm:$0xff]
      %v1403 = vld [vmem:[%s424 + $0x10] sm:$0xff]
      %v1404 = vld [vmem:[%s424 + $0x18] sm:$0xff]
      %v1405 = vld [vmem:[%s424 + $0x20] sm:$0xff]
      %v1406 = vld [vmem:[%s424 + $0x28] sm:$0xff]
      %v1407 = vld [vmem:[%s424 + $0x30] sm:$0xff]
      %v1408 = vld [vmem:[%s424 + $0x38] sm:$0xff]
      %v1409 = vld [vmem:[#allocation4] sm:$0xff]
      %v1410 = vld [vmem:[#allocation4 + $0x8] sm:$0xf]
      %v1411 = vld [vmem:[#allocation4 + $0x10] sm:$0xff]
      %v1412 = vld [vmem:[#allocation4 + $0x18] sm:$0xf]
      %1413 = vst [vmem:[#allocation3] sm:$0xff] %v1409
      %1414 = vst [vmem:[#allocation3 + $0x8] sm:$0xf] %v1410
      %1415 = vst [vmem:[#allocation3 + $0xc] sm:$0xff] %v1411
      %1416 = vst [vmem:[#allocation3 + $0x14] sm:$0xf] %v1412
      %v1417 = vld [vmem:[#allocation4] sm:$0xff]
      %v1418 = vld [vmem:[#allocation4 + $0x8] sm:$0xff]
      %v1419 = vld [vmem:[#allocation4 + $0x10] sm:$0xff]
      %v1420 = vld [vmem:[#allocation4 + $0x18] sm:$0xff]
      %1425 = vrot.lane.b32.xlu0 %v1417, 127
      %v1426 = vpop.permute.xlu0 %1425
      %1427 = vrot.lane.b32.xlu0 %v1418, 127
      %v1428 = vpop.permute.xlu0 %1427
      %1429 = vrot.lane.b32.xlu0 %v1419, 127
      %v1430 = vpop.permute.xlu0 %1429
      %1431 = vrot.lane.b32.xlu0 %v1420, 127
      %v1432 = vpop.permute.xlu0 %1431
      %v1433 = vrot.slane %v1426, 4
      %v1434 = vrot.slane %v1428, 4
      %v1435 = vrot.slane %v1430, 4
      %v1436 = vrot.slane %v1432, 4
      %v1437 = vsel %vm522, %v1433, %v1434
      %v1438 = vsel %vm524, %v1426, %v1437
      %v1439 = vsel %vm524, %v1428, %v1434
      %v1440 = vsel %vm522, %v1435, %v1436
      %v1441 = vsel %vm524, %v1430, %v1440
      %v1442 = vsel %vm524, %v1432, %v1436
      %1447 = vst [vmem:[#allocation3 + $0x18] sm:$0xff] %v1438
      %1448 = vst [vmem:[#allocation3 + $0x20] sm:$0xf] %v1439
      %1449 = vst [vmem:[#allocation3 + $0x24] sm:$0xff] %v1441
      %1450 = vst [vmem:[#allocation3 + $0x2c] sm:$0xf] %v1442
      %v1451 = vld [vmem:[#allocation4] sm:$0xff]
      %v1452 = vld [vmem:[#allocation4 + $0x8] sm:$0xff]
      %v1453 = vld [vmem:[#allocation4 + $0x10] sm:$0xff]
      %v1454 = vld [vmem:[#allocation4 + $0x18] sm:$0xff]
      %1459 = vrot.lane.b32.xlu0 %v1451, 126
      %v1460 = vpop.permute.xlu0 %1459
      %1461 = vrot.lane.b32.xlu0 %v1452, 126
      %v1462 = vpop.permute.xlu0 %1461
      %1463 = vrot.lane.b32.xlu0 %v1453, 126
      %v1464 = vpop.permute.xlu0 %1463
      %1465 = vrot.lane.b32.xlu0 %v1454, 126
      %v1466 = vpop.permute.xlu0 %1465
      %v1467 = vrot.slane %v1460, 4
      %v1468 = vrot.slane %v1462, 4
      %v1469 = vrot.slane %v1464, 4
      %v1470 = vrot.slane %v1466, 4
      %v1471 = vsel %vm522, %v1467, %v1468
      %v1472 = vsel %vm559, %v1460, %v1471
      %v1473 = vsel %vm559, %v1462, %v1468
      %v1474 = vsel %vm522, %v1469, %v1470
      %v1475 = vsel %vm559, %v1464, %v1474
      %v1476 = vsel %vm559, %v1466, %v1470
      %1481 = vst [vmem:[#allocation3 + $0x30] sm:$0xff] %v1472
      %1482 = vst [vmem:[#allocation3 + $0x38] sm:$0xf] %v1473
      %1483 = vst [vmem:[#allocation3 + $0x3c] sm:$0xff] %v1475
      %1484 = vst [vmem:[#allocation3 + $0x44] sm:$0xf] %v1476
      %v1485 = vld [vmem:[#allocation4] sm:$0xff]
      %v1486 = vld [vmem:[#allocation4 + $0x8] sm:$0xff]
      %v1487 = vld [vmem:[#allocation4 + $0x10] sm:$0xff]
      %v1488 = vld [vmem:[#allocation4 + $0x18] sm:$0xff]
      %1493 = vrot.lane.b32.xlu0 %v1485, 110
      %v1494 = vpop.permute.xlu0 %1493
      %1495 = vrot.lane.b32.xlu0 %v1486, 110
      %v1496 = vpop.permute.xlu0 %1495
      %1497 = vrot.lane.b32.xlu0 %v1487, 110
      %v1498 = vpop.permute.xlu0 %1497
      %1499 = vrot.lane.b32.xlu0 %v1488, 110
      %v1500 = vpop.permute.xlu0 %1499
      %v1501 = vrot.slane %v1494, 4
      %v1502 = vrot.slane %v1496, 4
      %v1503 = vrot.slane %v1498, 4
      %v1504 = vrot.slane %v1500, 4
      %v1505 = vsel %vm522, %v1501, %v1502
      %v1506 = vsel %vm594, %v1494, %v1505
      %v1507 = vsel %vm594, %v1496, %v1502
      %v1508 = vsel %vm522, %v1503, %v1504
      %v1509 = vsel %vm594, %v1498, %v1508
      %v1510 = vsel %vm594, %v1500, %v1504
      %1515 = vst [vmem:[#allocation3 + $0x48] sm:$0xff] %v1506
      %1516 = vst [vmem:[#allocation3 + $0x50] sm:$0xf] %v1507
      %1517 = vst [vmem:[#allocation3 + $0x54] sm:$0xff] %v1509
      %1518 = vst [vmem:[#allocation3 + $0x5c] sm:$0xf] %v1510
      %v1519 = vld [vmem:[#allocation4] sm:$0xff]
      %v1520 = vld [vmem:[#allocation4 + $0x8] sm:$0xff]
      %v1521 = vld [vmem:[#allocation4 + $0x10] sm:$0xff]
      %v1522 = vld [vmem:[#allocation4 + $0x18] sm:$0xff]
      %1527 = vrot.lane.b32.xlu0 %v1519, 109
      %v1528 = vpop.permute.xlu0 %1527
      %1529 = vrot.lane.b32.xlu0 %v1520, 109
      %v1530 = vpop.permute.xlu0 %1529
      %1531 = vrot.lane.b32.xlu0 %v1521, 109
      %v1532 = vpop.permute.xlu0 %1531
      %1533 = vrot.lane.b32.xlu0 %v1522, 109
      %v1534 = vpop.permute.xlu0 %1533
      %v1535 = vrot.slane %v1528, 4
      %v1536 = vrot.slane %v1530, 4
      %v1537 = vrot.slane %v1532, 4
      %v1538 = vrot.slane %v1534, 4
      %v1539 = vsel %vm522, %v1535, %v1536
      %v1540 = vsel %vm629, %v1528, %v1539
      %v1541 = vsel %vm629, %v1530, %v1536
      %v1542 = vsel %vm522, %v1537, %v1538
      %v1543 = vsel %vm629, %v1532, %v1542
      %v1544 = vsel %vm629, %v1534, %v1538
      %1549 = vst [vmem:[#allocation3 + $0x60] sm:$0xff] %v1540
      %1550 = vst [vmem:[#allocation3 + $0x68] sm:$0xf] %v1541
      %1551 = vst [vmem:[#allocation3 + $0x6c] sm:$0xff] %v1543
      %1552 = vst [vmem:[#allocation3 + $0x74] sm:$0xf] %v1544
      %v1553 = vld [vmem:[#allocation4] sm:$0xff]
      %v1554 = vld [vmem:[#allocation4 + $0x8] sm:$0xff]
      %v1555 = vld [vmem:[#allocation4 + $0x10] sm:$0xff]
      %v1556 = vld [vmem:[#allocation4 + $0x18] sm:$0xff]
      %1561 = vrot.lane.b32.xlu0 %v1553, 108
      %v1562 = vpop.permute.xlu0 %1561
      %1563 = vrot.lane.b32.xlu0 %v1554, 108
      %v1564 = vpop.permute.xlu0 %1563
      %1565 = vrot.lane.b32.xlu0 %v1555, 108
      %v1566 = vpop.permute.xlu0 %1565
      %1567 = vrot.lane.b32.xlu0 %v1556, 108
      %v1568 = vpop.permute.xlu0 %1567
      %v1569 = vrot.slane %v1562, 4
      %v1570 = vrot.slane %v1564, 4
      %v1571 = vrot.slane %v1566, 4
      %v1572 = vrot.slane %v1568, 4
      %v1573 = vsel %vm522, %v1569, %v1570
      %v1574 = vsel %vm664, %v1562, %v1573
      %v1575 = vsel %vm664, %v1564, %v1570
      %v1576 = vsel %vm522, %v1571, %v1572
      %v1577 = vsel %vm664, %v1566, %v1576
      %v1578 = vsel %vm664, %v1568, %v1572
      %1583 = vst [vmem:[#allocation3 + $0x78] sm:$0xff] %v1574
      %1584 = vst [vmem:[#allocation3 + $0x80] sm:$0xf] %v1575
      %1585 = vst [vmem:[#allocation3 + $0x84] sm:$0xff] %v1577
      %1586 = vst [vmem:[#allocation3 + $0x8c] sm:$0xf] %v1578
      %v1587 = vld [vmem:[#allocation4] sm:$0xff]
      %v1588 = vld [vmem:[#allocation4 + $0x8] sm:$0xff]
      %v1589 = vld [vmem:[#allocation4 + $0x10] sm:$0xff]
      %v1590 = vld [vmem:[#allocation4 + $0x18] sm:$0xff]
      %1595 = vrot.lane.b32.xlu0 %v1587, 92
      %v1596 = vpop.permute.xlu0 %1595
      %1597 = vrot.lane.b32.xlu0 %v1588, 92
      %v1598 = vpop.permute.xlu0 %1597
      %1599 = vrot.lane.b32.xlu0 %v1589, 92
      %v1600 = vpop.permute.xlu0 %1599
      %1601 = vrot.lane.b32.xlu0 %v1590, 92
      %v1602 = vpop.permute.xlu0 %1601
      %v1603 = vrot.slane %v1596, 4
      %v1604 = vrot.slane %v1598, 4
      %v1605 = vrot.slane %v1600, 4
      %v1606 = vrot.slane %v1602, 4
      %v1607 = vsel %vm522, %v1603, %v1604
      %v1608 = vsel %vm699, %v1596, %v1607
      %v1609 = vsel %vm699, %v1598, %v1604
      %v1610 = vsel %vm522, %v1605, %v1606
      %v1611 = vsel %vm699, %v1600, %v1610
      %v1612 = vsel %vm699, %v1602, %v1606
      %1617 = vst [vmem:[#allocation3 + $0x90] sm:$0xff] %v1608
      %1618 = vst [vmem:[#allocation3 + $0x98] sm:$0xf] %v1609
      %1619 = vst [vmem:[#allocation3 + $0x9c] sm:$0xff] %v1611
      %1620 = vst [vmem:[#allocation3 + $0xa4] sm:$0xf] %v1612
      %v1621 = vld [vmem:[#allocation4] sm:$0xff]
      %v1622 = vld [vmem:[#allocation4 + $0x8] sm:$0xff]
      %v1623 = vld [vmem:[#allocation4 + $0x10] sm:$0xff]
      %v1624 = vld [vmem:[#allocation4 + $0x18] sm:$0xff]
      %1629 = vrot.lane.b32.xlu0 %v1621, 91
      %v1630 = vpop.permute.xlu0 %1629
      %1631 = vrot.lane.b32.xlu0 %v1622, 91
      %v1632 = vpop.permute.xlu0 %1631
      %1633 = vrot.lane.b32.xlu0 %v1623, 91
      %v1634 = vpop.permute.xlu0 %1633
      %1635 = vrot.lane.b32.xlu0 %v1624, 91
      %v1636 = vpop.permute.xlu0 %1635
      %v1637 = vrot.slane %v1630, 4
      %v1638 = vrot.slane %v1632, 4
      %v1639 = vrot.slane %v1634, 4
      %v1640 = vrot.slane %v1636, 4
      %v1641 = vsel %vm522, %v1637, %v1638
      %v1642 = vsel %vm734, %v1630, %v1641
      %v1643 = vsel %vm734, %v1632, %v1638
      %v1644 = vsel %vm522, %v1639, %v1640
      %v1645 = vsel %vm734, %v1634, %v1644
      %v1646 = vsel %vm734, %v1636, %v1640
      %1651 = vst [vmem:[#allocation3 + $0xa8] sm:$0xff] %v1642
      %1652 = vst [vmem:[#allocation3 + $0xb0] sm:$0xf] %v1643
      %1653 = vst [vmem:[#allocation3 + $0xb4] sm:$0xff] %v1645
      %1654 = vst [vmem:[#allocation3 + $0xbc] sm:$0xf] %v1646
      %v1655 = vld [vmem:[#allocation4] sm:$0xff]
      %v1656 = vld [vmem:[#allocation4 + $0x8] sm:$0xff]
      %v1657 = vld [vmem:[#allocation4 + $0x10] sm:$0xff]
      %v1658 = vld [vmem:[#allocation4 + $0x18] sm:$0xff]
      %1663 = vrot.lane.b32.xlu0 %v1655, 90
      %v1664 = vpop.permute.xlu0 %1663
      %1665 = vrot.lane.b32.xlu0 %v1656, 90
      %v1666 = vpop.permute.xlu0 %1665
      %1667 = vrot.lane.b32.xlu0 %v1657, 90
      %v1668 = vpop.permute.xlu0 %1667
      %1669 = vrot.lane.b32.xlu0 %v1658, 90
      %v1670 = vpop.permute.xlu0 %1669
      %v1671 = vrot.slane %v1664, 4
      %v1672 = vrot.slane %v1666, 4
      %v1673 = vrot.slane %v1668, 4
      %v1674 = vrot.slane %v1670, 4
      %v1675 = vsel %vm522, %v1671, %v1672
      %v1676 = vsel %vm769, %v1664, %v1675
      %v1677 = vsel %vm769, %v1666, %v1672
      %v1678 = vsel %vm522, %v1673, %v1674
      %v1679 = vsel %vm769, %v1668, %v1678
      %v1680 = vsel %vm769, %v1670, %v1674
      %1685 = vst [vmem:[#allocation3 + $0xc0] sm:$0xff] %v1676
      %1686 = vst [vmem:[#allocation3 + $0xc8] sm:$0xf] %v1677
      %1687 = vst [vmem:[#allocation3 + $0xcc] sm:$0xff] %v1679
      %1688 = vst [vmem:[#allocation3 + $0xd4] sm:$0xf] %v1680
      %v1689 = vld [vmem:[%s438] sm:$0xff]
      %v1690 = vld [vmem:[%s438 + $0x8] sm:$0xff]
      %v1691 = vld [vmem:[#allocation3] sm:$0xff]
      %v1692 = vld [vmem:[#allocation3 + $0x8] sm:$0xf]
      %v1693 = vld [vmem:[#allocation3 + $0xc] sm:$0xff]
      %v1694 = vld [vmem:[#allocation3 + $0x14] sm:$0xf]
      %v1695 = vld [vmem:[#allocation3 + $0x18] sm:$0xff]
      %v1696 = vld [vmem:[#allocation3 + $0x20] sm:$0xf]
      %v1697 = vld [vmem:[#allocation3 + $0x24] sm:$0xff]
      %v1698 = vld [vmem:[#allocation3 + $0x2c] sm:$0xf]
      %v1699 = vld [vmem:[#allocation3 + $0x30] sm:$0xff]
      %v1700 = vld [vmem:[#allocation3 + $0x38] sm:$0xf]
      %v1701 = vld [vmem:[#allocation3 + $0x3c] sm:$0xff]
      %v1702 = vld [vmem:[#allocation3 + $0x44] sm:$0xf]
      %v1703 = vld [vmem:[#allocation3 + $0x48] sm:$0xff]
      %v1704 = vld [vmem:[#allocation3 + $0x50] sm:$0xf]
      %v1705 = vld [vmem:[#allocation3 + $0x54] sm:$0xff]
      %v1706 = vld [vmem:[#allocation3 + $0x5c] sm:$0xf]
      %v1707 = vld [vmem:[#allocation3 + $0x60] sm:$0xff]
      %v1708 = vld [vmem:[#allocation3 + $0x68] sm:$0xf]
      %v1709 = vld [vmem:[#allocation3 + $0x6c] sm:$0xff]
      %v1710 = vld [vmem:[#allocation3 + $0x74] sm:$0xf]
      %v1711 = vld [vmem:[#allocation3 + $0x78] sm:$0xff]
      %v1712 = vld [vmem:[#allocation3 + $0x80] sm:$0xf]
      %v1713 = vld [vmem:[#allocation3 + $0x84] sm:$0xff]
      %v1714 = vld [vmem:[#allocation3 + $0x8c] sm:$0xf]
      %v1715 = vld [vmem:[#allocation3 + $0x90] sm:$0xff]
      %v1716 = vld [vmem:[#allocation3 + $0x98] sm:$0xf]
      %v1717 = vld [vmem:[#allocation3 + $0x9c] sm:$0xff]
      %v1718 = vld [vmem:[#allocation3 + $0xa4] sm:$0xf]
      %v1719 = vld [vmem:[#allocation3 + $0xa8] sm:$0xff]
      %v1720 = vld [vmem:[#allocation3 + $0xb0] sm:$0xf]
      %v1721 = vld [vmem:[#allocation3 + $0xb4] sm:$0xff]
      %v1722 = vld [vmem:[#allocation3 + $0xbc] sm:$0xf]
      %v1723 = vld [vmem:[#allocation3 + $0xc0] sm:$0xff]
      %v1724 = vld [vmem:[#allocation3 + $0xc8] sm:$0xf]
      %v1725 = vld [vmem:[#allocation3 + $0xcc] sm:$0xff]
      %v1726 = vld [vmem:[#allocation3 + $0xd4] sm:$0xf]
      %v1727 = vld [vmem:[%s6] sm:$0xff]
      %v1728 = vld [vmem:[%s6 + $0x8] sm:$0xff]
      %1730 = vset.pattern.permute.xlu0 0
      %1731 = vperm.xlu0 %1730, %v1727
      %v1732 = vpop.permute.xlu0 %1731
      %1735 = vset.pattern.permute.xlu0 0
      %1736 = vperm.xlu0 %1735, %v1728
      %v1737 = vpop.permute.xlu0 %1736
      %v1741 = vunpack.c.l.b16 %v1689
      %v1742 = vunpack.c.h.b16 %v1689
      %v1743 = vunpack.c.l.b16 %v1690
      %v1744 = vunpack.c.h.b16 %v1690
      %v1745 = vpack.c.b16 %v1743, %v1741
      %v1746 = vpack.c.b16 %v1744, %v1742
      %v1784 = vunpack.c.l.b16 %v1691
      %v1785 = vunpack.c.h.b16 %v1691
      %v1786 = vunpack.c.l.b16 %v1692
      %v1787 = vunpack.c.l.b16 %v1693
      %v1788 = vunpack.c.h.b16 %v1693
      %v1789 = vunpack.c.l.b16 %v1694
      %v1790 = vunpack.c.l.b16 %v1695
      %v1791 = vunpack.c.h.b16 %v1695
      %v1792 = vunpack.c.l.b16 %v1696
      %v1793 = vunpack.c.l.b16 %v1697
      %v1794 = vunpack.c.h.b16 %v1697
      %v1795 = vunpack.c.l.b16 %v1698
      %v1796 = vunpack.c.l.b16 %v1699
      %v1797 = vunpack.c.h.b16 %v1699
      %v1798 = vunpack.c.l.b16 %v1700
      %v1799 = vunpack.c.l.b16 %v1701
      %v1800 = vunpack.c.h.b16 %v1701
      %v1801 = vunpack.c.l.b16 %v1702
      %v1802 = vunpack.c.l.b16 %v1703
      %v1803 = vunpack.c.h.b16 %v1703
      %v1804 = vunpack.c.l.b16 %v1704
      %v1805 = vunpack.c.l.b16 %v1705
      %v1806 = vunpack.c.h.b16 %v1705
      %v1807 = vunpack.c.l.b16 %v1706
      %v1808 = vunpack.c.l.b16 %v1707
      %v1809 = vunpack.c.h.b16 %v1707
      %v1810 = vunpack.c.l.b16 %v1708
      %v1811 = vunpack.c.l.b16 %v1709
      %v1812 = vunpack.c.h.b16 %v1709
      %v1813 = vunpack.c.l.b16 %v1710
      %v1814 = vunpack.c.l.b16 %v1711
      %v1815 = vunpack.c.h.b16 %v1711
      %v1816 = vunpack.c.l.b16 %v1712
      %v1817 = vunpack.c.l.b16 %v1713
      %v1818 = vunpack.c.h.b16 %v1713
      %v1819 = vunpack.c.l.b16 %v1714
      %v1820 = vunpack.c.l.b16 %v1715
      %v1821 = vunpack.c.h.b16 %v1715
      %v1822 = vunpack.c.l.b16 %v1716
      %v1823 = vunpack.c.l.b16 %v1717
      %v1824 = vunpack.c.h.b16 %v1717
      %v1825 = vunpack.c.l.b16 %v1718
      %v1826 = vunpack.c.l.b16 %v1719
      %v1827 = vunpack.c.h.b16 %v1719
      %v1828 = vunpack.c.l.b16 %v1720
      %v1829 = vunpack.c.l.b16 %v1721
      %v1830 = vunpack.c.h.b16 %v1721
      %v1831 = vunpack.c.l.b16 %v1722
      %v1832 = vunpack.c.l.b16 %v1723
      %v1833 = vunpack.c.h.b16 %v1723
      %v1834 = vunpack.c.l.b16 %v1724
      %v1835 = vunpack.c.l.b16 %v1725
      %v1836 = vunpack.c.h.b16 %v1725
      %v1837 = vunpack.c.l.b16 %v1726
      %v1838 = vpack.c.b16 %v1787, %v1784
      %v1839 = vpack.c.b16 %v1788, %v1785
      %v1840 = vpack.c.b16 %v1789, %v1786
      %v1841 = vpack.c.b16 %v1793, %v1790
      %v1842 = vpack.c.b16 %v1794, %v1791
      %v1843 = vpack.c.b16 %v1795, %v1792
      %v1844 = vpack.c.b16 %v1799, %v1796
      %v1845 = vpack.c.b16 %v1800, %v1797
      %v1846 = vpack.c.b16 %v1801, %v1798
      %v1847 = vpack.c.b16 %v1805, %v1802
      %v1848 = vpack.c.b16 %v1806, %v1803
      %v1849 = vpack.c.b16 %v1807, %v1804
      %v1850 = vpack.c.b16 %v1811, %v1808
      %v1851 = vpack.c.b16 %v1812, %v1809
      %v1852 = vpack.c.b16 %v1813, %v1810
      %v1853 = vpack.c.b16 %v1817, %v1814
      %v1854 = vpack.c.b16 %v1818, %v1815
      %v1855 = vpack.c.b16 %v1819, %v1816
      %v1856 = vpack.c.b16 %v1823, %v1820
      %v1857 = vpack.c.b16 %v1824, %v1821
      %v1858 = vpack.c.b16 %v1825, %v1822
      %v1859 = vpack.c.b16 %v1829, %v1826
      %v1860 = vpack.c.b16 %v1830, %v1827
      %v1861 = vpack.c.b16 %v1831, %v1828
      %v1862 = vpack.c.b16 %v1835, %v1832
      %v1863 = vpack.c.b16 %v1836, %v1833
      %v1864 = vpack.c.b16 %v1837, %v1834
      %v1893 = vsel %vm1032, %v1746, 0
      %1895 = vmatprep.subr.bf16.mxu0 %v1860
      %1896 = vmatpush1.bf16.msra.mxu0 %v1859
      %1897 = vmatprep.subr.bf16.mxu0 %v1857
      %1898 = vmatpush1.bf16.msra.mxu0 %v1856
      %1899 = vmatprep.subr.bf16.mxu0 %v1854
      %1900 = vmatpush1.bf16.msra.mxu0 %v1853
      %1901 = vmatprep.subr.bf16.mxu0 %v1851
      %1902 = vmatpush1.bf16.msra.mxu0 %v1850
      %1903 = vmatprep.subr.bf16.mxu0 %v1848
      %1904 = vmatpush1.bf16.msra.mxu0 %v1847
      %1905 = vmatprep.subr.bf16.mxu0 %v1845
      %1906 = vmatpush1.bf16.msra.mxu0 %v1844
      %1907 = vmatprep.subr.bf16.mxu0 %v1842
      %1908 = vmatpush1.bf16.msra.mxu0 %v1841
      %1909 = vmatprep.subr.bf16.mxu0 %v1839
      %1910 = vmatpush1.bf16.msra.mxu0 %v1838
      %1911 = vmatprep.subr.bf16.mxu0 0
      %1912 = vmatpush2.bf16.msra.mxu0 0
      %1913 = vmatprep.subr.bf16.mxu0 0
      %1914 = vmatpush2.bf16.msra.mxu0 0
      %1915 = vmatprep.subr.bf16.mxu0 0
      %1916 = vmatpush2.bf16.msra.mxu0 0
      %1917 = vmatprep.subr.bf16.mxu0 0
      %1918 = vmatpush2.bf16.msra.mxu0 0
      %1919 = vmatprep.subr.bf16.mxu0 0
      %1920 = vmatpush2.bf16.msra.mxu0 0
      %1921 = vmatprep.subr.bf16.mxu0 0
      %1922 = vmatpush2.bf16.msra.mxu0 0
      %1923 = vmatprep.subr.bf16.mxu0 0
      %1924 = vmatpush2.bf16.msra.mxu0 0
      %1925 = vmatprep.subr.bf16.mxu0 %v1863
      %1926 = vmatpush2.bf16.msra.mxu0 %v1862
      %1927 = vmatprep.mubr.bf16.mxu0 %v1893
      %1928 = vmatmul.mubr.bf16.gmra.mxu0 %v1745
      %v1929 = vpop.f32.mrf.mxu0
      %v1930 = vadd.f32 %v1732, %v1929
      %v1931 = vpop.f32.mrf.mxu0
      %v1932 = vadd.f32 %v1732, %v1931
      %v1933 = vpop.f32.mrf.mxu0
      %v1934 = vadd.f32 %v1737, %v1933
      %v1935 = vpop.f32.mrf.mxu0
      %v1936 = vadd.f32 %v1737, %v1935
      %1937 = vdwg.mxu0
      %1938 = vmatprep.subr.bf16.mxu0 0
      %1939 = vmatpush1.bf16.msra.mxu0 %v1861
      %1940 = vmatprep.subr.bf16.mxu0 0
      %1941 = vmatpush1.bf16.msra.mxu0 %v1858
      %1942 = vmatprep.subr.bf16.mxu0 0
      %1943 = vmatpush1.bf16.msra.mxu0 %v1855
      %1944 = vmatprep.subr.bf16.mxu0 0
      %1945 = vmatpush1.bf16.msra.mxu0 %v1852
      %1946 = vmatprep.subr.bf16.mxu0 0
      %1947 = vmatpush1.bf16.msra.mxu0 %v1849
      %1948 = vmatprep.subr.bf16.mxu0 0
      %1949 = vmatpush1.bf16.msra.mxu0 %v1846
      %1950 = vmatprep.subr.bf16.mxu0 0
      %1951 = vmatpush1.bf16.msra.mxu0 %v1843
      %1952 = vmatprep.subr.bf16.mxu0 0
      %1953 = vmatpush1.bf16.msra.mxu0 %v1840
      %1954 = vmatprep.subr.bf16.mxu0 0
      %1955 = vmatpush2.bf16.msra.mxu0 0
      %1956 = vmatprep.subr.bf16.mxu0 0
      %1957 = vmatpush2.bf16.msra.mxu0 0
      %1958 = vmatprep.subr.bf16.mxu0 0
      %1959 = vmatpush2.bf16.msra.mxu0 0
      %1960 = vmatprep.subr.bf16.mxu0 0
      %1961 = vmatpush2.bf16.msra.mxu0 0
      %1962 = vmatprep.subr.bf16.mxu0 0
      %1963 = vmatpush2.bf16.msra.mxu0 0
      %1964 = vmatprep.subr.bf16.mxu0 0
      %1965 = vmatpush2.bf16.msra.mxu0 0
      %1966 = vmatprep.subr.bf16.mxu0 0
      %1967 = vmatpush2.bf16.msra.mxu0 0
      %1968 = vmatprep.subr.bf16.mxu0 0
      %1969 = vmatpush2.bf16.msra.mxu0 %v1864
      %1970 = vmatprep.mubr.bf16.mxu0 %v1893
      %1971 = vmatmul.mubr.bf16.gmra.mxu0 %v1745
      %v1972 = vpop.f32.mrf.mxu0
      %v1973 = vadd.f32 %v1732, %v1972
      %v1974 = vpop.f32.mrf.mxu0
      %v1975 = vpop.f32.mrf.mxu0
      %v1976 = vadd.f32 %v1737, %v1975
      %v1977 = vpop.f32.mrf.mxu0
      %1978 = vdwg.mxu0
      %vm1979 = vcmp.ge.f32.partialorder %v1930, 0.0
      %vm1980 = vcmp.ge.f32.partialorder %v1932, 0.0
      %vm1981 = vcmp.ge.f32.partialorder %v1973, 0.0
      %vm1982 = vcmp.ge.f32.partialorder %v1934, 0.0
      %vm1983 = vcmp.ge.f32.partialorder %v1936, 0.0
      %vm1984 = vcmp.ge.f32.partialorder %v1976, 0.0
      %v1985 = vmul.f32 %v1930, 0.2
      %v1986 = vmul.f32 %v1932, 0.2
      %v1987 = vmul.f32 %v1973, 0.2
      %v1988 = vmul.f32 %v1934, 0.2
      %v1989 = vmul.f32 %v1936, 0.2
      %v1990 = vmul.f32 %v1976, 0.2
      %v1991 = vsel %vm1979, %v1930, %v1985
      %v1992 = vsel %vm1980, %v1932, %v1986
      %v1993 = vsel %vm1981, %v1973, %v1987
      %v1994 = vsel %vm1982, %v1934, %v1988
      %v1995 = vsel %vm1983, %v1936, %v1989
      %v1996 = vsel %vm1984, %v1976, %v1990
      %v1997 = vmul.f32 %v1991, 1.4142135
      %v1998 = vmul.f32 %v1992, 1.4142135
      %v1999 = vmul.f32 %v1993, 1.4142135
      %v2000 = vmul.f32 %v1994, 1.4142135
      %v2001 = vmul.f32 %v1995, 1.4142135
      %v2002 = vmul.f32 %v1996, 1.4142135
      %2011 = vrot.lane.b32.xlu0 %v1401, 109
      %v2012 = vpop.permute.xlu0 %2011
      %2013 = vrot.lane.b32.xlu0 %v1402, 109
      %v2014 = vpop.permute.xlu0 %2013
      %2015 = vrot.lane.b32.xlu0 %v1403, 109
      %v2016 = vpop.permute.xlu0 %2015
      %2017 = vrot.lane.b32.xlu0 %v1404, 109
      %v2018 = vpop.permute.xlu0 %2017
      %2019 = vrot.lane.b32.xlu0 %v1405, 109
      %v2020 = vpop.permute.xlu0 %2019
      %2021 = vrot.lane.b32.xlu0 %v1406, 109
      %v2022 = vpop.permute.xlu0 %2021
      %2023 = vrot.lane.b32.xlu0 %v1407, 109
      %v2024 = vpop.permute.xlu0 %2023
      %2025 = vrot.lane.b32.xlu0 %v1408, 109
      %v2026 = vpop.permute.xlu0 %2025
      %vm2027 = vcmask 891904
      %v2028 = vsel %vm2027, %v2012, %v2014
      %v2029 = vsel %vm2027, %v2014, %v2016
      %v2030 = vsel %vm2027, %v2016, %v2018
      %v2031 = vsel %vm2027, %v2020, %v2022
      %v2032 = vsel %vm2027, %v2022, %v2024
      %v2033 = vsel %vm2027, %v2024, %v2026
      %v2040 = vadd.f32 %v1997, %v2028
      %v2041 = vadd.f32 %v1998, %v2029
      %v2042 = vadd.f32 %v1999, %v2030
      %v2043 = vadd.f32 %v2000, %v2031
      %v2044 = vadd.f32 %v2001, %v2032
      %v2045 = vadd.f32 %v2002, %v2033
      %v2046 = vpack.c.bf16 %v2043, %v2040
      %v2047 = vpack.c.bf16 %v2044, %v2041
      %v2048 = vpack.c.bf16 %v2045, %v2042
      %v2052 = vunpack.c.l.b16 %v2046
      %v2053 = vunpack.c.l.b16 %v2047
      %v2054 = vunpack.c.l.b16 %v2048
      %v2055 = vunpack.c.h.b16 %v2046
      %v2056 = vunpack.c.h.b16 %v2047
      %v2057 = vunpack.c.h.b16 %v2048
      %v2058 = vpack.c.b16 %v2053, %v2052
      %v2059 = vpack.c.b16 %v2054, %v2054
      %v2060 = vpack.c.b16 %v2056, %v2055
      %v2061 = vpack.c.b16 %v2057, %v2057
      %2066 = vst [vmem:[#allocation5] sm:$0xff] %v2058
      %2067 = vst [vmem:[#allocation5 + $0x8] sm:$0xf] %v2059
      %2068 = vst [vmem:[#allocation5 + $0xc] sm:$0xff] %v2060
      %2069 = vst [vmem:[#allocation5 + $0x14] sm:$0xf] %v2061
      %v2070 = vld [vmem:[#allocation4 + $0x20] sm:$0xff]
      %v2071 = vld [vmem:[#allocation4 + $0x28] sm:$0xf]
      %v2072 = vld [vmem:[#allocation4 + $0x30] sm:$0xff]
      %v2073 = vld [vmem:[#allocation4 + $0x38] sm:$0xf]
      %2074 = vst [vmem:[#allocation3] sm:$0xff] %v2070
      %2075 = vst [vmem:[#allocation3 + $0x8] sm:$0xf] %v2071
      %2076 = vst [vmem:[#allocation3 + $0xc] sm:$0xff] %v2072
      %2077 = vst [vmem:[#allocation3 + $0x14] sm:$0xf] %v2073
      %v2078 = vld [vmem:[#allocation4 + $0x20] sm:$0xff]
      %v2079 = vld [vmem:[#allocation4 + $0x28] sm:$0xff]
      %v2080 = vld [vmem:[#allocation4 + $0x30] sm:$0xff]
      %v2081 = vld [vmem:[#allocation4 + $0x38] sm:$0xff]
      %2086 = vrot.lane.b32.xlu0 %v2078, 127
      %v2087 = vpop.permute.xlu0 %2086
      %2088 = vrot.lane.b32.xlu0 %v2079, 127
      %v2089 = vpop.permute.xlu0 %2088
      %2090 = vrot.lane.b32.xlu0 %v2080, 127
      %v2091 = vpop.permute.xlu0 %2090
      %2092 = vrot.lane.b32.xlu0 %v2081, 127
      %v2093 = vpop.permute.xlu0 %2092
      %v2094 = vrot.slane %v2087, 4
      %v2095 = vrot.slane %v2089, 4
      %v2096 = vrot.slane %v2091, 4
      %v2097 = vrot.slane %v2093, 4
      %v2098 = vsel %vm522, %v2094, %v2095
      %v2099 = vsel %vm524, %v2087, %v2098
      %v2100 = vsel %vm524, %v2089, %v2095
      %v2101 = vsel %vm522, %v2096, %v2097
      %v2102 = vsel %vm524, %v2091, %v2101
      %v2103 = vsel %vm524, %v2093, %v2097
      %2108 = vst [vmem:[#allocation3 + $0x18] sm:$0xff] %v2099
      %2109 = vst [vmem:[#allocation3 + $0x20] sm:$0xf] %v2100
      %2110 = vst [vmem:[#allocation3 + $0x24] sm:$0xff] %v2102
      %2111 = vst [vmem:[#allocation3 + $0x2c] sm:$0xf] %v2103
      %v2112 = vld [vmem:[#allocation4 + $0x20] sm:$0xff]
      %v2113 = vld [vmem:[#allocation4 + $0x28] sm:$0xff]
      %v2114 = vld [vmem:[#allocation4 + $0x30] sm:$0xff]
      %v2115 = vld [vmem:[#allocation4 + $0x38] sm:$0xff]
      %2120 = vrot.lane.b32.xlu0 %v2112, 126
      %v2121 = vpop.permute.xlu0 %2120
      %2122 = vrot.lane.b32.xlu0 %v2113, 126
      %v2123 = vpop.permute.xlu0 %2122
      %2124 = vrot.lane.b32.xlu0 %v2114, 126
      %v2125 = vpop.permute.xlu0 %2124
      %2126 = vrot.lane.b32.xlu0 %v2115, 126
      %v2127 = vpop.permute.xlu0 %2126
      %v2128 = vrot.slane %v2121, 4
      %v2129 = vrot.slane %v2123, 4
      %v2130 = vrot.slane %v2125, 4
      %v2131 = vrot.slane %v2127, 4
      %v2132 = vsel %vm522, %v2128, %v2129
      %v2133 = vsel %vm559, %v2121, %v2132
      %v2134 = vsel %vm559, %v2123, %v2129
      %v2135 = vsel %vm522, %v2130, %v2131
      %v2136 = vsel %vm559, %v2125, %v2135
      %v2137 = vsel %vm559, %v2127, %v2131
      %2142 = vst [vmem:[#allocation3 + $0x30] sm:$0xff] %v2133
      %2143 = vst [vmem:[#allocation3 + $0x38] sm:$0xf] %v2134
      %2144 = vst [vmem:[#allocation3 + $0x3c] sm:$0xff] %v2136
      %2145 = vst [vmem:[#allocation3 + $0x44] sm:$0xf] %v2137
      %v2146 = vld [vmem:[#allocation4 + $0x20] sm:$0xff]
      %v2147 = vld [vmem:[#allocation4 + $0x28] sm:$0xff]
      %v2148 = vld [vmem:[#allocation4 + $0x30] sm:$0xff]
      %v2149 = vld [vmem:[#allocation4 + $0x38] sm:$0xff]
      %2154 = vrot.lane.b32.xlu0 %v2146, 110
      %v2155 = vpop.permute.xlu0 %2154
      %2156 = vrot.lane.b32.xlu0 %v2147, 110
      %v2157 = vpop.permute.xlu0 %2156
      %2158 = vrot.lane.b32.xlu0 %v2148, 110
      %v2159 = vpop.permute.xlu0 %2158
      %2160 = vrot.lane.b32.xlu0 %v2149, 110
      %v2161 = vpop.permute.xlu0 %2160
      %v2162 = vrot.slane %v2155, 4
      %v2163 = vrot.slane %v2157, 4
      %v2164 = vrot.slane %v2159, 4
      %v2165 = vrot.slane %v2161, 4
      %v2166 = vsel %vm522, %v2162, %v2163
      %v2167 = vsel %vm594, %v2155, %v2166
      %v2168 = vsel %vm594, %v2157, %v2163
      %v2169 = vsel %vm522, %v2164, %v2165
      %v2170 = vsel %vm594, %v2159, %v2169
      %v2171 = vsel %vm594, %v2161, %v2165
      %2176 = vst [vmem:[#allocation3 + $0x48] sm:$0xff] %v2167
      %2177 = vst [vmem:[#allocation3 + $0x50] sm:$0xf] %v2168
      %2178 = vst [vmem:[#allocation3 + $0x54] sm:$0xff] %v2170
      %2179 = vst [vmem:[#allocation3 + $0x5c] sm:$0xf] %v2171
      %v2180 = vld [vmem:[#allocation4 + $0x20] sm:$0xff]
      %v2181 = vld [vmem:[#allocation4 + $0x28] sm:$0xff]
      %v2182 = vld [vmem:[#allocation4 + $0x30] sm:$0xff]
      %v2183 = vld [vmem:[#allocation4 + $0x38] sm:$0xff]
      %2188 = vrot.lane.b32.xlu0 %v2180, 109
      %v2189 = vpop.permute.xlu0 %2188
      %2190 = vrot.lane.b32.xlu0 %v2181, 109
      %v2191 = vpop.permute.xlu0 %2190
      %2192 = vrot.lane.b32.xlu0 %v2182, 109
      %v2193 = vpop.permute.xlu0 %2192
      %2194 = vrot.lane.b32.xlu0 %v2183, 109
      %v2195 = vpop.permute.xlu0 %2194
      %v2196 = vrot.slane %v2189, 4
      %v2197 = vrot.slane %v2191, 4
      %v2198 = vrot.slane %v2193, 4
      %v2199 = vrot.slane %v2195, 4
      %v2200 = vsel %vm522, %v2196, %v2197
      %v2201 = vsel %vm629, %v2189, %v2200
      %v2202 = vsel %vm629, %v2191, %v2197
      %v2203 = vsel %vm522, %v2198, %v2199
      %v2204 = vsel %vm629, %v2193, %v2203
      %v2205 = vsel %vm629, %v2195, %v2199
      %2210 = vst [vmem:[#allocation3 + $0x60] sm:$0xff] %v2201
      %2211 = vst [vmem:[#allocation3 + $0x68] sm:$0xf] %v2202
      %2212 = vst [vmem:[#allocation3 + $0x6c] sm:$0xff] %v2204
      %2213 = vst [vmem:[#allocation3 + $0x74] sm:$0xf] %v2205
      %v2214 = vld [vmem:[#allocation4 + $0x20] sm:$0xff]
      %v2215 = vld [vmem:[#allocation4 + $0x28] sm:$0xff]
      %v2216 = vld [vmem:[#allocation4 + $0x30] sm:$0xff]
      %v2217 = vld [vmem:[#allocation4 + $0x38] sm:$0xff]
      %2222 = vrot.lane.b32.xlu0 %v2214, 108
      %v2223 = vpop.permute.xlu0 %2222
      %2224 = vrot.lane.b32.xlu0 %v2215, 108
      %v2225 = vpop.permute.xlu0 %2224
      %2226 = vrot.lane.b32.xlu0 %v2216, 108
      %v2227 = vpop.permute.xlu0 %2226
      %2228 = vrot.lane.b32.xlu0 %v2217, 108
      %v2229 = vpop.permute.xlu0 %2228
      %v2230 = vrot.slane %v2223, 4
      %v2231 = vrot.slane %v2225, 4
      %v2232 = vrot.slane %v2227, 4
      %v2233 = vrot.slane %v2229, 4
      %v2234 = vsel %vm522, %v2230, %v2231
      %v2235 = vsel %vm664, %v2223, %v2234
      %v2236 = vsel %vm664, %v2225, %v2231
      %v2237 = vsel %vm522, %v2232, %v2233
      %v2238 = vsel %vm664, %v2227, %v2237
      %v2239 = vsel %vm664, %v2229, %v2233
      %2244 = vst [vmem:[#allocation3 + $0x78] sm:$0xff] %v2235
      %2245 = vst [vmem:[#allocation3 + $0x80] sm:$0xf] %v2236
      %2246 = vst [vmem:[#allocation3 + $0x84] sm:$0xff] %v2238
      %2247 = vst [vmem:[#allocation3 + $0x8c] sm:$0xf] %v2239
      %v2248 = vld [vmem:[#allocation4 + $0x20] sm:$0xff]
      %v2249 = vld [vmem:[#allocation4 + $0x28] sm:$0xff]
      %v2250 = vld [vmem:[#allocation4 + $0x30] sm:$0xff]
      %v2251 = vld [vmem:[#allocation4 + $0x38] sm:$0xff]
      %2256 = vrot.lane.b32.xlu0 %v2248, 92
      %v2257 = vpop.permute.xlu0 %2256
      %2258 = vrot.lane.b32.xlu0 %v2249, 92
      %v2259 = vpop.permute.xlu0 %2258
      %2260 = vrot.lane.b32.xlu0 %v2250, 92
      %v2261 = vpop.permute.xlu0 %2260
      %2262 = vrot.lane.b32.xlu0 %v2251, 92
      %v2263 = vpop.permute.xlu0 %2262
      %v2264 = vrot.slane %v2257, 4
      %v2265 = vrot.slane %v2259, 4
      %v2266 = vrot.slane %v2261, 4
      %v2267 = vrot.slane %v2263, 4
      %v2268 = vsel %vm522, %v2264, %v2265
      %v2269 = vsel %vm699, %v2257, %v2268
      %v2270 = vsel %vm699, %v2259, %v2265
      %v2271 = vsel %vm522, %v2266, %v2267
      %v2272 = vsel %vm699, %v2261, %v2271
      %v2273 = vsel %vm699, %v2263, %v2267
      %2278 = vst [vmem:[#allocation3 + $0x90] sm:$0xff] %v2269
      %2279 = vst [vmem:[#allocation3 + $0x98] sm:$0xf] %v2270
      %2280 = vst [vmem:[#allocation3 + $0x9c] sm:$0xff] %v2272
      %2281 = vst [vmem:[#allocation3 + $0xa4] sm:$0xf] %v2273
      %v2282 = vld [vmem:[#allocation4 + $0x20] sm:$0xff]
      %v2283 = vld [vmem:[#allocation4 + $0x28] sm:$0xff]
      %v2284 = vld [vmem:[#allocation4 + $0x30] sm:$0xff]
      %v2285 = vld [vmem:[#allocation4 + $0x38] sm:$0xff]
      %2290 = vrot.lane.b32.xlu0 %v2282, 91
      %v2291 = vpop.permute.xlu0 %2290
      %2292 = vrot.lane.b32.xlu0 %v2283, 91
      %v2293 = vpop.permute.xlu0 %2292
      %2294 = vrot.lane.b32.xlu0 %v2284, 91
      %v2295 = vpop.permute.xlu0 %2294
      %2296 = vrot.lane.b32.xlu0 %v2285, 91
      %v2297 = vpop.permute.xlu0 %2296
      %v2298 = vrot.slane %v2291, 4
      %v2299 = vrot.slane %v2293, 4
      %v2300 = vrot.slane %v2295, 4
      %v2301 = vrot.slane %v2297, 4
      %v2302 = vsel %vm522, %v2298, %v2299
      %v2303 = vsel %vm734, %v2291, %v2302
      %v2304 = vsel %vm734, %v2293, %v2299
      %v2305 = vsel %vm522, %v2300, %v2301
      %v2306 = vsel %vm734, %v2295, %v2305
      %v2307 = vsel %vm734, %v2297, %v2301
      %2312 = vst [vmem:[#allocation3 + $0xa8] sm:$0xff] %v2303
      %2313 = vst [vmem:[#allocation3 + $0xb0] sm:$0xf] %v2304
      %2314 = vst [vmem:[#allocation3 + $0xb4] sm:$0xff] %v2306
      %2315 = vst [vmem:[#allocation3 + $0xbc] sm:$0xf] %v2307
      %v2316 = vld [vmem:[#allocation4 + $0x20] sm:$0xff]
      %v2317 = vld [vmem:[#allocation4 + $0x28] sm:$0xff]
      %v2318 = vld [vmem:[#allocation4 + $0x30] sm:$0xff]
      %v2319 = vld [vmem:[#allocation4 + $0x38] sm:$0xff]
      %2324 = vrot.lane.b32.xlu0 %v2316, 90
      %v2325 = vpop.permute.xlu0 %2324
      %2326 = vrot.lane.b32.xlu0 %v2317, 90
      %v2327 = vpop.permute.xlu0 %2326
      %2328 = vrot.lane.b32.xlu0 %v2318, 90
      %v2329 = vpop.permute.xlu0 %2328
      %2330 = vrot.lane.b32.xlu0 %v2319, 90
      %v2331 = vpop.permute.xlu0 %2330
      %v2332 = vrot.slane %v2325, 4
      %v2333 = vrot.slane %v2327, 4
      %v2334 = vrot.slane %v2329, 4
      %v2335 = vrot.slane %v2331, 4
      %v2336 = vsel %vm522, %v2332, %v2333
      %v2337 = vsel %vm769, %v2325, %v2336
      %v2338 = vsel %vm769, %v2327, %v2333
      %v2339 = vsel %vm522, %v2334, %v2335
      %v2340 = vsel %vm769, %v2329, %v2339
      %v2341 = vsel %vm769, %v2331, %v2335
      %2346 = vst [vmem:[#allocation3 + $0xc0] sm:$0xff] %v2337
      %2347 = vst [vmem:[#allocation3 + $0xc8] sm:$0xf] %v2338
      %2348 = vst [vmem:[#allocation3 + $0xcc] sm:$0xff] %v2340
      %2349 = vst [vmem:[#allocation3 + $0xd4] sm:$0xf] %v2341
      %s2350 = scalar_lea.vmem %s438, 16
      %v2351 = vld [vmem:[%s2350] sm:$0xff]
      %v2352 = vld [vmem:[%s2350 + $0x8] sm:$0xff]
      %v2353 = vld [vmem:[#allocation3] sm:$0xff]
      %v2354 = vld [vmem:[#allocation3 + $0x8] sm:$0xf]
      %v2355 = vld [vmem:[#allocation3 + $0xc] sm:$0xff]
      %v2356 = vld [vmem:[#allocation3 + $0x14] sm:$0xf]
      %v2357 = vld [vmem:[#allocation3 + $0x18] sm:$0xff]
      %v2358 = vld [vmem:[#allocation3 + $0x20] sm:$0xf]
      %v2359 = vld [vmem:[#allocation3 + $0x24] sm:$0xff]
      %v2360 = vld [vmem:[#allocation3 + $0x2c] sm:$0xf]
      %v2361 = vld [vmem:[#allocation3 + $0x30] sm:$0xff]
      %v2362 = vld [vmem:[#allocation3 + $0x38] sm:$0xf]
      %v2363 = vld [vmem:[#allocation3 + $0x3c] sm:$0xff]
      %v2364 = vld [vmem:[#allocation3 + $0x44] sm:$0xf]
      %v2365 = vld [vmem:[#allocation3 + $0x48] sm:$0xff]
      %v2366 = vld [vmem:[#allocation3 + $0x50] sm:$0xf]
      %v2367 = vld [vmem:[#allocation3 + $0x54] sm:$0xff]
      %v2368 = vld [vmem:[#allocation3 + $0x5c] sm:$0xf]
      %v2369 = vld [vmem:[#allocation3 + $0x60] sm:$0xff]
      %v2370 = vld [vmem:[#allocation3 + $0x68] sm:$0xf]
      %v2371 = vld [vmem:[#allocation3 + $0x6c] sm:$0xff]
      %v2372 = vld [vmem:[#allocation3 + $0x74] sm:$0xf]
      %v2373 = vld [vmem:[#allocation3 + $0x78] sm:$0xff]
      %v2374 = vld [vmem:[#allocation3 + $0x80] sm:$0xf]
      %v2375 = vld [vmem:[#allocation3 + $0x84] sm:$0xff]
      %v2376 = vld [vmem:[#allocation3 + $0x8c] sm:$0xf]
      %v2377 = vld [vmem:[#allocation3 + $0x90] sm:$0xff]
      %v2378 = vld [vmem:[#allocation3 + $0x98] sm:$0xf]
      %v2379 = vld [vmem:[#allocation3 + $0x9c] sm:$0xff]
      %v2380 = vld [vmem:[#allocation3 + $0xa4] sm:$0xf]
      %v2381 = vld [vmem:[#allocation3 + $0xa8] sm:$0xff]
      %v2382 = vld [vmem:[#allocation3 + $0xb0] sm:$0xf]
      %v2383 = vld [vmem:[#allocation3 + $0xb4] sm:$0xff]
      %v2384 = vld [vmem:[#allocation3 + $0xbc] sm:$0xf]
      %v2385 = vld [vmem:[#allocation3 + $0xc0] sm:$0xff]
      %v2386 = vld [vmem:[#allocation3 + $0xc8] sm:$0xf]
      %v2387 = vld [vmem:[#allocation3 + $0xcc] sm:$0xff]
      %v2388 = vld [vmem:[#allocation3 + $0xd4] sm:$0xf]
      %v2389 = vld [vmem:[%s6 + $0x10] sm:$0xff]
      %v2390 = vld [vmem:[%s6 + $0x18] sm:$0xff]
      %2392 = vset.pattern.permute.xlu0 0
      %2393 = vperm.xlu0 %2392, %v2389
      %v2394 = vpop.permute.xlu0 %2393
      %2397 = vset.pattern.permute.xlu0 0
      %2398 = vperm.xlu0 %2397, %v2390
      %v2399 = vpop.permute.xlu0 %2398
      %v2403 = vunpack.c.l.b16 %v2351
      %v2404 = vunpack.c.h.b16 %v2351
      %v2405 = vunpack.c.l.b16 %v2352
      %v2406 = vunpack.c.h.b16 %v2352
      %v2407 = vpack.c.b16 %v2405, %v2403
      %v2408 = vpack.c.b16 %v2406, %v2404
      %v2446 = vunpack.c.l.b16 %v2353
      %v2447 = vunpack.c.h.b16 %v2353
      %v2448 = vunpack.c.l.b16 %v2354
      %v2449 = vunpack.c.l.b16 %v2355
      %v2450 = vunpack.c.h.b16 %v2355
      %v2451 = vunpack.c.l.b16 %v2356
      %v2452 = vunpack.c.l.b16 %v2357
      %v2453 = vunpack.c.h.b16 %v2357
      %v2454 = vunpack.c.l.b16 %v2358
      %v2455 = vunpack.c.l.b16 %v2359
      %v2456 = vunpack.c.h.b16 %v2359
      %v2457 = vunpack.c.l.b16 %v2360
      %v2458 = vunpack.c.l.b16 %v2361
      %v2459 = vunpack.c.h.b16 %v2361
      %v2460 = vunpack.c.l.b16 %v2362
      %v2461 = vunpack.c.l.b16 %v2363
      %v2462 = vunpack.c.h.b16 %v2363
      %v2463 = vunpack.c.l.b16 %v2364
      %v2464 = vunpack.c.l.b16 %v2365
      %v2465 = vunpack.c.h.b16 %v2365
      %v2466 = vunpack.c.l.b16 %v2366
      %v2467 = vunpack.c.l.b16 %v2367
      %v2468 = vunpack.c.h.b16 %v2367
      %v2469 = vunpack.c.l.b16 %v2368
      %v2470 = vunpack.c.l.b16 %v2369
      %v2471 = vunpack.c.h.b16 %v2369
      %v2472 = vunpack.c.l.b16 %v2370
      %v2473 = vunpack.c.l.b16 %v2371
      %v2474 = vunpack.c.h.b16 %v2371
      %v2475 = vunpack.c.l.b16 %v2372
      %v2476 = vunpack.c.l.b16 %v2373
      %v2477 = vunpack.c.h.b16 %v2373
      %v2478 = vunpack.c.l.b16 %v2374
      %v2479 = vunpack.c.l.b16 %v2375
      %v2480 = vunpack.c.h.b16 %v2375
      %v2481 = vunpack.c.l.b16 %v2376
      %v2482 = vunpack.c.l.b16 %v2377
      %v2483 = vunpack.c.h.b16 %v2377
      %v2484 = vunpack.c.l.b16 %v2378
      %v2485 = vunpack.c.l.b16 %v2379
      %v2486 = vunpack.c.h.b16 %v2379
      %v2487 = vunpack.c.l.b16 %v2380
      %v2488 = vunpack.c.l.b16 %v2381
      %v2489 = vunpack.c.h.b16 %v2381
      %v2490 = vunpack.c.l.b16 %v2382
      %v2491 = vunpack.c.l.b16 %v2383
      %v2492 = vunpack.c.h.b16 %v2383
      %v2493 = vunpack.c.l.b16 %v2384
      %v2494 = vunpack.c.l.b16 %v2385
      %v2495 = vunpack.c.h.b16 %v2385
      %v2496 = vunpack.c.l.b16 %v2386
      %v2497 = vunpack.c.l.b16 %v2387
      %v2498 = vunpack.c.h.b16 %v2387
      %v2499 = vunpack.c.l.b16 %v2388
      %v2500 = vpack.c.b16 %v2449, %v2446
      %v2501 = vpack.c.b16 %v2450, %v2447
      %v2502 = vpack.c.b16 %v2451, %v2448
      %v2503 = vpack.c.b16 %v2455, %v2452
      %v2504 = vpack.c.b16 %v2456, %v2453
      %v2505 = vpack.c.b16 %v2457, %v2454
      %v2506 = vpack.c.b16 %v2461, %v2458
      %v2507 = vpack.c.b16 %v2462, %v2459
      %v2508 = vpack.c.b16 %v2463, %v2460
      %v2509 = vpack.c.b16 %v2467, %v2464
      %v2510 = vpack.c.b16 %v2468, %v2465
      %v2511 = vpack.c.b16 %v2469, %v2466
      %v2512 = vpack.c.b16 %v2473, %v2470
      %v2513 = vpack.c.b16 %v2474, %v2471
      %v2514 = vpack.c.b16 %v2475, %v2472
      %v2515 = vpack.c.b16 %v2479, %v2476
      %v2516 = vpack.c.b16 %v2480, %v2477
      %v2517 = vpack.c.b16 %v2481, %v2478
      %v2518 = vpack.c.b16 %v2485, %v2482
      %v2519 = vpack.c.b16 %v2486, %v2483
      %v2520 = vpack.c.b16 %v2487, %v2484
      %v2521 = vpack.c.b16 %v2491, %v2488
      %v2522 = vpack.c.b16 %v2492, %v2489
      %v2523 = vpack.c.b16 %v2493, %v2490
      %v2524 = vpack.c.b16 %v2497, %v2494
      %v2525 = vpack.c.b16 %v2498, %v2495
      %v2526 = vpack.c.b16 %v2499, %v2496
      %v2555 = vsel %vm1032, %v2408, 0
      %2557 = vmatprep.subr.bf16.mxu0 %v2522
      %2558 = vmatpush1.bf16.msra.mxu0 %v2521
      %2559 = vmatprep.subr.bf16.mxu0 %v2519
      %2560 = vmatpush1.bf16.msra.mxu0 %v2518
      %2561 = vmatprep.subr.bf16.mxu0 %v2516
      %2562 = vmatpush1.bf16.msra.mxu0 %v2515
      %2563 = vmatprep.subr.bf16.mxu0 %v2513
      %2564 = vmatpush1.bf16.msra.mxu0 %v2512
      %2565 = vmatprep.subr.bf16.mxu0 %v2510
      %2566 = vmatpush1.bf16.msra.mxu0 %v2509
      %2567 = vmatprep.subr.bf16.mxu0 %v2507
      %2568 = vmatpush1.bf16.msra.mxu0 %v2506
      %2569 = vmatprep.subr.bf16.mxu0 %v2504
      %2570 = vmatpush1.bf16.msra.mxu0 %v2503
      %2571 = vmatprep.subr.bf16.mxu0 %v2501
      %2572 = vmatpush1.bf16.msra.mxu0 %v2500
      %2573 = vmatprep.subr.bf16.mxu0 0
      %2574 = vmatpush2.bf16.msra.mxu0 0
      %2575 = vmatprep.subr.bf16.mxu0 0
      %2576 = vmatpush2.bf16.msra.mxu0 0
      %2577 = vmatprep.subr.bf16.mxu0 0
      %2578 = vmatpush2.bf16.msra.mxu0 0
      %2579 = vmatprep.subr.bf16.mxu0 0
      %2580 = vmatpush2.bf16.msra.mxu0 0
      %2581 = vmatprep.subr.bf16.mxu0 0
      %2582 = vmatpush2.bf16.msra.mxu0 0
      %2583 = vmatprep.subr.bf16.mxu0 0
      %2584 = vmatpush2.bf16.msra.mxu0 0
      %2585 = vmatprep.subr.bf16.mxu0 0
      %2586 = vmatpush2.bf16.msra.mxu0 0
      %2587 = vmatprep.subr.bf16.mxu0 %v2525
      %2588 = vmatpush2.bf16.msra.mxu0 %v2524
      %2589 = vmatprep.mubr.bf16.mxu0 %v2555
      %2590 = vmatmul.mubr.bf16.gmra.mxu0 %v2407
      %v2591 = vpop.f32.mrf.mxu0
      %v2592 = vadd.f32 %v2394, %v2591
      %v2593 = vpop.f32.mrf.mxu0
      %v2594 = vadd.f32 %v2394, %v2593
      %v2595 = vpop.f32.mrf.mxu0
      %v2596 = vadd.f32 %v2399, %v2595
      %v2597 = vpop.f32.mrf.mxu0
      %v2598 = vadd.f32 %v2399, %v2597
      %2599 = vdwg.mxu0
      %2600 = vmatprep.subr.bf16.mxu0 0
      %2601 = vmatpush1.bf16.msra.mxu0 %v2523
      %2602 = vmatprep.subr.bf16.mxu0 0
      %2603 = vmatpush1.bf16.msra.mxu0 %v2520
      %2604 = vmatprep.subr.bf16.mxu0 0
      %2605 = vmatpush1.bf16.msra.mxu0 %v2517
      %2606 = vmatprep.subr.bf16.mxu0 0
      %2607 = vmatpush1.bf16.msra.mxu0 %v2514
      %2608 = vmatprep.subr.bf16.mxu0 0
      %2609 = vmatpush1.bf16.msra.mxu0 %v2511
      %2610 = vmatprep.subr.bf16.mxu0 0
      %2611 = vmatpush1.bf16.msra.mxu0 %v2508
      %2612 = vmatprep.subr.bf16.mxu0 0
      %2613 = vmatpush1.bf16.msra.mxu0 %v2505
      %2614 = vmatprep.subr.bf16.mxu0 0
      %2615 = vmatpush1.bf16.msra.mxu0 %v2502
      %2616 = vmatprep.subr.bf16.mxu0 0
      %2617 = vmatpush2.bf16.msra.mxu0 0
      %2618 = vmatprep.subr.bf16.mxu0 0
      %2619 = vmatpush2.bf16.msra.mxu0 0
      %2620 = vmatprep.subr.bf16.mxu0 0
      %2621 = vmatpush2.bf16.msra.mxu0 0
      %2622 = vmatprep.subr.bf16.mxu0 0
      %2623 = vmatpush2.bf16.msra.mxu0 0
      %2624 = vmatprep.subr.bf16.mxu0 0
      %2625 = vmatpush2.bf16.msra.mxu0 0
      %2626 = vmatprep.subr.bf16.mxu0 0
      %2627 = vmatpush2.bf16.msra.mxu0 0
      %2628 = vmatprep.subr.bf16.mxu0 0
      %2629 = vmatpush2.bf16.msra.mxu0 0
      %2630 = vmatprep.subr.bf16.mxu0 0
      %2631 = vmatpush2.bf16.msra.mxu0 %v2526
      %2632 = vmatprep.mubr.bf16.mxu0 %v2555
      %2633 = vmatmul.mubr.bf16.gmra.mxu0 %v2407
      %v2634 = vpop.f32.mrf.mxu0
      %v2635 = vadd.f32 %v2394, %v2634
      %v2636 = vpop.f32.mrf.mxu0
      %v2637 = vpop.f32.mrf.mxu0
      %v2638 = vadd.f32 %v2399, %v2637
      %v2639 = vpop.f32.mrf.mxu0
      %2640 = vdwg.mxu0
      %vm2641 = vcmp.ge.f32.partialorder %v2592, 0.0
      %vm2642 = vcmp.ge.f32.partialorder %v2594, 0.0
      %vm2643 = vcmp.ge.f32.partialorder %v2635, 0.0
      %vm2644 = vcmp.ge.f32.partialorder %v2596, 0.0
      %vm2645 = vcmp.ge.f32.partialorder %v2598, 0.0
      %vm2646 = vcmp.ge.f32.partialorder %v2638, 0.0
      %v2647 = vmul.f32 %v2592, 0.2
      %v2648 = vmul.f32 %v2594, 0.2
      %v2649 = vmul.f32 %v2635, 0.2
      %v2650 = vmul.f32 %v2596, 0.2
      %v2651 = vmul.f32 %v2598, 0.2
      %v2652 = vmul.f32 %v2638, 0.2
      %v2653 = vsel %vm2641, %v2592, %v2647
      %v2654 = vsel %vm2642, %v2594, %v2648
      %v2655 = vsel %vm2643, %v2635, %v2649
      %v2656 = vsel %vm2644, %v2596, %v2650
      %v2657 = vsel %vm2645, %v2598, %v2651
      %v2658 = vsel %vm2646, %v2638, %v2652
      %v2659 = vmul.f32 %v2653, 1.4142135
      %v2660 = vmul.f32 %v2654, 1.4142135
      %v2661 = vmul.f32 %v2655, 1.4142135
      %v2662 = vmul.f32 %v2656, 1.4142135
      %v2663 = vmul.f32 %v2657, 1.4142135
      %v2664 = vmul.f32 %v2658, 1.4142135
      %v2665 = vadd.f32 %v2659, %v2028
      %v2666 = vadd.f32 %v2660, %v2029
      %v2667 = vadd.f32 %v2661, %v2030
      %v2668 = vadd.f32 %v2662, %v2031
      %v2669 = vadd.f32 %v2663, %v2032
      %v2670 = vadd.f32 %v2664, %v2033
      %v2671 = vpack.c.bf16 %v2668, %v2665
      %v2672 = vpack.c.bf16 %v2669, %v2666
      %v2673 = vpack.c.bf16 %v2670, %v2667
      %v2677 = vunpack.c.l.b16 %v2671
      %v2678 = vunpack.c.l.b16 %v2672
      %v2679 = vunpack.c.l.b16 %v2673
      %v2680 = vunpack.c.h.b16 %v2671
      %v2681 = vunpack.c.h.b16 %v2672
      %v2682 = vunpack.c.h.b16 %v2673
      %v2683 = vpack.c.b16 %v2678, %v2677
      %v2684 = vpack.c.b16 %v2679, %v2679
      %v2685 = vpack.c.b16 %v2681, %v2680
      %v2686 = vpack.c.b16 %v2682, %v2682
      %2691 = vst [vmem:[#allocation5 + $0x18] sm:$0xff] %v2683
      %2692 = vst [vmem:[#allocation5 + $0x20] sm:$0xf] %v2684
      %2693 = vst [vmem:[#allocation5 + $0x24] sm:$0xff] %v2685
      %2694 = vst [vmem:[#allocation5 + $0x2c] sm:$0xf] %v2686
      %v2695 = vld [vmem:[#allocation4 + $0x40] sm:$0xff]
      %v2696 = vld [vmem:[#allocation4 + $0x48] sm:$0xf]
      %v2697 = vld [vmem:[#allocation4 + $0x50] sm:$0xff]
      %v2698 = vld [vmem:[#allocation4 + $0x58] sm:$0xf]
      %2699 = vst [vmem:[#allocation3] sm:$0xff] %v2695
      %2700 = vst [vmem:[#allocation3 + $0x8] sm:$0xf] %v2696
      %2701 = vst [vmem:[#allocation3 + $0xc] sm:$0xff] %v2697
      %2702 = vst [vmem:[#allocation3 + $0x14] sm:$0xf] %v2698
      %v2703 = vld [vmem:[#allocation4 + $0x40] sm:$0xff]
      %v2704 = vld [vmem:[#allocation4 + $0x48] sm:$0xff]
      %v2705 = vld [vmem:[#allocation4 + $0x50] sm:$0xff]
      %v2706 = vld [vmem:[#allocation4 + $0x58] sm:$0xff]
      %2711 = vrot.lane.b32.xlu0 %v2703, 127
      %v2712 = vpop.permute.xlu0 %2711
      %2713 = vrot.lane.b32.xlu0 %v2704, 127
      %v2714 = vpop.permute.xlu0 %2713
      %2715 = vrot.lane.b32.xlu0 %v2705, 127
      %v2716 = vpop.permute.xlu0 %2715
      %2717 = vrot.lane.b32.xlu0 %v2706, 127
      %v2718 = vpop.permute.xlu0 %2717
      %v2719 = vrot.slane %v2712, 4
      %v2720 = vrot.slane %v2714, 4
      %v2721 = vrot.slane %v2716, 4
      %v2722 = vrot.slane %v2718, 4
      %v2723 = vsel %vm522, %v2719, %v2720
      %v2724 = vsel %vm524, %v2712, %v2723
      %v2725 = vsel %vm524, %v2714, %v2720
      %v2726 = vsel %vm522, %v2721, %v2722
      %v2727 = vsel %vm524, %v2716, %v2726
      %v2728 = vsel %vm524, %v2718, %v2722
      %2733 = vst [vmem:[#allocation3 + $0x18] sm:$0xff] %v2724
      %2734 = vst [vmem:[#allocation3 + $0x20] sm:$0xf] %v2725
      %2735 = vst [vmem:[#allocation3 + $0x24] sm:$0xff] %v2727
      %2736 = vst [vmem:[#allocation3 + $0x2c] sm:$0xf] %v2728
      %v2737 = vld [vmem:[#allocation4 + $0x40] sm:$0xff]
      %v2738 = vld [vmem:[#allocation4 + $0x48] sm:$0xff]
      %v2739 = vld [vmem:[#allocation4 + $0x50] sm:$0xff]
      %v2740 = vld [vmem:[#allocation4 + $0x58] sm:$0xff]
      %2745 = vrot.lane.b32.xlu0 %v2737, 126
      %v2746 = vpop.permute.xlu0 %2745
      %2747 = vrot.lane.b32.xlu0 %v2738, 126
      %v2748 = vpop.permute.xlu0 %2747
      %2749 = vrot.lane.b32.xlu0 %v2739, 126
      %v2750 = vpop.permute.xlu0 %2749
      %2751 = vrot.lane.b32.xlu0 %v2740, 126
      %v2752 = vpop.permute.xlu0 %2751
      %v2753 = vrot.slane %v2746, 4
      %v2754 = vrot.slane %v2748, 4
      %v2755 = vrot.slane %v2750, 4
      %v2756 = vrot.slane %v2752, 4
      %v2757 = vsel %vm522, %v2753, %v2754
      %v2758 = vsel %vm559, %v2746, %v2757
      %v2759 = vsel %vm559, %v2748, %v2754
      %v2760 = vsel %vm522, %v2755, %v2756
      %v2761 = vsel %vm559, %v2750, %v2760
      %v2762 = vsel %vm559, %v2752, %v2756
      %2767 = vst [vmem:[#allocation3 + $0x30] sm:$0xff] %v2758
      %2768 = vst [vmem:[#allocation3 + $0x38] sm:$0xf] %v2759
      %2769 = vst [vmem:[#allocation3 + $0x3c] sm:$0xff] %v2761
      %2770 = vst [vmem:[#allocation3 + $0x44] sm:$0xf] %v2762
      %v2771 = vld [vmem:[#allocation4 + $0x40] sm:$0xff]
      %v2772 = vld [vmem:[#allocation4 + $0x48] sm:$0xff]
      %v2773 = vld [vmem:[#allocation4 + $0x50] sm:$0xff]
      %v2774 = vld [vmem:[#allocation4 + $0x58] sm:$0xff]
      %2779 = vrot.lane.b32.xlu0 %v2771, 110
      %v2780 = vpop.permute.xlu0 %2779
      %2781 = vrot.lane.b32.xlu0 %v2772, 110
      %v2782 = vpop.permute.xlu0 %2781
      %2783 = vrot.lane.b32.xlu0 %v2773, 110
      %v2784 = vpop.permute.xlu0 %2783
      %2785 = vrot.lane.b32.xlu0 %v2774, 110
      %v2786 = vpop.permute.xlu0 %2785
      %v2787 = vrot.slane %v2780, 4
      %v2788 = vrot.slane %v2782, 4
      %v2789 = vrot.slane %v2784, 4
      %v2790 = vrot.slane %v2786, 4
      %v2791 = vsel %vm522, %v2787, %v2788
      %v2792 = vsel %vm594, %v2780, %v2791
      %v2793 = vsel %vm594, %v2782, %v2788
      %v2794 = vsel %vm522, %v2789, %v2790
      %v2795 = vsel %vm594, %v2784, %v2794
      %v2796 = vsel %vm594, %v2786, %v2790
      %2801 = vst [vmem:[#allocation3 + $0x48] sm:$0xff] %v2792
      %2802 = vst [vmem:[#allocation3 + $0x50] sm:$0xf] %v2793
      %2803 = vst [vmem:[#allocation3 + $0x54] sm:$0xff] %v2795
      %2804 = vst [vmem:[#allocation3 + $0x5c] sm:$0xf] %v2796
      %v2805 = vld [vmem:[#allocation4 + $0x40] sm:$0xff]
      %v2806 = vld [vmem:[#allocation4 + $0x48] sm:$0xff]
      %v2807 = vld [vmem:[#allocation4 + $0x50] sm:$0xff]
      %v2808 = vld [vmem:[#allocation4 + $0x58] sm:$0xff]
      %2813 = vrot.lane.b32.xlu0 %v2805, 109
      %v2814 = vpop.permute.xlu0 %2813
      %2815 = vrot.lane.b32.xlu0 %v2806, 109
      %v2816 = vpop.permute.xlu0 %2815
      %2817 = vrot.lane.b32.xlu0 %v2807, 109
      %v2818 = vpop.permute.xlu0 %2817
      %2819 = vrot.lane.b32.xlu0 %v2808, 109
      %v2820 = vpop.permute.xlu0 %2819
      %v2821 = vrot.slane %v2814, 4
      %v2822 = vrot.slane %v2816, 4
      %v2823 = vrot.slane %v2818, 4
      %v2824 = vrot.slane %v2820, 4
      %v2825 = vsel %vm522, %v2821, %v2822
      %v2826 = vsel %vm629, %v2814, %v2825
      %v2827 = vsel %vm629, %v2816, %v2822
      %v2828 = vsel %vm522, %v2823, %v2824
      %v2829 = vsel %vm629, %v2818, %v2828
      %v2830 = vsel %vm629, %v2820, %v2824
      %2835 = vst [vmem:[#allocation3 + $0x60] sm:$0xff] %v2826
      %2836 = vst [vmem:[#allocation3 + $0x68] sm:$0xf] %v2827
      %2837 = vst [vmem:[#allocation3 + $0x6c] sm:$0xff] %v2829
      %2838 = vst [vmem:[#allocation3 + $0x74] sm:$0xf] %v2830
      %v2839 = vld [vmem:[#allocation4 + $0x40] sm:$0xff]
      %v2840 = vld [vmem:[#allocation4 + $0x48] sm:$0xff]
      %v2841 = vld [vmem:[#allocation4 + $0x50] sm:$0xff]
      %v2842 = vld [vmem:[#allocation4 + $0x58] sm:$0xff]
      %2847 = vrot.lane.b32.xlu0 %v2839, 108
      %v2848 = vpop.permute.xlu0 %2847
      %2849 = vrot.lane.b32.xlu0 %v2840, 108
      %v2850 = vpop.permute.xlu0 %2849
      %2851 = vrot.lane.b32.xlu0 %v2841, 108
      %v2852 = vpop.permute.xlu0 %2851
      %2853 = vrot.lane.b32.xlu0 %v2842, 108
      %v2854 = vpop.permute.xlu0 %2853
      %v2855 = vrot.slane %v2848, 4
      %v2856 = vrot.slane %v2850, 4
      %v2857 = vrot.slane %v2852, 4
      %v2858 = vrot.slane %v2854, 4
      %v2859 = vsel %vm522, %v2855, %v2856
      %v2860 = vsel %vm664, %v2848, %v2859
      %v2861 = vsel %vm664, %v2850, %v2856
      %v2862 = vsel %vm522, %v2857, %v2858
      %v2863 = vsel %vm664, %v2852, %v2862
      %v2864 = vsel %vm664, %v2854, %v2858
      %2869 = vst [vmem:[#allocation3 + $0x78] sm:$0xff] %v2860
      %2870 = vst [vmem:[#allocation3 + $0x80] sm:$0xf] %v2861
      %2871 = vst [vmem:[#allocation3 + $0x84] sm:$0xff] %v2863
      %2872 = vst [vmem:[#allocation3 + $0x8c] sm:$0xf] %v2864
      %v2873 = vld [vmem:[#allocation4 + $0x40] sm:$0xff]
      %v2874 = vld [vmem:[#allocation4 + $0x48] sm:$0xff]
      %v2875 = vld [vmem:[#allocation4 + $0x50] sm:$0xff]
      %v2876 = vld [vmem:[#allocation4 + $0x58] sm:$0xff]
      %2881 = vrot.lane.b32.xlu0 %v2873, 92
      %v2882 = vpop.permute.xlu0 %2881
      %2883 = vrot.lane.b32.xlu0 %v2874, 92
      %v2884 = vpop.permute.xlu0 %2883
      %2885 = vrot.lane.b32.xlu0 %v2875, 92
      %v2886 = vpop.permute.xlu0 %2885
      %2887 = vrot.lane.b32.xlu0 %v2876, 92
      %v2888 = vpop.permute.xlu0 %2887
      %v2889 = vrot.slane %v2882, 4
      %v2890 = vrot.slane %v2884, 4
      %v2891 = vrot.slane %v2886, 4
      %v2892 = vrot.slane %v2888, 4
      %v2893 = vsel %vm522, %v2889, %v2890
      %v2894 = vsel %vm699, %v2882, %v2893
      %v2895 = vsel %vm699, %v2884, %v2890
      %v2896 = vsel %vm522, %v2891, %v2892
      %v2897 = vsel %vm699, %v2886, %v2896
      %v2898 = vsel %vm699, %v2888, %v2892
      %2903 = vst [vmem:[#allocation3 + $0x90] sm:$0xff] %v2894
      %2904 = vst [vmem:[#allocation3 + $0x98] sm:$0xf] %v2895
      %2905 = vst [vmem:[#allocation3 + $0x9c] sm:$0xff] %v2897
      %2906 = vst [vmem:[#allocation3 + $0xa4] sm:$0xf] %v2898
      %v2907 = vld [vmem:[#allocation4 + $0x40] sm:$0xff]
      %v2908 = vld [vmem:[#allocation4 + $0x48] sm:$0xff]
      %v2909 = vld [vmem:[#allocation4 + $0x50] sm:$0xff]
      %v2910 = vld [vmem:[#allocation4 + $0x58] sm:$0xff]
      %2915 = vrot.lane.b32.xlu0 %v2907, 91
      %v2916 = vpop.permute.xlu0 %2915
      %2917 = vrot.lane.b32.xlu0 %v2908, 91
      %v2918 = vpop.permute.xlu0 %2917
      %2919 = vrot.lane.b32.xlu0 %v2909, 91
      %v2920 = vpop.permute.xlu0 %2919
      %2921 = vrot.lane.b32.xlu0 %v2910, 91
      %v2922 = vpop.permute.xlu0 %2921
      %v2923 = vrot.slane %v2916, 4
      %v2924 = vrot.slane %v2918, 4
      %v2925 = vrot.slane %v2920, 4
      %v2926 = vrot.slane %v2922, 4
      %v2927 = vsel %vm522, %v2923, %v2924
      %v2928 = vsel %vm734, %v2916, %v2927
      %v2929 = vsel %vm734, %v2918, %v2924
      %v2930 = vsel %vm522, %v2925, %v2926
      %v2931 = vsel %vm734, %v2920, %v2930
      %v2932 = vsel %vm734, %v2922, %v2926
      %2937 = vst [vmem:[#allocation3 + $0xa8] sm:$0xff] %v2928
      %2938 = vst [vmem:[#allocation3 + $0xb0] sm:$0xf] %v2929
      %2939 = vst [vmem:[#allocation3 + $0xb4] sm:$0xff] %v2931
      %2940 = vst [vmem:[#allocation3 + $0xbc] sm:$0xf] %v2932
      %v2941 = vld [vmem:[#allocation4 + $0x40] sm:$0xff]
      %v2942 = vld [vmem:[#allocation4 + $0x48] sm:$0xff]
      %v2943 = vld [vmem:[#allocation4 + $0x50] sm:$0xff]
      %v2944 = vld [vmem:[#allocation4 + $0x58] sm:$0xff]
      %2949 = vrot.lane.b32.xlu0 %v2941, 90
      %v2950 = vpop.permute.xlu0 %2949
      %2951 = vrot.lane.b32.xlu0 %v2942, 90
      %v2952 = vpop.permute.xlu0 %2951
      %2953 = vrot.lane.b32.xlu0 %v2943, 90
      %v2954 = vpop.permute.xlu0 %2953
      %2955 = vrot.lane.b32.xlu0 %v2944, 90
      %v2956 = vpop.permute.xlu0 %2955
      %v2957 = vrot.slane %v2950, 4
      %v2958 = vrot.slane %v2952, 4
      %v2959 = vrot.slane %v2954, 4
      %v2960 = vrot.slane %v2956, 4
      %v2961 = vsel %vm522, %v2957, %v2958
      %v2962 = vsel %vm769, %v2950, %v2961
      %v2963 = vsel %vm769, %v2952, %v2958
      %v2964 = vsel %vm522, %v2959, %v2960
      %v2965 = vsel %vm769, %v2954, %v2964
      %v2966 = vsel %vm769, %v2956, %v2960
      %2971 = vst [vmem:[#allocation3 + $0xc0] sm:$0xff] %v2962
      %2972 = vst [vmem:[#allocation3 + $0xc8] sm:$0xf] %v2963
      %2973 = vst [vmem:[#allocation3 + $0xcc] sm:$0xff] %v2965
      %2974 = vst [vmem:[#allocation3 + $0xd4] sm:$0xf] %v2966
      %s2975 = scalar_lea.vmem %s438, 32
      %v2976 = vld [vmem:[%s2975] sm:$0xff]
      %v2977 = vld [vmem:[%s2975 + $0x8] sm:$0xff]
      %v2978 = vld [vmem:[#allocation3] sm:$0xff]
      %v2979 = vld [vmem:[#allocation3 + $0x8] sm:$0xf]
      %v2980 = vld [vmem:[#allocation3 + $0xc] sm:$0xff]
      %v2981 = vld [vmem:[#allocation3 + $0x14] sm:$0xf]
      %v2982 = vld [vmem:[#allocation3 + $0x18] sm:$0xff]
      %v2983 = vld [vmem:[#allocation3 + $0x20] sm:$0xf]
      %v2984 = vld [vmem:[#allocation3 + $0x24] sm:$0xff]
      %v2985 = vld [vmem:[#allocation3 + $0x2c] sm:$0xf]
      %v2986 = vld [vmem:[#allocation3 + $0x30] sm:$0xff]
      %v2987 = vld [vmem:[#allocation3 + $0x38] sm:$0xf]
      %v2988 = vld [vmem:[#allocation3 + $0x3c] sm:$0xff]
      %v2989 = vld [vmem:[#allocation3 + $0x44] sm:$0xf]
      %v2990 = vld [vmem:[#allocation3 + $0x48] sm:$0xff]
      %v2991 = vld [vmem:[#allocation3 + $0x50] sm:$0xf]
      %v2992 = vld [vmem:[#allocation3 + $0x54] sm:$0xff]
      %v2993 = vld [vmem:[#allocation3 + $0x5c] sm:$0xf]
      %v2994 = vld [vmem:[#allocation3 + $0x60] sm:$0xff]
      %v2995 = vld [vmem:[#allocation3 + $0x68] sm:$0xf]
      %v2996 = vld [vmem:[#allocation3 + $0x6c] sm:$0xff]
      %v2997 = vld [vmem:[#allocation3 + $0x74] sm:$0xf]
      %v2998 = vld [vmem:[#allocation3 + $0x78] sm:$0xff]
      %v2999 = vld [vmem:[#allocation3 + $0x80] sm:$0xf]
      %v3000 = vld [vmem:[#allocation3 + $0x84] sm:$0xff]
      %v3001 = vld [vmem:[#allocation3 + $0x8c] sm:$0xf]
      %v3002 = vld [vmem:[#allocation3 + $0x90] sm:$0xff]
      %v3003 = vld [vmem:[#allocation3 + $0x98] sm:$0xf]
      %v3004 = vld [vmem:[#allocation3 + $0x9c] sm:$0xff]
      %v3005 = vld [vmem:[#allocation3 + $0xa4] sm:$0xf]
      %v3006 = vld [vmem:[#allocation3 + $0xa8] sm:$0xff]
      %v3007 = vld [vmem:[#allocation3 + $0xb0] sm:$0xf]
      %v3008 = vld [vmem:[#allocation3 + $0xb4] sm:$0xff]
      %v3009 = vld [vmem:[#allocation3 + $0xbc] sm:$0xf]
      %v3010 = vld [vmem:[#allocation3 + $0xc0] sm:$0xff]
      %v3011 = vld [vmem:[#allocation3 + $0xc8] sm:$0xf]
      %v3012 = vld [vmem:[#allocation3 + $0xcc] sm:$0xff]
      %v3013 = vld [vmem:[#allocation3 + $0xd4] sm:$0xf]
      %v3014 = vld [vmem:[%s6 + $0x20] sm:$0xff]
      %v3015 = vld [vmem:[%s6 + $0x28] sm:$0xff]
      %3017 = vset.pattern.permute.xlu0 0
      %3018 = vperm.xlu0 %3017, %v3014
      %v3019 = vpop.permute.xlu0 %3018
      %3022 = vset.pattern.permute.xlu0 0
      %3023 = vperm.xlu0 %3022, %v3015
      %v3024 = vpop.permute.xlu0 %3023
      %v3028 = vunpack.c.l.b16 %v2976
      %v3029 = vunpack.c.h.b16 %v2976
      %v3030 = vunpack.c.l.b16 %v2977
      %v3031 = vunpack.c.h.b16 %v2977
      %v3032 = vpack.c.b16 %v3030, %v3028
      %v3033 = vpack.c.b16 %v3031, %v3029
      %v3071 = vunpack.c.l.b16 %v2978
      %v3072 = vunpack.c.h.b16 %v2978
      %v3073 = vunpack.c.l.b16 %v2979
      %v3074 = vunpack.c.l.b16 %v2980
      %v3075 = vunpack.c.h.b16 %v2980
      %v3076 = vunpack.c.l.b16 %v2981
      %v3077 = vunpack.c.l.b16 %v2982
      %v3078 = vunpack.c.h.b16 %v2982
      %v3079 = vunpack.c.l.b16 %v2983
      %v3080 = vunpack.c.l.b16 %v2984
      %v3081 = vunpack.c.h.b16 %v2984
      %v3082 = vunpack.c.l.b16 %v2985
      %v3083 = vunpack.c.l.b16 %v2986
      %v3084 = vunpack.c.h.b16 %v2986
      %v3085 = vunpack.c.l.b16 %v2987
      %v3086 = vunpack.c.l.b16 %v2988
      %v3087 = vunpack.c.h.b16 %v2988
      %v3088 = vunpack.c.l.b16 %v2989
      %v3089 = vunpack.c.l.b16 %v2990
      %v3090 = vunpack.c.h.b16 %v2990
      %v3091 = vunpack.c.l.b16 %v2991
      %v3092 = vunpack.c.l.b16 %v2992
      %v3093 = vunpack.c.h.b16 %v2992
      %v3094 = vunpack.c.l.b16 %v2993
      %v3095 = vunpack.c.l.b16 %v2994
      %v3096 = vunpack.c.h.b16 %v2994
      %v3097 = vunpack.c.l.b16 %v2995
      %v3098 = vunpack.c.l.b16 %v2996
      %v3099 = vunpack.c.h.b16 %v2996
      %v3100 = vunpack.c.l.b16 %v2997
      %v3101 = vunpack.c.l.b16 %v2998
      %v3102 = vunpack.c.h.b16 %v2998
      %v3103 = vunpack.c.l.b16 %v2999
      %v3104 = vunpack.c.l.b16 %v3000
      %v3105 = vunpack.c.h.b16 %v3000
      %v3106 = vunpack.c.l.b16 %v3001
      %v3107 = vunpack.c.l.b16 %v3002
      %v3108 = vunpack.c.h.b16 %v3002
      %v3109 = vunpack.c.l.b16 %v3003
      %v3110 = vunpack.c.l.b16 %v3004
      %v3111 = vunpack.c.h.b16 %v3004
      %v3112 = vunpack.c.l.b16 %v3005
      %v3113 = vunpack.c.l.b16 %v3006
      %v3114 = vunpack.c.h.b16 %v3006
      %v3115 = vunpack.c.l.b16 %v3007
      %v3116 = vunpack.c.l.b16 %v3008
      %v3117 = vunpack.c.h.b16 %v3008
      %v3118 = vunpack.c.l.b16 %v3009
      %v3119 = vunpack.c.l.b16 %v3010
      %v3120 = vunpack.c.h.b16 %v3010
      %v3121 = vunpack.c.l.b16 %v3011
      %v3122 = vunpack.c.l.b16 %v3012
      %v3123 = vunpack.c.h.b16 %v3012
      %v3124 = vunpack.c.l.b16 %v3013
      %v3125 = vpack.c.b16 %v3074, %v3071
      %v3126 = vpack.c.b16 %v3075, %v3072
      %v3127 = vpack.c.b16 %v3076, %v3073
      %v3128 = vpack.c.b16 %v3080, %v3077
      %v3129 = vpack.c.b16 %v3081, %v3078
      %v3130 = vpack.c.b16 %v3082, %v3079
      %v3131 = vpack.c.b16 %v3086, %v3083
      %v3132 = vpack.c.b16 %v3087, %v3084
      %v3133 = vpack.c.b16 %v3088, %v3085
      %v3134 = vpack.c.b16 %v3092, %v3089
      %v3135 = vpack.c.b16 %v3093, %v3090
      %v3136 = vpack.c.b16 %v3094, %v3091
      %v3137 = vpack.c.b16 %v3098, %v3095
      %v3138 = vpack.c.b16 %v3099, %v3096
      %v3139 = vpack.c.b16 %v3100, %v3097
      %v3140 = vpack.c.b16 %v3104, %v3101
      %v3141 = vpack.c.b16 %v3105, %v3102
      %v3142 = vpack.c.b16 %v3106, %v3103
      %v3143 = vpack.c.b16 %v3110, %v3107
      %v3144 = vpack.c.b16 %v3111, %v3108
      %v3145 = vpack.c.b16 %v3112, %v3109
      %v3146 = vpack.c.b16 %v3116, %v3113
      %v3147 = vpack.c.b16 %v3117, %v3114
      %v3148 = vpack.c.b16 %v3118, %v3115
      %v3149 = vpack.c.b16 %v3122, %v3119
      %v3150 = vpack.c.b16 %v3123, %v3120
      %v3151 = vpack.c.b16 %v3124, %v3121
      %v3180 = vsel %vm1032, %v3033, 0
      %3182 = vmatprep.subr.bf16.mxu0 %v3147
      %3183 = vmatpush1.bf16.msra.mxu0 %v3146
      %3184 = vmatprep.subr.bf16.mxu0 %v3144
      %3185 = vmatpush1.bf16.msra.mxu0 %v3143
      %3186 = vmatprep.subr.bf16.mxu0 %v3141
      %3187 = vmatpush1.bf16.msra.mxu0 %v3140
      %3188 = vmatprep.subr.bf16.mxu0 %v3138
      %3189 = vmatpush1.bf16.msra.mxu0 %v3137
      %3190 = vmatprep.subr.bf16.mxu0 %v3135
      %3191 = vmatpush1.bf16.msra.mxu0 %v3134
      %3192 = vmatprep.subr.bf16.mxu0 %v3132
      %3193 = vmatpush1.bf16.msra.mxu0 %v3131
      %3194 = vmatprep.subr.bf16.mxu0 %v3129
      %3195 = vmatpush1.bf16.msra.mxu0 %v3128
      %3196 = vmatprep.subr.bf16.mxu0 %v3126
      %3197 = vmatpush1.bf16.msra.mxu0 %v3125
      %3198 = vmatprep.subr.bf16.mxu0 0
      %3199 = vmatpush2.bf16.msra.mxu0 0
      %3200 = vmatprep.subr.bf16.mxu0 0
      %3201 = vmatpush2.bf16.msra.mxu0 0
      %3202 = vmatprep.subr.bf16.mxu0 0
      %3203 = vmatpush2.bf16.msra.mxu0 0
      %3204 = vmatprep.subr.bf16.mxu0 0
      %3205 = vmatpush2.bf16.msra.mxu0 0
      %3206 = vmatprep.subr.bf16.mxu0 0
      %3207 = vmatpush2.bf16.msra.mxu0 0
      %3208 = vmatprep.subr.bf16.mxu0 0
      %3209 = vmatpush2.bf16.msra.mxu0 0
      %3210 = vmatprep.subr.bf16.mxu0 0
      %3211 = vmatpush2.bf16.msra.mxu0 0
      %3212 = vmatprep.subr.bf16.mxu0 %v3150
      %3213 = vmatpush2.bf16.msra.mxu0 %v3149
      %3214 = vmatprep.mubr.bf16.mxu0 %v3180
      %3215 = vmatmul.mubr.bf16.gmra.mxu0 %v3032
      %v3216 = vpop.f32.mrf.mxu0
      %v3217 = vadd.f32 %v3019, %v3216
      %v3218 = vpop.f32.mrf.mxu0
      %v3219 = vadd.f32 %v3019, %v3218
      %v3220 = vpop.f32.mrf.mxu0
      %v3221 = vadd.f32 %v3024, %v3220
      %v3222 = vpop.f32.mrf.mxu0
      %v3223 = vadd.f32 %v3024, %v3222
      %3224 = vdwg.mxu0
      %3225 = vmatprep.subr.bf16.mxu0 0
      %3226 = vmatpush1.bf16.msra.mxu0 %v3148
      %3227 = vmatprep.subr.bf16.mxu0 0
      %3228 = vmatpush1.bf16.msra.mxu0 %v3145
      %3229 = vmatprep.subr.bf16.mxu0 0
      %3230 = vmatpush1.bf16.msra.mxu0 %v3142
      %3231 = vmatprep.subr.bf16.mxu0 0
      %3232 = vmatpush1.bf16.msra.mxu0 %v3139
      %3233 = vmatprep.subr.bf16.mxu0 0
      %3234 = vmatpush1.bf16.msra.mxu0 %v3136
      %3235 = vmatprep.subr.bf16.mxu0 0
      %3236 = vmatpush1.bf16.msra.mxu0 %v3133
      %3237 = vmatprep.subr.bf16.mxu0 0
      %3238 = vmatpush1.bf16.msra.mxu0 %v3130
      %3239 = vmatprep.subr.bf16.mxu0 0
      %3240 = vmatpush1.bf16.msra.mxu0 %v3127
      %3241 = vmatprep.subr.bf16.mxu0 0
      %3242 = vmatpush2.bf16.msra.mxu0 0
      %3243 = vmatprep.subr.bf16.mxu0 0
      %3244 = vmatpush2.bf16.msra.mxu0 0
      %3245 = vmatprep.subr.bf16.mxu0 0
      %3246 = vmatpush2.bf16.msra.mxu0 0
      %3247 = vmatprep.subr.bf16.mxu0 0
      %3248 = vmatpush2.bf16.msra.mxu0 0
      %3249 = vmatprep.subr.bf16.mxu0 0
      %3250 = vmatpush2.bf16.msra.mxu0 0
      %3251 = vmatprep.subr.bf16.mxu0 0
      %3252 = vmatpush2.bf16.msra.mxu0 0
      %3253 = vmatprep.subr.bf16.mxu0 0
      %3254 = vmatpush2.bf16.msra.mxu0 0
      %3255 = vmatprep.subr.bf16.mxu0 0
      %3256 = vmatpush2.bf16.msra.mxu0 %v3151
      %3257 = vmatprep.mubr.bf16.mxu0 %v3180
      %3258 = vmatmul.mubr.bf16.gmra.mxu0 %v3032
      %v3259 = vpop.f32.mrf.mxu0
      %v3260 = vadd.f32 %v3019, %v3259
      %v3261 = vpop.f32.mrf.mxu0
      %v3262 = vpop.f32.mrf.mxu0
      %v3263 = vadd.f32 %v3024, %v3262
      %v3264 = vpop.f32.mrf.mxu0
      %3265 = vdwg.mxu0
      %vm3266 = vcmp.ge.f32.partialorder %v3217, 0.0
      %vm3267 = vcmp.ge.f32.partialorder %v3219, 0.0
      %vm3268 = vcmp.ge.f32.partialorder %v3260, 0.0
      %vm3269 = vcmp.ge.f32.partialorder %v3221, 0.0
      %vm3270 = vcmp.ge.f32.partialorder %v3223, 0.0
      %vm3271 = vcmp.ge.f32.partialorder %v3263, 0.0
      %v3272 = vmul.f32 %v3217, 0.2
      %v3273 = vmul.f32 %v3219, 0.2
      %v3274 = vmul.f32 %v3260, 0.2
      %v3275 = vmul.f32 %v3221, 0.2
      %v3276 = vmul.f32 %v3223, 0.2
      %v3277 = vmul.f32 %v3263, 0.2
      %v3278 = vsel %vm3266, %v3217, %v3272
      %v3279 = vsel %vm3267, %v3219, %v3273
      %v3280 = vsel %vm3268, %v3260, %v3274
      %v3281 = vsel %vm3269, %v3221, %v3275
      %v3282 = vsel %vm3270, %v3223, %v3276
      %v3283 = vsel %vm3271, %v3263, %v3277
      %v3284 = vmul.f32 %v3278, 1.4142135
      %v3285 = vmul.f32 %v3279, 1.4142135
      %v3286 = vmul.f32 %v3280, 1.4142135
      %v3287 = vmul.f32 %v3281, 1.4142135
      %v3288 = vmul.f32 %v3282, 1.4142135
      %v3289 = vmul.f32 %v3283, 1.4142135
      %v3290 = vadd.f32 %v3284, %v2028
      %v3291 = vadd.f32 %v3285, %v2029
      %v3292 = vadd.f32 %v3286, %v2030
      %v3293 = vadd.f32 %v3287, %v2031
      %v3294 = vadd.f32 %v3288, %v2032
      %v3295 = vadd.f32 %v3289, %v2033
      %v3296 = vpack.c.bf16 %v3293, %v3290
      %v3297 = vpack.c.bf16 %v3294, %v3291
      %v3298 = vpack.c.bf16 %v3295, %v3292
      %v3302 = vunpack.c.l.b16 %v3296
      %v3303 = vunpack.c.l.b16 %v3297
      %v3304 = vunpack.c.l.b16 %v3298
      %v3305 = vunpack.c.h.b16 %v3296
      %v3306 = vunpack.c.h.b16 %v3297
      %v3307 = vunpack.c.h.b16 %v3298
      %v3308 = vpack.c.b16 %v3303, %v3302
      %v3309 = vpack.c.b16 %v3304, %v3304
      %v3310 = vpack.c.b16 %v3306, %v3305
      %v3311 = vpack.c.b16 %v3307, %v3307
      %3316 = vst [vmem:[#allocation5 + $0x30] sm:$0xff] %v3308
      %3317 = vst [vmem:[#allocation5 + $0x38] sm:$0xf] %v3309
      %3318 = vst [vmem:[#allocation5 + $0x3c] sm:$0xff] %v3310
      %3319 = vst [vmem:[#allocation5 + $0x44] sm:$0xf] %v3311
      %v3320 = vld [vmem:[%s7] sm:$0xf]
      %v3321 = vld [vmem:[%s7 + $0x4] sm:$0xf]
      %v3322 = vld [vmem:[%s7 + $0x8] sm:$0xf]
      %v3323 = vld [vmem:[%s7 + $0xc] sm:$0xf]
      %v3324 = vld [vmem:[#allocation5] sm:$0xff]
      %v3325 = vld [vmem:[#allocation5 + $0x8] sm:$0xf]
      %v3326 = vld [vmem:[#allocation5 + $0xc] sm:$0xff]
      %v3327 = vld [vmem:[#allocation5 + $0x14] sm:$0xf]
      %v3328 = vld [vmem:[#allocation5 + $0x18] sm:$0xff]
      %v3329 = vld [vmem:[#allocation5 + $0x20] sm:$0xf]
      %v3330 = vld [vmem:[#allocation5 + $0x24] sm:$0xff]
      %v3331 = vld [vmem:[#allocation5 + $0x2c] sm:$0xf]
      %v3332 = vld [vmem:[#allocation5 + $0x30] sm:$0xff]
      %v3333 = vld [vmem:[#allocation5 + $0x38] sm:$0xf]
      %v3334 = vld [vmem:[#allocation5 + $0x3c] sm:$0xff]
      %v3335 = vld [vmem:[#allocation5 + $0x44] sm:$0xf]
      %v3336 = vld [vmem:[%s8] sm:$0xff]
      %v3337 = vld [vmem:[%s8 + $0x8] sm:$0xff]
      %v3338 = vld [vmem:[%s8 + $0x10] sm:$0xff]
      %v3339 = vld [vmem:[%s8 + $0x18] sm:$0xff]
      %3341 = vset.pattern.permute.xlu0 0
      %3342 = vperm.xlu0 %3341, %v3336
      %v3343 = vpop.permute.xlu0 %3342
      %3346 = vset.pattern.permute.xlu0 0
      %3347 = vperm.xlu0 %3346, %v3337
      %v3348 = vpop.permute.xlu0 %3347
      %3351 = vset.pattern.permute.xlu0 0
      %3352 = vperm.xlu0 %3351, %v3338
      %v3353 = vpop.permute.xlu0 %3352
      %3356 = vset.pattern.permute.xlu0 0
      %3357 = vperm.xlu0 %3356, %v3339
      %v3358 = vpop.permute.xlu0 %3357
      %v3364 = vunpack.c.l.b16 %v3320
      %v3365 = vunpack.c.l.b16 %v3321
      %v3366 = vunpack.c.l.b16 %v3322
      %v3367 = vunpack.c.l.b16 %v3323
      %v3368 = vpack.c.b16 %v3365, %v3364
      %v3369 = vpack.c.b16 %v3367, %v3366
      %v3382 = vunpack.c.l.b16 %v3324
      %v3383 = vunpack.c.h.b16 %v3324
      %v3384 = vunpack.c.l.b16 %v3325
      %v3385 = vunpack.c.l.b16 %v3326
      %v3386 = vunpack.c.h.b16 %v3326
      %v3387 = vunpack.c.l.b16 %v3327
      %v3388 = vunpack.c.l.b16 %v3328
      %v3389 = vunpack.c.h.b16 %v3328
      %v3390 = vunpack.c.l.b16 %v3329
      %v3391 = vunpack.c.l.b16 %v3330
      %v3392 = vunpack.c.h.b16 %v3330
      %v3393 = vunpack.c.l.b16 %v3331
      %v3394 = vunpack.c.l.b16 %v3332
      %v3395 = vunpack.c.h.b16 %v3332
      %v3396 = vunpack.c.l.b16 %v3333
      %v3397 = vunpack.c.l.b16 %v3334
      %v3398 = vunpack.c.h.b16 %v3334
      %v3399 = vunpack.c.l.b16 %v3335
      %v3400 = vpack.c.b16 %v3385, %v3382
      %v3401 = vpack.c.b16 %v3386, %v3383
      %v3402 = vpack.c.b16 %v3387, %v3384
      %v3403 = vpack.c.b16 %v3391, %v3388
      %v3404 = vpack.c.b16 %v3392, %v3389
      %v3405 = vpack.c.b16 %v3393, %v3390
      %v3406 = vpack.c.b16 %v3397, %v3394
      %v3407 = vpack.c.b16 %v3398, %v3395
      %v3408 = vpack.c.b16 %v3399, %v3396
      %vm3418 = vcmask 392192
      %v3420 = vsel %vm3418, %v3368, 0
      %v3423 = vsel %vm3418, %v3369, 0
      %3425 = vmatprep.subr.bf16.mxu0 0
      %3426 = vmatpush1.bf16.msra.mxu0 0
      %3427 = vmatprep.subr.bf16.mxu0 0
      %3428 = vmatpush1.bf16.msra.mxu0 0
      %3429 = vmatprep.subr.bf16.mxu0 0
      %3430 = vmatpush1.bf16.msra.mxu0 0
      %3431 = vmatprep.subr.bf16.mxu0 0
      %3432 = vmatpush1.bf16.msra.mxu0 0
      %3433 = vmatprep.subr.bf16.mxu0 0
      %3434 = vmatpush1.bf16.msra.mxu0 0
      %3435 = vmatprep.subr.bf16.mxu0 %v3407
      %3436 = vmatpush1.bf16.msra.mxu0 %v3406
      %3437 = vmatprep.subr.bf16.mxu0 %v3404
      %3438 = vmatpush1.bf16.msra.mxu0 %v3403
      %3439 = vmatprep.subr.bf16.mxu0 %v3401
      %3440 = vmatpush1.bf16.msra.mxu0 %v3400
      %3441 = vmatprep.subr.bf16.mxu0 0
      %3442 = vmatpush2.bf16.msra.mxu0 0
      %3443 = vmatprep.subr.bf16.mxu0 0
      %3444 = vmatpush2.bf16.msra.mxu0 0
      %3445 = vmatprep.subr.bf16.mxu0 0
      %3446 = vmatpush2.bf16.msra.mxu0 0
      %3447 = vmatprep.subr.bf16.mxu0 0
      %3448 = vmatpush2.bf16.msra.mxu0 0
      %3449 = vmatprep.subr.bf16.mxu0 0
      %3450 = vmatpush2.bf16.msra.mxu0 0
      %3451 = vmatprep.subr.bf16.mxu0 0
      %3452 = vmatpush2.bf16.msra.mxu0 0
      %3453 = vmatprep.subr.bf16.mxu0 0
      %3454 = vmatpush2.bf16.msra.mxu0 0
      %3455 = vmatprep.subr.bf16.mxu0 0
      %3456 = vmatpush2.bf16.msra.mxu0 0
      %3457 = vmatprep.mubr.bf16.mxu0 0
      %3458 = vmatmul.mubr.bf16.gmra.mxu0 %v3420
      %v3459 = vpop.f32.mrf.mxu0
      %v3460 = vadd.f32 %v3343, %v3459
      %v3461 = vpop.f32.mrf.mxu0
      %v3462 = vadd.f32 %v3343, %v3461
      %v3463 = vpop.f32.mrf.mxu0
      %v3464 = vadd.f32 %v3348, %v3463
      %v3465 = vpop.f32.mrf.mxu0
      %v3466 = vadd.f32 %v3348, %v3465
      %3467 = vmatprep.mubr.bf16.mxu0 0
      %3468 = vmatmul.mubr.bf16.gmra.mxu0 %v3423
      %v3469 = vpop.f32.mrf.mxu0
      %v3470 = vadd.f32 %v3353, %v3469
      %v3471 = vpop.f32.mrf.mxu0
      %v3472 = vadd.f32 %v3353, %v3471
      %v3473 = vpop.f32.mrf.mxu0
      %v3474 = vadd.f32 %v3358, %v3473
      %v3475 = vpop.f32.mrf.mxu0
      %v3476 = vadd.f32 %v3358, %v3475
      %3477 = vdwg.mxu0
      %3478 = vmatprep.subr.bf16.mxu0 0
      %3479 = vmatpush1.bf16.msra.mxu0 0
      %3480 = vmatprep.subr.bf16.mxu0 0
      %3481 = vmatpush1.bf16.msra.mxu0 0
      %3482 = vmatprep.subr.bf16.mxu0 0
      %3483 = vmatpush1.bf16.msra.mxu0 0
      %3484 = vmatprep.subr.bf16.mxu0 0
      %3485 = vmatpush1.bf16.msra.mxu0 0
      %3486 = vmatprep.subr.bf16.mxu0 0
      %3487 = vmatpush1.bf16.msra.mxu0 0
      %3488 = vmatprep.subr.bf16.mxu0 0
      %3489 = vmatpush1.bf16.msra.mxu0 %v3408
      %3490 = vmatprep.subr.bf16.mxu0 0
      %3491 = vmatpush1.bf16.msra.mxu0 %v3405
      %3492 = vmatprep.subr.bf16.mxu0 0
      %3493 = vmatpush1.bf16.msra.mxu0 %v3402
      %3494 = vmatprep.subr.bf16.mxu0 0
      %3495 = vmatpush2.bf16.msra.mxu0 0
      %3496 = vmatprep.subr.bf16.mxu0 0
      %3497 = vmatpush2.bf16.msra.mxu0 0
      %3498 = vmatprep.subr.bf16.mxu0 0
      %3499 = vmatpush2.bf16.msra.mxu0 0
      %3500 = vmatprep.subr.bf16.mxu0 0
      %3501 = vmatpush2.bf16.msra.mxu0 0
      %3502 = vmatprep.subr.bf16.mxu0 0
      %3503 = vmatpush2.bf16.msra.mxu0 0
      %3504 = vmatprep.subr.bf16.mxu0 0
      %3505 = vmatpush2.bf16.msra.mxu0 0
      %3506 = vmatprep.subr.bf16.mxu0 0
      %3507 = vmatpush2.bf16.msra.mxu0 0
      %3508 = vmatprep.subr.bf16.mxu0 0
      %3509 = vmatpush2.bf16.msra.mxu0 0
      %3510 = vmatprep.mubr.bf16.mxu0 0
      %3511 = vmatmul.mubr.bf16.gmra.mxu0 %v3420
      %v3512 = vpop.f32.mrf.mxu0
      %v3513 = vadd.f32 %v3343, %v3512
      %v3514 = vpop.f32.mrf.mxu0
      %v3515 = vpop.f32.mrf.mxu0
      %v3516 = vadd.f32 %v3348, %v3515
      %v3517 = vpop.f32.mrf.mxu0
      %3518 = vmatprep.mubr.bf16.mxu0 0
      %3519 = vmatmul.mubr.bf16.gmra.mxu0 %v3423
      %v3520 = vpop.f32.mrf.mxu0
      %v3521 = vadd.f32 %v3353, %v3520
      %v3522 = vpop.f32.mrf.mxu0
      %v3523 = vpop.f32.mrf.mxu0
      %v3524 = vadd.f32 %v3358, %v3523
      %v3525 = vpop.f32.mrf.mxu0
      %3526 = vdwg.mxu0
      %v3527 = vmax.f32 %v3460, 0.0
      %v3528 = vmax.f32 %v3462, 0.0
      %v3529 = vmax.f32 %v3513, 0.0
      %v3530 = vmax.f32 %v3464, 0.0
      %v3531 = vmax.f32 %v3466, 0.0
      %v3532 = vmax.f32 %v3516, 0.0
      %v3533 = vmax.f32 %v3470, 0.0
      %v3534 = vmax.f32 %v3472, 0.0
      %v3535 = vmax.f32 %v3521, 0.0
      %v3536 = vmax.f32 %v3474, 0.0
      %v3537 = vmax.f32 %v3476, 0.0
      %v3538 = vmax.f32 %v3524, 0.0
      %v3539 = vld [vmem:[%s9] sm:$0x3]
      %v3540 = vpack.c.bf16 %v3530, %v3527
      %v3541 = vpack.c.bf16 %v3531, %v3528
      %v3542 = vpack.c.bf16 %v3532, %v3529
      %v3543 = vpack.c.bf16 %v3536, %v3533
      %v3544 = vpack.c.bf16 %v3537, %v3534
      %v3545 = vpack.c.bf16 %v3538, %v3535
      %v3546 = vld [vmem:[%s10] sm:$0x7]
      %3548 = vset.pattern.permute.xlu0 0
      %3549 = vperm.xlu0 %3548, %v3546
      %v3550 = vpop.permute.xlu0 %3549
      %vm3552 = vcmask 261120
      %v3554 = vsel %vm3552, %v3539, 0
      %3556 = vmatprep.subr.bf16.mxu0 0
      %3557 = vmatpush1.bf16.msra.mxu0 0
      %3558 = vmatprep.subr.bf16.mxu0 0
      %3559 = vmatpush1.bf16.msra.mxu0 0
      %3560 = vmatprep.subr.bf16.mxu0 0
      %3561 = vmatpush1.bf16.msra.mxu0 0
      %3562 = vmatprep.subr.bf16.mxu0 0
      %3563 = vmatpush1.bf16.msra.mxu0 0
      %3564 = vmatprep.subr.bf16.mxu0 0
      %3565 = vmatpush1.bf16.msra.mxu0 0
      %3566 = vmatprep.subr.bf16.mxu0 0
      %3567 = vmatpush1.bf16.msra.mxu0 0
      %3568 = vmatprep.subr.bf16.mxu0 %v3544
      %3569 = vmatpush1.bf16.msra.mxu0 %v3543
      %3570 = vmatprep.subr.bf16.mxu0 %v3541
      %3571 = vmatpush1.bf16.msra.mxu0 %v3540
      %3572 = vmatprep.subr.bf16.mxu0 0
      %3573 = vmatpush2.bf16.msra.mxu0 0
      %3574 = vmatprep.subr.bf16.mxu0 0
      %3575 = vmatpush2.bf16.msra.mxu0 0
      %3576 = vmatprep.subr.bf16.mxu0 0
      %3577 = vmatpush2.bf16.msra.mxu0 0
      %3578 = vmatprep.subr.bf16.mxu0 0
      %3579 = vmatpush2.bf16.msra.mxu0 0
      %3580 = vmatprep.subr.bf16.mxu0 0
      %3581 = vmatpush2.bf16.msra.mxu0 0
      %3582 = vmatprep.subr.bf16.mxu0 0
      %3583 = vmatpush2.bf16.msra.mxu0 0
      %3584 = vmatprep.subr.bf16.mxu0 0
      %3585 = vmatpush2.bf16.msra.mxu0 0
      %3586 = vmatprep.subr.bf16.mxu0 0
      %3587 = vmatpush2.bf16.msra.mxu0 0
      %3588 = vmatprep.mubr.bf16.mxu0 0
      %3589 = vmatmul.mubr.bf16.gmra.mxu0 %v3554
      %v3590 = vpop.f32.mrf.mxu0
      %v3591 = vadd.f32 %v3550, %v3590
      %v3592 = vpop.f32.mrf.mxu0
      %v3593 = vadd.f32 %v3550, %v3592
      %v3594 = vpop.f32.mrf.mxu0
      %v3595 = vpop.f32.mrf.mxu0
      %3596 = vdwg.mxu0
      %3597 = vmatprep.subr.bf16.mxu0 0
      %3598 = vmatpush1.bf16.msra.mxu0 0
      %3599 = vmatprep.subr.bf16.mxu0 0
      %3600 = vmatpush1.bf16.msra.mxu0 0
      %3601 = vmatprep.subr.bf16.mxu0 0
      %3602 = vmatpush1.bf16.msra.mxu0 0
      %3603 = vmatprep.subr.bf16.mxu0 0
      %3604 = vmatpush1.bf16.msra.mxu0 0
      %3605 = vmatprep.subr.bf16.mxu0 0
      %3606 = vmatpush1.bf16.msra.mxu0 0
      %3607 = vmatprep.subr.bf16.mxu0 0
      %3608 = vmatpush1.bf16.msra.mxu0 0
      %3609 = vmatprep.subr.bf16.mxu0 0
      %3610 = vmatpush1.bf16.msra.mxu0 %v3545
      %3611 = vmatprep.subr.bf16.mxu0 0
      %3612 = vmatpush1.bf16.msra.mxu0 %v3542
      %3613 = vmatprep.subr.bf16.mxu0 0
      %3614 = vmatpush2.bf16.msra.mxu0 0
      %3615 = vmatprep.subr.bf16.mxu0 0
      %3616 = vmatpush2.bf16.msra.mxu0 0
      %3617 = vmatprep.subr.bf16.mxu0 0
      %3618 = vmatpush2.bf16.msra.mxu0 0
      %3619 = vmatprep.subr.bf16.mxu0 0
      %3620 = vmatpush2.bf16.msra.mxu0 0
      %3621 = vmatprep.subr.bf16.mxu0 0
      %3622 = vmatpush2.bf16.msra.mxu0 0
      %3623 = vmatprep.subr.bf16.mxu0 0
      %3624 = vmatpush2.bf16.msra.mxu0 0
      %3625 = vmatprep.subr.bf16.mxu0 0
      %3626 = vmatpush2.bf16.msra.mxu0 0
      %3627 = vmatprep.subr.bf16.mxu0 0
      %3628 = vmatpush2.bf16.msra.mxu0 0
      %3629 = vmatprep.mubr.bf16.mxu0 0
      %3630 = vmatmul.mubr.bf16.gmra.mxu0 %v3554
      %v3631 = vpop.f32.mrf.mxu0
      %v3632 = vadd.f32 %v3550, %v3631
      %v3633 = vpop.f32.mrf.mxu0
      %v3634 = vpop.f32.mrf.mxu0
      %v3635 = vpop.f32.mrf.mxu0
      %3636 = vdwg.mxu0
      %v3640 = vrot.slane %v3591, 1
      %v3641 = vrot.slane %v3593, 1
      %v3642 = vrot.slane %v3632, 1
      %v3646 = vmax.f32 %v3591, %v3640
      %v3647 = vmax.f32 %v3593, %v3641
      %v3648 = vmax.f32 %v3632, %v3642
      %v3649 = vrot.slane %v3591, 2
      %v3650 = vrot.slane %v3593, 2
      %v3651 = vrot.slane %v3632, 2
      %v3655 = vmax.f32 %v3646, %v3649
      %v3656 = vmax.f32 %v3647, %v3650
      %v3657 = vmax.f32 %v3648, %v3651
      %v3658 = vsub.f32 %v3591, %v3655
      %v3659 = vsub.f32 %v3593, %v3656
      %v3660 = vsub.f32 %v3632, %v3657
      %v3661 = vmul.f32 %v3658, 1.442695
      %v3662 = vpow.pop %v3661
      %v3663 = vmul.f32 %v3659, 1.442695
      %v3664 = vpow.pop %v3663
      %v3665 = vmul.f32 %v3660, 1.442695
      %v3666 = vpow.pop %v3665
      %v3670 = vrot.slane %v3655, 7
      %v3671 = vrot.slane %v3656, 7
      %v3672 = vrot.slane %v3657, 7
      %v3676 = vsub.f32 %v3591, %v3670
      %v3677 = vsub.f32 %v3593, %v3671
      %v3678 = vsub.f32 %v3632, %v3672
      %v3679 = vmul.f32 %v3676, 1.442695
      %v3680 = vpow.pop %v3679
      %v3681 = vmul.f32 %v3677, 1.442695
      %v3682 = vpow.pop %v3681
      %v3683 = vmul.f32 %v3678, 1.442695
      %v3684 = vpow.pop %v3683
      %v3685 = vrot.slane %v3655, 6
      %v3686 = vrot.slane %v3656, 6
      %v3687 = vrot.slane %v3657, 6
      %v3691 = vsub.f32 %v3591, %v3685
      %v3692 = vsub.f32 %v3593, %v3686
      %v3693 = vsub.f32 %v3632, %v3687
      %v3694 = vmul.f32 %v3691, 1.442695
      %v3695 = vpow.pop %v3694
      %v3696 = vmul.f32 %v3692, 1.442695
      %v3697 = vpow.pop %v3696
      %v3698 = vmul.f32 %v3693, 1.442695
      %v3699 = vpow.pop %v3698
      %v3703 = vrot.slane %v3680, 1
      %v3704 = vrot.slane %v3682, 1
      %v3705 = vrot.slane %v3684, 1
      %v3709 = vadd.f32 %v3662, %v3703
      %v3710 = vadd.f32 %v3664, %v3704
      %v3711 = vadd.f32 %v3666, %v3705
      %v3715 = vrot.slane %v3695, 2
      %v3716 = vrot.slane %v3697, 2
      %v3717 = vrot.slane %v3699, 2
      %v3721 = vadd.f32 %v3709, %v3715
      %v3722 = vadd.f32 %v3710, %v3716
      %v3723 = vadd.f32 %v3711, %v3717
      %v3724 = vrcp.pop %v3721
      %v3725 = vrcp.pop %v3722
      %v3726 = vrcp.pop %v3723
      %v3727 = vmul.f32 %v3662, %v3724
      %v3728 = vmul.f32 %v3664, %v3725
      %v3729 = vmul.f32 %v3666, %v3726
      %v3730 = vlaneseq
      %v3731 = vshrl.u32 %v3730, 7
      %v3732 = vsub.s32 0, %v3731
      %v3733 = vrot.slane %v3727, %v3732
      %v3734 = vlaneseq
      %v3735 = vshrl.u32 %v3734, 7
      %v3736 = vsub.s32 0, %v3735
      %v3737 = vrot.slane %v3728, %v3736
      %v3738 = vlaneseq
      %v3739 = vshrl.u32 %v3738, 7
      %v3740 = vsub.s32 0, %v3739
      %v3741 = vrot.slane %v3729, %v3740
      %v3742 = vmul.f32 %v3733, %v2040
      %v3743 = vmul.f32 %v3737, %v2041
      %v3744 = vmul.f32 %v3741, %v2042
      %v3745 = vmul.f32 %v3733, %v2043
      %v3746 = vmul.f32 %v3737, %v2044
      %v3747 = vmul.f32 %v3741, %v2045
      %v3751 = vrot.slane %v3724, 7
      %v3752 = vrot.slane %v3725, 7
      %v3753 = vrot.slane %v3726, 7
      %v3757 = vmul.f32 %v3680, %v3751
      %v3758 = vmul.f32 %v3682, %v3752
      %v3759 = vmul.f32 %v3684, %v3753
      %v3760 = vlaneseq
      %v3761 = vshrl.u32 %v3760, 7
      %v3762 = vsub.s32 1, %v3761
      %v3763 = vrot.slane %v3757, %v3762
      %v3764 = vlaneseq
      %v3765 = vshrl.u32 %v3764, 7
      %v3766 = vsub.s32 1, %v3765
      %v3767 = vrot.slane %v3758, %v3766
      %v3768 = vlaneseq
      %v3769 = vshrl.u32 %v3768, 7
      %v3770 = vsub.s32 1, %v3769
      %v3771 = vrot.slane %v3759, %v3770
      %v3772 = vmul.f32 %v3763, %v2665
      %v3773 = vmul.f32 %v3767, %v2666
      %v3774 = vmul.f32 %v3771, %v2667
      %v3775 = vmul.f32 %v3763, %v2668
      %v3776 = vmul.f32 %v3767, %v2669
      %v3777 = vmul.f32 %v3771, %v2670
      %v3778 = vadd.f32 %v3742, %v3772
      %v3779 = vadd.f32 %v3743, %v3773
      %v3780 = vadd.f32 %v3744, %v3774
      %v3781 = vadd.f32 %v3745, %v3775
      %v3782 = vadd.f32 %v3746, %v3776
      %v3783 = vadd.f32 %v3747, %v3777
      %v3784 = vrot.slane %v3724, 6
      %v3785 = vrot.slane %v3725, 6
      %v3786 = vrot.slane %v3726, 6
      %v3790 = vmul.f32 %v3695, %v3784
      %v3791 = vmul.f32 %v3697, %v3785
      %v3792 = vmul.f32 %v3699, %v3786
      %v3793 = vlaneseq
      %v3794 = vshrl.u32 %v3793, 7
      %v3795 = vsub.s32 2, %v3794
      %v3796 = vrot.slane %v3790, %v3795
      %v3797 = vlaneseq
      %v3798 = vshrl.u32 %v3797, 7
      %v3799 = vsub.s32 2, %v3798
      %v3800 = vrot.slane %v3791, %v3799
      %v3801 = vlaneseq
      %v3802 = vshrl.u32 %v3801, 7
      %v3803 = vsub.s32 2, %v3802
      %v3804 = vrot.slane %v3792, %v3803
      %v3805 = vmul.f32 %v3796, %v3290
      %v3806 = vmul.f32 %v3800, %v3291
      %v3807 = vmul.f32 %v3804, %v3292
      %v3808 = vmul.f32 %v3796, %v3293
      %v3809 = vmul.f32 %v3800, %v3294
      %v3810 = vmul.f32 %v3804, %v3295
      %v3811 = vadd.f32 %v3778, %v3805
      %v3812 = vadd.f32 %v3779, %v3806
      %v3813 = vadd.f32 %v3780, %v3807
      %v3814 = vadd.f32 %v3781, %v3808
      %v3815 = vadd.f32 %v3782, %v3809
      %v3816 = vadd.f32 %v3783, %v3810
      %v3817 = vld [vmem:[%s428] sm:$0x7]
      %v3818 = vsub.f32 1.0, %v3817
      %v3820 = vlaneseq
      %v3821 = vshrl.u32 %v3820, 7
      %v3822 = vsub.s32 0, %v3821
      %v3823 = vrot.slane %v3818, %v3822
      %v3824 = vlaneseq
      %v3825 = vshrl.u32 %v3824, 7
      %v3826 = vsub.s32 1, %v3825
      %v3827 = vrot.slane %v3818, %v3826
      %v3828 = vlaneseq
      %v3829 = vshrl.u32 %v3828, 7
      %v3830 = vsub.s32 2, %v3829
      %v3831 = vrot.slane %v3818, %v3830
      %3832 = vrot.lane.b32.xlu0 %v3823, 19
      %v3833 = vpop.permute.xlu0 %3832
      %3834 = vrot.lane.b32.xlu0 %v3827, 19
      %v3835 = vpop.permute.xlu0 %3834
      %3836 = vrot.lane.b32.xlu0 %v3831, 19
      %v3837 = vpop.permute.xlu0 %3836
      %vm3838 = vcmask 154624
      %v3839 = vsel %vm3838, %v3833, %v3835
      %v3840 = vsel %vm3838, %v3835, %v3837
      %v3845 = vmul.f32 %v1401, %v3833
      %v3846 = vmul.f32 %v1402, %v3839
      %v3847 = vmul.f32 %v1403, %v3840
      %v3848 = vmul.f32 %v1404, %v3837
      %v3849 = vmul.f32 %v1405, %v3833
      %v3850 = vmul.f32 %v1406, %v3839
      %v3851 = vmul.f32 %v1407, %v3840
      %v3852 = vmul.f32 %v1408, %v3837
      %v3854 = vlaneseq
      %v3855 = vshrl.u32 %v3854, 7
      %v3856 = vsub.s32 0, %v3855
      %v3857 = vrot.slane %v3817, %v3856
      %v3858 = vlaneseq
      %v3859 = vshrl.u32 %v3858, 7
      %v3860 = vsub.s32 1, %v3859
      %v3861 = vrot.slane %v3817, %v3860
      %v3862 = vlaneseq
      %v3863 = vshrl.u32 %v3862, 7
      %v3864 = vsub.s32 2, %v3863
      %v3865 = vrot.slane %v3817, %v3864
      %v3869 = vmul.f32 %v3857, %v3811
      %v3870 = vmul.f32 %v3861, %v3812
      %v3871 = vmul.f32 %v3865, %v3813
      %v3872 = vmul.f32 %v3857, %v3814
      %v3873 = vmul.f32 %v3861, %v3815
      %v3874 = vmul.f32 %v3865, %v3816
      %3881 = vrot.lane.b32.xlu0 %v3869, 19
      %v3882 = vpop.permute.xlu0 %3881
      %3883 = vrot.lane.b32.xlu0 %v3870, 19
      %v3884 = vpop.permute.xlu0 %3883
      %3885 = vrot.lane.b32.xlu0 %v3871, 19
      %v3886 = vpop.permute.xlu0 %3885
      %3887 = vrot.lane.b32.xlu0 %v3872, 19
      %v3888 = vpop.permute.xlu0 %3887
      %3889 = vrot.lane.b32.xlu0 %v3873, 19
      %v3890 = vpop.permute.xlu0 %3889
      %3891 = vrot.lane.b32.xlu0 %v3874, 19
      %v3892 = vpop.permute.xlu0 %3891
      %v3893 = vsel %vm3838, %v3882, %v3884
      %v3894 = vsel %vm3838, %v3884, %v3886
      %v3895 = vsel %vm3838, %v3888, %v3890
      %v3896 = vsel %vm3838, %v3890, %v3892
      %v3905 = vadd.f32 %v3845, %v3882
      %v3906 = vadd.f32 %v3846, %v3893
      %v3907 = vadd.f32 %v3847, %v3894
      %v3908 = vadd.f32 %v3848, %v3886
      %v3909 = vadd.f32 %v3849, %v3888
      %v3910 = vadd.f32 %v3850, %v3895
      %v3911 = vadd.f32 %v3851, %v3896
      %v3912 = vadd.f32 %v3852, %v3892
      %3921 = vrot.lane.b32.xlu0 %v3905, 109
      %v3922 = vpop.permute.xlu0 %3921
      %3923 = vrot.lane.b32.xlu0 %v3906, 109
      %v3924 = vpop.permute.xlu0 %3923
      %3925 = vrot.lane.b32.xlu0 %v3907, 109
      %v3926 = vpop.permute.xlu0 %3925
      %3927 = vrot.lane.b32.xlu0 %v3908, 109
      %v3928 = vpop.permute.xlu0 %3927
      %3929 = vrot.lane.b32.xlu0 %v3909, 109
      %v3930 = vpop.permute.xlu0 %3929
      %3931 = vrot.lane.b32.xlu0 %v3910, 109
      %v3932 = vpop.permute.xlu0 %3931
      %3933 = vrot.lane.b32.xlu0 %v3911, 109
      %v3934 = vpop.permute.xlu0 %3933
      %3935 = vrot.lane.b32.xlu0 %v3912, 109
      %v3936 = vpop.permute.xlu0 %3935
      %v3937 = vsel %vm2027, %v3922, %v3924
      %v3938 = vsel %vm2027, %v3924, %v3926
      %v3939 = vsel %vm2027, %v3926, %v3928
      %v3940 = vsel %vm2027, %v3930, %v3932
      %v3941 = vsel %vm2027, %v3932, %v3934
      %v3942 = vsel %vm2027, %v3934, %v3936
      %3949 = vst [vmem:[%s443] sm:$0xff] %v3937
      %3950 = vst [vmem:[%s443 + $0x8] sm:$0xff] %v3938
      %3951 = vst [vmem:[%s443 + $0x10] sm:$0xff] %v3939
      %3952 = vst [vmem:[%s443 + $0x18] sm:$0xff] %v3940
      %3953 = vst [vmem:[%s443 + $0x20] sm:$0xff] %v3941
      %3954 = vst [vmem:[%s443 + $0x28] sm:$0xff] %v3942
      %p3955 = scmp.lt.s32.totalorder %s22, 1
      %s3956 = scalar_select %p3955, %s22, 1
      %s3957 = smul.addr %s3956, 6
      %s3958 = smul.addr %s3957, 8
      %s3959 = scalar_lea.vmem %s11, %s3958
      // Predicated region
      $region65: #{control_module_forward.1} parent=63 // pred_check
        %p3960 = pneg %p291
      $region66: #{control_module_forward.1} parent=63 // pred_check_branch
        %3962 = sbr.rel (%p3960) target = $region68
      $region67: #{control_module_forward.1} parent=63 // pred_region
        _
      $region68: #{control_module_forward.1} parent=63 // pred_fallthru
        _
    $region64: #{control_module_forward.1} parent=5 // pred_fallthru
      _
    %p3963 = scmp.le.s32.totalorder 2, %s17
    // Predicated region
    $region69: #{control_module_forward.1} parent=5 // pred_check
      %p3964 = pneg %p3963
    $region70: #{control_module_forward.1} parent=5 // pred_check_branch
      %3966 = sbr.rel (%p3964) target = $region72
    $region71: #{control_module_forward.1} parent=5 // pred_region
      %s3967 = ssub.s32 %s17, 2
      // Predicated region
      $region73: #{control_module_forward.1} parent=71 // pred_check
        %p3968 = pneg %p297
      $region74: #{control_module_forward.1} parent=71 // pred_check_branch
        %3970 = sbr.rel (%p3968) target = $region76
      $region75: #{control_module_forward.1} parent=71 // pred_region
        %p3971 = scmp.lt.s32.totalorder %s23, 1
        %s3972 = scalar_select %p3971, %s23, 1
        %s3973 = smul.addr %s3972, 6
        %s3974 = smul.addr %s3973, 8
        %s3975 = scalar_lea.vmem %s11, %s3974
      $region76: #{control_module_forward.1} parent=71 // pred_fallthru
        _
    $region72: #{control_module_forward.1} parent=5 // pred_fallthru
      _
  $region6: #{control_module_forward.1} parent=0 // loop_footer
    %s21 = sadd.s32 1, %s17
  $region7: #{control_module_forward.1} parent=0 // loop_footer_branch
    %16 = sbr.rel target = $region3
  $region8: #{control_module_forward.1} parent=0 // loop_exit
    _

</llo_original>
